<compile_context>
chip_gen: v6e
topology: v6e:2x2x1
jax: 0.10.0
libtpu: 0.0.40
codegen_flags: <defaults>
</compile_context>

<pallas_src>
import functools

import jax
import jax.numpy as jnp
from jax import lax
from jax.experimental import pallas as pl
from jax.experimental.pallas import tpu as pltpu

EPS = 1e-5
LANE = 128                      # TPU lane width: channel dims are padded to this
MATMUL_DTYPE = jnp.bfloat16     # MXU operand / activation HBM dtype (acc f32)
VMEM_LIMIT = 48 * 1024 * 1024   # explicit scoped-VMEM limit (safe on v5e/v6e/v7x)


# ------------------------------ small helpers ------------------------------ #

def _round_up(v, m):
    return (v + m - 1) // m * m


def _row_tile(ho, wo, target_rows=512):
    """Largest divisor of Ho so that one M-tile is ~target_rows output pixels."""
    target = max(1, min(ho, max(8, target_rows // max(wo, 1))))
    th = 1
    for t in range(1, target + 1):
        if ho % t == 0:
            th = t
    return th


def _halo_group(xp, th, rows_in, ht):
    """(N, R, C, Cb) -> (N, ht, rows_in, C, Cb); group hi = rows [hi*th, hi*th+rows_in).

    Overlap (the halo) is only rows_in - th rows per group (~1.05-1.25x bytes),
    and the result feeds plain Blocked BlockSpecs (auto double-buffered DMA)."""
    if ht == 1:
        return xp[:, None, :rows_in]
    groups = [xp[:, hi * th: hi * th + rows_in] for hi in range(ht)]
    return jnp.stack(groups, axis=1)


# ------------------------------- conv kernel -------------------------------- #

def _make_conv_kernel(taps_list, th, wo, cin_p, fuse_affine, h_valid, w_valid):
    """Conv tile as a sum of per-tap MXU matmuls (bf16 operands, f32 acc).

    taps_list: per fused conv, a list of (row_off, col_off, chan_off) tap
    positions into the halo block; matching weight stacks are (n_taps, Cin_p,
    Cout_p).  Optionally applies a per-channel affine + ReLU (fused BN of the
    previous layer) to the loaded block, re-zeroing the spatial-pad border."""
    n_convs = len(taps_list)

    def kernel(*refs):
        i = 1
        x_ref = refs[0]
        if fuse_affine:
            sc_ref, sh_ref = refs[1], refs[2]
            i = 3
        w_refs = refs[i:i + n_convs]
        out_refs = refs[i + n_convs:]

        xb = x_ref[...]                                # (rows_in, cols_in, cblk)

        if fuse_affine:
            rows_in, cols_in = xb.shape[0], xb.shape[1]
            xf = xb.astype(jnp.float32) * sc_ref[...] + sh_ref[...]
            xf = jnp.maximum(xf, 0.0)
            # conv pads the *post*-ReLU activation with zeros: re-zero the
            # global spatial-pad border (affine would map it to relu(shift)).
            ri = lax.broadcasted_iota(jnp.int32, (rows_in, cols_in, 1), 0) \
                + pl.program_id(1) * th
            ci = lax.broadcasted_iota(jnp.int32, (rows_in, cols_in, 1), 1)
            valid = (ri >= 1) & (ri <= h_valid) & (ci >= 1) & (ci <= w_valid)
            xb = jnp.where(valid, xf, 0.0).astype(MATMUL_DTYPE)

        for c in range(n_convs):
            taps = taps_list[c]
            w_ref = w_refs[c]
            y_ref, st_ref = out_refs[2 * c], out_refs[2 * c + 1]
            cout = w_ref.shape[-1]

            # Group taps by column offset: one sublane slice per distinct dj,
            # row offsets are leading-dim views (cheap).
            by_dj = {}
            for t_idx, (di, dj, co) in enumerate(taps):
                by_dj.setdefault(dj, []).append((t_idx, di, co))

            acc = None
            for dj in sorted(by_dj):
                xw = xb[:, dj:dj + wo, :]
                for t_idx, di, co in by_dj[dj]:
                    xs = xw[di:di + th, :, co:co + cin_p]
                    part = jnp.dot(xs.reshape(th * wo, cin_p), w_ref[t_idx],
                                   preferred_element_type=jnp.float32)
                    acc = part if acc is None else acc + part

            # bf16 conv output (halves HBM write + downstream re-reads);
            # stats are taken from the f32 accumulator before the cast.
            y_ref[...] = acc.reshape(th, wo, cout).astype(y_ref.dtype)
            s1 = jnp.sum(acc, axis=0, keepdims=True)
            s2 = jnp.sum(acc * acc, axis=0, keepdims=True)
            st_ref[...] = jnp.concatenate(
                [s1, s2, jnp.zeros((6, cout), jnp.float32)], axis=0)

    return kernel


def _conv_pass(g, weights, taps_list, *, th, wo, cin_p, cout_p, n, ho,
               affine=None):
    """One fused conv pass over the halo-grouped input `g`.

    g: (N, ht, rows_in, cols_in, cblk) bf16.  Returns a list of
    (y (N,ho,wo,Cout_p) bf16, stats (N,ht,8,Cout_p) f32) per fused conv."""
    ht = ho // th
    rows_in, cols_in, cblk = g.shape[2], g.shape[3], g.shape[4]
    fuse_affine = affine is not None
    kernel = _make_conv_kernel(taps_list, th, wo, cin_p, fuse_affine,
                               affine[2] if fuse_affine else 0,
                               affine[3] if fuse_affine else 0)

    args = [g]
    in_specs = [pl.BlockSpec((None, None, rows_in, cols_in, cblk),
                             lambda ni, hi: (ni, hi, 0, 0, 0))]
    if fuse_affine:
        args += [affine[0], affine[1]]
        in_specs += [pl.BlockSpec((1, cblk), lambda ni, hi: (0, 0)),
                     pl.BlockSpec((1, cblk), lambda ni, hi: (0, 0))]
    for wgt in weights:
        args.append(wgt)
        # constant block index -> weight stack DMA'd once, resident in VMEM
        in_specs.append(pl.BlockSpec(wgt.shape, lambda ni, hi: (0, 0, 0)))

    out_specs, out_shapes = [], []
    for _ in weights:
        out_specs.append(pl.BlockSpec((None, th, wo, cout_p),
                                      lambda ni, hi: (ni, hi, 0, 0)))
        out_shapes.append(jax.ShapeDtypeStruct((n, ho, wo, cout_p),
                                               MATMUL_DTYPE))
        out_specs.append(pl.BlockSpec((None, None, 8, cout_p),
                                      lambda ni, hi: (ni, hi, 0, 0)))
        out_shapes.append(jax.ShapeDtypeStruct((n, ht, 8, cout_p),
                                               jnp.float32))

    outs = pl.pallas_call(
        kernel,
        grid_spec=pltpu.PrefetchScalarGridSpec(
            num_scalar_prefetch=0,
            grid=(n, ht),
            in_specs=in_specs,
            out_specs=out_specs),
        out_shape=tuple(out_shapes),
        compiler_params=pltpu.CompilerParams(
            dimension_semantics=("parallel", "parallel"),
            vmem_limit_bytes=VMEM_LIMIT),
    )(*args)
    return [(outs[2 * i], outs[2 * i + 1]) for i in range(len(weights))]


# ---------------------- BN-apply / residual / ReLU pass --------------------- #

def _bn_relu_add_proj_kernel(y_ref, sc_ref, sh_ref, ys_ref, scs_ref, shs_ref,
                             o_ref):
    main = y_ref[...].astype(jnp.float32) * sc_ref[...] + sh_ref[...]
    short = ys_ref[...].astype(jnp.float32) * scs_ref[...] + shs_ref[...]
    o_ref[...] = jnp.maximum(main + short, 0.0).astype(o_ref.dtype)


def _bn_relu_add_identity_kernel(y_ref, sc_ref, sh_ref, r_ref, o_ref):
    main = y_ref[...].astype(jnp.float32) * sc_ref[...] + sh_ref[...]
    o_ref[...] = jnp.maximum(main + r_ref[...].astype(jnp.float32),
                             0.0).astype(o_ref.dtype)


def _pointwise(kernel, arrays, kinds, th):
    """Lane-dense elementwise pass tiled like the conv outputs.
    kinds[i]: 's' = (N,Ho,Wo,Cp) spatially tiled, 'c' = (1,Cp) broadcast."""
    n, ho, wo, cp = arrays[0].shape
    ht = ho // th
    spatial = pl.BlockSpec((None, th, wo, cp), lambda ni, hi: (ni, hi, 0, 0))
    chan = pl.BlockSpec((1, cp), lambda ni, hi: (0, 0))
    in_specs = [spatial if k == "s" else chan for k in kinds]
    return pl.pallas_call(
        kernel,
        grid_spec=pltpu.PrefetchScalarGridSpec(
            num_scalar_prefetch=0,
            grid=(n, ht),
            in_specs=in_specs,
            out_specs=pl.BlockSpec((None, th, wo, cp),
                                   lambda ni, hi: (ni, hi, 0, 0))),
        out_shape=jax.ShapeDtypeStruct((n, ho, wo, cp), jnp.float32),
        compiler_params=pltpu.CompilerParams(
            dimension_semantics=("parallel", "parallel"),
            vmem_limit_bytes=VMEM_LIMIT),
    )(*arrays)


# -------------------------- wrapper-side plumbing --------------------------- #

def _bn_affine(stats, gamma, beta, m, cp):
    """Accumulated [sum; sum_sq] -> per-channel scale/shift (f32, training-mode
    BN with biased variance).  Padded channels get scale=shift=0."""
    tot = jnp.sum(stats, axis=(0, 1))              # (8, Cp); rows 0/1 used
    mean = tot[0] / m
    var = jnp.maximum(tot[1] / m - mean * mean, 0.0)
    g = jnp.pad(gamma.astype(jnp.float32), (0, cp - gamma.shape[0]))
    b = jnp.pad(beta.astype(jnp.float32), (0, cp - beta.shape[0]))
    scale = g * lax.rsqrt(var + EPS)
    shift = b - mean * scale
    return scale.reshape(1, cp), shift.reshape(1, cp)


def _w_taps_3x3(w_oihw, cpi, cpo):
    """PyTorch OIHW 3x3 weight -> (9, Cin_p, Cout_p) bf16, tap-major (di*3+dj)."""
    cout, cin, kh, kw = w_oihw.shape
    wt = jnp.transpose(w_oihw, (2, 3, 1, 0)).reshape(kh * kw, cin, cout)
    wt = jnp.pad(wt, ((0, 0), (0, cpi - cin), (0, cpo - cout)))
    return wt.astype(MATMUL_DTYPE)


def _w_taps_1x1(w_oihw, cpi, cpo):
    cout, cin = w_oihw.shape[:2]
    wt = jnp.transpose(w_oihw[:, :, 0, 0], (1, 0))[None]
    wt = jnp.pad(wt, ((0, 0), (0, cpi - cin), (0, cpo - cout)))
    return wt.astype(MATMUL_DTYPE)


def init_basic_block_params(key, in_planes, planes, stride):
    keys = jax.random.split(key, 3)

    def conv_w(k, cout, cin, kh, kw):
        fan_in = cin * kh * kw
        return jax.random.normal(k, (cout, cin, kh, kw), jnp.float32) / jnp.sqrt(fan_in)

    params = {
        "conv1_w": conv_w(keys[0], planes, in_planes, 3, 3),
        "bn1_gamma": jnp.ones((planes,), jnp.float32),
        "bn1_beta": jnp.zeros((planes,), jnp.float32),
        "conv2_w": conv_w(keys[1], planes, planes, 3, 3),
        "bn2_gamma": jnp.ones((planes,), jnp.float32),
        "bn2_beta": jnp.zeros((planes,), jnp.float32),
    }
    if stride != 1 or in_planes != planes:
        params["sc_w"] = conv_w(keys[2], planes, in_planes, 1, 1)
        params["sc_gamma"] = jnp.ones((planes,), jnp.float32)
        params["sc_beta"] = jnp.zeros((planes,), jnp.float32)
    return params


@functools.partial(jax.jit, static_argnames=("stride",))
def basic_block_forward(x_nchw, params, stride):
    n, in_planes, h, w = x_nchw.shape
    planes = params["conv1_w"].shape[0]
    cpi = _round_up(in_planes, LANE)
    cpo = _round_up(planes, LANE)
    has_proj = (stride != 1) or (in_planes != planes)

    ho = (h + 2 - 3) // stride + 1
    wo = (w + 2 - 3) // stride + 1
    th = _row_tile(ho, wo)
    ht = ho // th

    # NCHW -> NHWC; pad channels to the 128-lane width and cast to bf16 BEFORE
    # any further layout work so duplicated/halo bytes are half-width.
    x = jnp.transpose(x_nchw, (0, 2, 3, 1))
    x_cp = jnp.pad(x, ((0, 0), (0, 0), (0, 0),
                       (0, cpi - in_planes))).astype(MATMUL_DTYPE)

    # ---- conv1 (+ projection shortcut fused into the same pass) ------------
    if stride == 1:
        xp = jnp.pad(x_cp, ((0, 0), (1, 1), (1, 1), (0, 0)))
        g1 = _halo_group(xp, th, th + 2, ht)            # (N, ht, th+2, W+2, Cpi)
        taps1 = [(di, dj, 0) for di in range(3) for dj in range(3)]
        taps_sc = [(1, 1, 0)]
    else:
        # space-to-depth phase split: a stride-2 conv becomes a stride-1 conv
        # over 4x channels; all in-kernel tap slices are unit-stride and the
        # shortcut subsample is just the (odd,odd) phase (no extra gather).
        hp, wp = 2 * ho + 2, 2 * wo + 2
        xp = jnp.pad(x_cp, ((0, 0), (1, hp - h - 1), (1, wp - w - 1), (0, 0)))
        xp = xp.reshape(n, hp // 2, 2, wp // 2, 2, cpi)
        xp = jnp.transpose(xp, (0, 1, 3, 2, 4, 5)).reshape(
            n, hp // 2, wp // 2, 4 * cpi)
        g1 = _halo_group(xp, th, th + 1, ht)            # (N, ht, th+1, wo+1, 4Cpi)
        taps1 = [(di // 2, dj // 2, ((di % 2) * 2 + (dj % 2)) * cpi)
                 for di in range(3) for dj in range(3)]
        taps_sc = [(0, 0, 3 * cpi)]

    w1 = _w_taps_3x3(params["conv1_w"], cpi, cpo)
    if has_proj:
        wsc = _w_taps_1x1(params["sc_w"], cpi, cpo)
        (y1, st1), (ysc, stsc) = _conv_pass(
            g1, [w1, wsc], [taps1, taps_sc],
            th=th, wo=wo, cin_p=cpi, cout_p=cpo, n=n, ho=ho)
        scs, shs = _bn_affine(stsc, params["sc_gamma"], params["sc_beta"],
                              n * ho * wo, cpo)
    else:
        ((y1, st1),) = _conv_pass(
            g1, [w1], [taps1],
            th=th, wo=wo, cin_p=cpi, cout_p=cpo, n=n, ho=ho)
    sc1, sh1 = _bn_affine(st1, params["bn1_gamma"], params["bn1_beta"],
                          n * ho * wo, cpo)

    # ---- conv2 (stride 1), bn1-apply + ReLU fused into its input path ------
    y1p = jnp.pad(y1, ((0, 0), (1, 1), (1, 1), (0, 0)))
    g2 = _halo_group(y1p, th, th + 2, ht)
    taps2 = [(di, dj, 0) for di in range(3) for dj in range(3)]
    w2 = _w_taps_3x3(params["conv2_w"], cpo, cpo)
    ((y2, st2),) = _conv_pass(
        g2, [w2], [taps2],
        th=th, wo=wo, cin_p=cpo, cout_p=cpo, n=n, ho=ho,
        affine=(sc1, sh1, ho, wo))
    sc2, sh2 = _bn_affine(st2, params["bn2_gamma"], params["bn2_beta"],
                          n * ho * wo, cpo)

    # ---- bn2-apply + shortcut add + ReLU (single pointwise pass) -----------
    if has_proj:
        out = _pointwise(_bn_relu_add_proj_kernel,
                         [y2, sc2, sh2, ysc, scs, shs], "sccscc", th)
    else:
        out = _pointwise(_bn_relu_add_identity_kernel,
                         [y2, sc2, sh2, x_cp], "sccs", th)

    return jnp.transpose(out[..., :planes], (0, 3, 1, 2))      # back to NCHW


# ---------------------- pure-JAX reference (for checking) ------------------ #

def basic_block_reference(x_nchw, params, stride, conv_dtype=jnp.float32):
    """Reference forward.  conv_dtype=bfloat16 matches the kernels' MXU
    operand precision (accumulation in f32 either way)."""
    x = jnp.transpose(x_nchw, (0, 2, 3, 1)).astype(jnp.float32)

    def conv(a, w_oihw, s, p):
        return lax.conv_general_dilated(
            a.astype(conv_dtype),
            jnp.transpose(w_oihw, (2, 3, 1, 0)).astype(conv_dtype),
            (s, s), ((p, p), (p, p)),
            dimension_numbers=("NHWC", "HWIO", "NHWC"),
            preferred_element_type=jnp.float32)

    def bn(y, gamma, beta):
        mean = jnp.mean(y, axis=(0, 1, 2))
        var = jnp.var(y, axis=(0, 1, 2))
        return (y - mean) * lax.rsqrt(var + EPS) * gamma + beta

    in_planes = x.shape[-1]
    planes = params["conv1_w"].shape[0]
    out = jax.nn.relu(bn(conv(x, params["conv1_w"], stride, 1),
                         params["bn1_gamma"], params["bn1_beta"]))
    out = bn(conv(out, params["conv2_w"], 1, 1),
             params["bn2_gamma"], params["bn2_beta"])
    if stride != 1 or in_planes != planes:
        sc = bn(conv(x, params["sc_w"], stride, 0),
                params["sc_gamma"], params["sc_beta"])
    else:
        sc = x
    out = jax.nn.relu(out + sc)
    return jnp.transpose(out, (0, 3, 1, 2))


if __name__ == "__main__":
    key = jax.random.PRNGKey(0)
    kx1, kx2, kp1, kp2 = jax.random.split(key, 4)

    # Case 1: projection shortcut (stride=2, channels 4 -> 8).
    x1 = jax.random.normal(kx1, (2, 4, 16, 16), jnp.float32)   # NCHW like PyTorch
    params1 = init_basic_block_params(kp1, 4, 8, stride=2)
    y1 = basic_block_forward(x1, params1, stride=2)
    jax.block_until_ready(y1)
    r1 = basic_block_reference(x1, params1, 2, conv_dtype=MATMUL_DTYPE)
    assert y1.shape == (2, 8, 8, 8), y1.shape
    assert jnp.allclose(y1, r1, atol=3e-2, rtol=3e-2), \
        float(jnp.max(jnp.abs(y1 - r1)))

    # Case 2: identity shortcut (stride=1, in_planes == planes == 8).
    x2 = jax.random.normal(kx2, (2, 8, 16, 16), jnp.float32)
    params2 = init_basic_block_params(kp2, 8, 8, stride=1)
    y2 = basic_block_forward(x2, params2, stride=1)
    jax.block_until_ready(y2)
    r2 = basic_block_reference(x2, params2, 1, conv_dtype=MATMUL_DTYPE)
    assert y2.shape == (2, 8, 16, 16), y2.shape
    assert jnp.allclose(y2, r2, atol=3e-2, rtol=3e-2), \
        float(jnp.max(jnp.abs(y2 - r2)))

    print("KERNEL_OK")
</pallas_src>

<mosaic_0001>
module attributes {stable_mosaic.version = 11 : i64} {
  func.func @kernel(%arg0: i32, %arg1: i32, %arg2: memref<1x1x9x9x512xbf16, #tpu.memory_space<vmem>>, %arg3: memref<9x128x128xbf16, #tpu.memory_space<vmem>>, %arg4: memref<1x128x128xbf16, #tpu.memory_space<vmem>>, %arg5: memref<1x8x8x128xbf16, #tpu.memory_space<vmem>>, %arg6: memref<1x1x8x128xf32, #tpu.memory_space<vmem>>, %arg7: memref<1x8x8x128xbf16, #tpu.memory_space<vmem>>, %arg8: memref<1x1x8x128xf32, #tpu.memory_space<vmem>>) attributes {dimension_semantics = [#tpu.dimension_semantics<parallel>, #tpu.dimension_semantics<parallel>], iteration_bounds = array<i64: 2, 1>, scalar_prefetch = 0 : i64, scratch_operands = 0 : i64, tpu.core_type = #tpu.core_type<tc>, window_params = [{transform_indices = @transform_0, window_bounds = array<i64: 1, 1, 9, 9, 512>}, {pipeline_mode = #tpu.pipeline_mode<synchronous>, transform_indices = @transform_1, window_bounds = array<i64: 9, 128, 128>}, {pipeline_mode = #tpu.pipeline_mode<synchronous>, transform_indices = @transform_2, window_bounds = array<i64: 1, 128, 128>}, {transform_indices = @transform_3, window_bounds = array<i64: 1, 8, 8, 128>}, {transform_indices = @transform_4, window_bounds = array<i64: 1, 1, 8, 128>}, {transform_indices = @transform_5, window_bounds = array<i64: 1, 8, 8, 128>}, {transform_indices = @transform_6, window_bounds = array<i64: 1, 1, 8, 128>}]} {
    %c0 = arith.constant 0 : index
    %c0_0 = arith.constant 0 : index
    %c0_1 = arith.constant 0 : index
    %c0_2 = arith.constant 0 : index
    %c0_3 = arith.constant 0 : index
    %0 = vector.load %arg2[%c0, %c0_0, %c0_1, %c0_2, %c0_3] : memref<1x1x9x9x512xbf16, #tpu.memory_space<vmem>>, vector<1x1x9x9x512xbf16>
    %1 = vector.shape_cast %0 : vector<1x1x9x9x512xbf16> to vector<9x9x512xbf16>
    %2 = vector.extract_strided_slice %1 {offsets = [0, 0, 0], sizes = [9, 8, 512], strides = [1, 1, 1]} : vector<9x9x512xbf16> to vector<9x8x512xbf16>
    %3 = vector.extract_strided_slice %2 {offsets = [0, 0, 0], sizes = [8, 8, 128], strides = [1, 1, 1]} : vector<9x8x512xbf16> to vector<8x8x128xbf16>
    %4 = vector.shape_cast %3 : vector<8x8x128xbf16> to vector<64x128xbf16>
    %c0_4 = arith.constant 0 : index
    %c0_5 = arith.constant 0 : index
    %c0_6 = arith.constant 0 : index
    %5 = vector.load %arg3[%c0_4, %c0_5, %c0_6] : memref<9x128x128xbf16, #tpu.memory_space<vmem>>, vector<1x128x128xbf16>
    %6 = vector.shape_cast %5 : vector<1x128x128xbf16> to vector<128x128xbf16>
    %cst = arith.constant dense<0.000000e+00> : vector<64x128xf32>
    %7 = tpu.matmul %4, %6, %cst {dimension_numbers = #tpu.dot_dimension_numbers<[1], [0], [0], [1], [0, 0, 1, 1], [], []>} : vector<64x128xbf16>, vector<128x128xbf16>, vector<64x128xf32> -> vector<64x128xf32>
    %8 = vector.extract_strided_slice %2 {offsets = [0, 0, 128], sizes = [8, 8, 128], strides = [1, 1, 1]} : vector<9x8x512xbf16> to vector<8x8x128xbf16>
    %9 = vector.shape_cast %8 : vector<8x8x128xbf16> to vector<64x128xbf16>
    %c1 = arith.constant 1 : index
    %c0_7 = arith.constant 0 : index
    %c0_8 = arith.constant 0 : index
    %10 = vector.load %arg3[%c1, %c0_7, %c0_8] : memref<9x128x128xbf16, #tpu.memory_space<vmem>>, vector<1x128x128xbf16>
    %11 = vector.shape_cast %10 : vector<1x128x128xbf16> to vector<128x128xbf16>
    %cst_9 = arith.constant dense<0.000000e+00> : vector<64x128xf32>
    %12 = tpu.matmul %9, %11, %cst_9 {dimension_numbers = #tpu.dot_dimension_numbers<[1], [0], [0], [1], [0, 0, 1, 1], [], []>} : vector<64x128xbf16>, vector<128x128xbf16>, vector<64x128xf32> -> vector<64x128xf32>
    %13 = arith.addf %7, %12 : vector<64x128xf32>
    %14 = vector.extract_strided_slice %2 {offsets = [0, 0, 256], sizes = [8, 8, 128], strides = [1, 1, 1]} : vector<9x8x512xbf16> to vector<8x8x128xbf16>
    %15 = vector.shape_cast %14 : vector<8x8x128xbf16> to vector<64x128xbf16>
    %c3 = arith.constant 3 : index
    %c0_10 = arith.constant 0 : index
    %c0_11 = arith.constant 0 : index
    %16 = vector.load %arg3[%c3, %c0_10, %c0_11] : memref<9x128x128xbf16, #tpu.memory_space<vmem>>, vector<1x128x128xbf16>
    %17 = vector.shape_cast %16 : vector<1x128x128xbf16> to vector<128x128xbf16>
    %cst_12 = arith.constant dense<0.000000e+00> : vector<64x128xf32>
    %18 = tpu.matmul %15, %17, %cst_12 {dimension_numbers = #tpu.dot_dimension_numbers<[1], [0], [0], [1], [0, 0, 1, 1], [], []>} : vector<64x128xbf16>, vector<128x128xbf16>, vector<64x128xf32> -> vector<64x128xf32>
    %19 = arith.addf %13, %18 : vector<64x128xf32>
    %20 = vector.extract_strided_slice %2 {offsets = [0, 0, 384], sizes = [8, 8, 128], strides = [1, 1, 1]} : vector<9x8x512xbf16> to vector<8x8x128xbf16>
    %21 = vector.shape_cast %20 : vector<8x8x128xbf16> to vector<64x128xbf16>
    %c4 = arith.constant 4 : index
    %c0_13 = arith.constant 0 : index
    %c0_14 = arith.constant 0 : index
    %22 = vector.load %arg3[%c4, %c0_13, %c0_14] : memref<9x128x128xbf16, #tpu.memory_space<vmem>>, vector<1x128x128xbf16>
    %23 = vector.shape_cast %22 : vector<1x128x128xbf16> to vector<128x128xbf16>
    %cst_15 = arith.constant dense<0.000000e+00> : vector<64x128xf32>
    %24 = tpu.matmul %21, %23, %cst_15 {dimension_numbers = #tpu.dot_dimension_numbers<[1], [0], [0], [1], [0, 0, 1, 1], [], []>} : vector<64x128xbf16>, vector<128x128xbf16>, vector<64x128xf32> -> vector<64x128xf32>
    %25 = arith.addf %19, %24 : vector<64x128xf32>
    %26 = vector.extract_strided_slice %2 {offsets = [1, 0, 0], sizes = [8, 8, 128], strides = [1, 1, 1]} : vector<9x8x512xbf16> to vector<8x8x128xbf16>
    %27 = vector.shape_cast %26 : vector<8x8x128xbf16> to vector<64x128xbf16>
    %c6 = arith.constant 6 : index
    %c0_16 = arith.constant 0 : index
    %c0_17 = arith.constant 0 : index
    %28 = vector.load %arg3[%c6, %c0_16, %c0_17] : memref<9x128x128xbf16, #tpu.memory_space<vmem>>, vector<1x128x128xbf16>
    %29 = vector.shape_cast %28 : vector<1x128x128xbf16> to vector<128x128xbf16>
    %cst_18 = arith.constant dense<0.000000e+00> : vector<64x128xf32>
    %30 = tpu.matmul %27, %29, %cst_18 {dimension_numbers = #tpu.dot_dimension_numbers<[1], [0], [0], [1], [0, 0, 1, 1], [], []>} : vector<64x128xbf16>, vector<128x128xbf16>, vector<64x128xf32> -> vector<64x128xf32>
    %31 = arith.addf %25, %30 : vector<64x128xf32>
    %32 = vector.extract_strided_slice %2 {offsets = [1, 0, 128], sizes = [8, 8, 128], strides = [1, 1, 1]} : vector<9x8x512xbf16> to vector<8x8x128xbf16>
    %33 = vector.shape_cast %32 : vector<8x8x128xbf16> to vector<64x128xbf16>
    %c7 = arith.constant 7 : index
    %c0_19 = arith.constant 0 : index
    %c0_20 = arith.constant 0 : index
    %34 = vector.load %arg3[%c7, %c0_19, %c0_20] : memref<9x128x128xbf16, #tpu.memory_space<vmem>>, vector<1x128x128xbf16>
    %35 = vector.shape_cast %34 : vector<1x128x128xbf16> to vector<128x128xbf16>
    %cst_21 = arith.constant dense<0.000000e+00> : vector<64x128xf32>
    %36 = tpu.matmul %33, %35, %cst_21 {dimension_numbers = #tpu.dot_dimension_numbers<[1], [0], [0], [1], [0, 0, 1, 1], [], []>} : vector<64x128xbf16>, vector<128x128xbf16>, vector<64x128xf32> -> vector<64x128xf32>
    %37 = arith.addf %31, %36 : vector<64x128xf32>
    %38 = vector.extract_strided_slice %1 {offsets = [0, 1, 0], sizes = [9, 8, 512], strides = [1, 1, 1]} : vector<9x9x512xbf16> to vector<9x8x512xbf16>
    %39 = vector.extract_strided_slice %38 {offsets = [0, 0, 0], sizes = [8, 8, 128], strides = [1, 1, 1]} : vector<9x8x512xbf16> to vector<8x8x128xbf16>
    %40 = vector.shape_cast %39 : vector<8x8x128xbf16> to vector<64x128xbf16>
    %c2 = arith.constant 2 : index
    %c0_22 = arith.constant 0 : index
    %c0_23 = arith.constant 0 : index
    %41 = vector.load %arg3[%c2, %c0_22, %c0_23] : memref<9x128x128xbf16, #tpu.memory_space<vmem>>, vector<1x128x128xbf16>
    %42 = vector.shape_cast %41 : vector<1x128x128xbf16> to vector<128x128xbf16>
    %cst_24 = arith.constant dense<0.000000e+00> : vector<64x128xf32>
    %43 = tpu.matmul %40, %42, %cst_24 {dimension_numbers = #tpu.dot_dimension_numbers<[1], [0], [0], [1], [0, 0, 1, 1], [], []>} : vector<64x128xbf16>, vector<128x128xbf16>, vector<64x128xf32> -> vector<64x128xf32>
    %44 = arith.addf %37, %43 : vector<64x128xf32>
    %45 = vector.extract_strided_slice %38 {offsets = [0, 0, 256], sizes = [8, 8, 128], strides = [1, 1, 1]} : vector<9x8x512xbf16> to vector<8x8x128xbf16>
    %46 = vector.shape_cast %45 : vector<8x8x128xbf16> to vector<64x128xbf16>
    %c5 = arith.constant 5 : index
    %c0_25 = arith.constant 0 : index
    %c0_26 = arith.constant 0 : index
    %47 = vector.load %arg3[%c5, %c0_25, %c0_26] : memref<9x128x128xbf16, #tpu.memory_space<vmem>>, vector<1x128x128xbf16>
    %48 = vector.shape_cast %47 : vector<1x128x128xbf16> to vector<128x128xbf16>
    %cst_27 = arith.constant dense<0.000000e+00> : vector<64x128xf32>
    %49 = tpu.matmul %46, %48, %cst_27 {dimension_numbers = #tpu.dot_dimension_numbers<[1], [0], [0], [1], [0, 0, 1, 1], [], []>} : vector<64x128xbf16>, vector<128x128xbf16>, vector<64x128xf32> -> vector<64x128xf32>
    %50 = arith.addf %44, %49 : vector<64x128xf32>
    %51 = vector.extract_strided_slice %38 {offsets = [1, 0, 0], sizes = [8, 8, 128], strides = [1, 1, 1]} : vector<9x8x512xbf16> to vector<8x8x128xbf16>
    %52 = vector.shape_cast %51 : vector<8x8x128xbf16> to vector<64x128xbf16>
    %c8 = arith.constant 8 : index
    %c0_28 = arith.constant 0 : index
    %c0_29 = arith.constant 0 : index
    %53 = vector.load %arg3[%c8, %c0_28, %c0_29] : memref<9x128x128xbf16, #tpu.memory_space<vmem>>, vector<1x128x128xbf16>
    %54 = vector.shape_cast %53 : vector<1x128x128xbf16> to vector<128x128xbf16>
    %cst_30 = arith.constant dense<0.000000e+00> : vector<64x128xf32>
    %55 = tpu.matmul %52, %54, %cst_30 {dimension_numbers = #tpu.dot_dimension_numbers<[1], [0], [0], [1], [0, 0, 1, 1], [], []>} : vector<64x128xbf16>, vector<128x128xbf16>, vector<64x128xf32> -> vector<64x128xf32>
    %56 = arith.addf %50, %55 : vector<64x128xf32>
    %57 = vector.shape_cast %56 : vector<64x128xf32> to vector<8x8x128xf32>
    %58 = arith.truncf %57 : vector<8x8x128xf32> to vector<8x8x128xbf16>
    %c0_31 = arith.constant 0 : index
    %c0_32 = arith.constant 0 : index
    %c0_33 = arith.constant 0 : index
    %c0_34 = arith.constant 0 : index
    %59 = vector.load %arg5[%c0_31, %c0_32, %c0_33, %c0_34] : memref<1x8x8x128xbf16, #tpu.memory_space<vmem>>, vector<1x8x8x128xbf16>
    %60 = vector.shape_cast %59 : vector<1x8x8x128xbf16> to vector<8x8x128xbf16>
    %61 = vector.shape_cast %58 : vector<8x8x128xbf16> to vector<1x8x8x128xbf16>
    tpu.vector_store %arg5[%c0_31, %c0_32, %c0_33, %c0_34], %61 {strides = array<i32>} : memref<1x8x8x128xbf16, #tpu.memory_space<vmem>>, vector<1x8x8x128xbf16>,
    %cst_35 = arith.constant dense<0.000000e+00> : vector<128xf32>
    %62 = vector.multi_reduction <add>, %56, %cst_35 [0] : vector<64x128xf32> to vector<128xf32>
    %63 = vector.shape_cast %62 : vector<128xf32> to vector<1x128xf32>
    %64 = arith.mulf %56, %56 : vector<64x128xf32>
    %cst_36 = arith.constant dense<0.000000e+00> : vector<128xf32>
    %65 = vector.multi_reduction <add>, %64, %cst_36 [0] : vector<64x128xf32> to vector<128xf32>
    %66 = vector.shape_cast %65 : vector<128xf32> to vector<1x128xf32>
    %cst_37 = arith.constant 0.000000e+00 : f32
    %67 = vector.broadcast %cst_37 : f32 to vector<6x128xf32>
    %68 = tpu.concatenate %63, %66, %67 in 0 : vector<1x128xf32>, vector<1x128xf32>, vector<6x128xf32> -> vector<8x128xf32>
    %c0_38 = arith.constant 0 : index
    %c0_39 = arith.constant 0 : index
    %c0_40 = arith.constant 0 : index
    %c0_41 = arith.constant 0 : index
    %69 = vector.load %arg6[%c0_38, %c0_39, %c0_40, %c0_41] : memref<1x1x8x128xf32, #tpu.memory_space<vmem>>, vector<1x1x8x128xf32>
    %70 = vector.shape_cast %69 : vector<1x1x8x128xf32> to vector<8x128xf32>
    %71 = vector.shape_cast %68 : vector<8x128xf32> to vector<1x1x8x128xf32>
    tpu.vector_store %arg6[%c0_38, %c0_39, %c0_40, %c0_41], %71 {strides = array<i32>} : memref<1x1x8x128xf32, #tpu.memory_space<vmem>>, vector<1x1x8x128xf32>,
    %72 = vector.extract_strided_slice %1 {offsets = [0, 0, 0], sizes = [9, 8, 512], strides = [1, 1, 1]} : vector<9x9x512xbf16> to vector<9x8x512xbf16>
    %73 = vector.extract_strided_slice %72 {offsets = [0, 0, 384], sizes = [8, 8, 128], strides = [1, 1, 1]} : vector<9x8x512xbf16> to vector<8x8x128xbf16>
    %74 = vector.shape_cast %73 : vector<8x8x128xbf16> to vector<64x128xbf16>
    %c0_42 = arith.constant 0 : index
    %c0_43 = arith.constant 0 : index
    %c0_44 = arith.constant 0 : index
    %75 = vector.load %arg4[%c0_42, %c0_43, %c0_44] : memref<1x128x128xbf16, #tpu.memory_space<vmem>>, vector<1x128x128xbf16>
    %76 = vector.shape_cast %75 : vector<1x128x128xbf16> to vector<128x128xbf16>
    %cst_45 = arith.constant dense<0.000000e+00> : vector<64x128xf32>
    %77 = tpu.matmul %74, %76, %cst_45 {dimension_numbers = #tpu.dot_dimension_numbers<[1], [0], [0], [1], [0, 0, 1, 1], [], []>} : vector<64x128xbf16>, vector<128x128xbf16>, vector<64x128xf32> -> vector<64x128xf32>
    %78 = vector.shape_cast %77 : vector<64x128xf32> to vector<8x8x128xf32>
    %79 = arith.truncf %78 : vector<8x8x128xf32> to vector<8x8x128xbf16>
    %c0_46 = arith.constant 0 : index
    %c0_47 = arith.constant 0 : index
    %c0_48 = arith.constant 0 : index
    %c0_49 = arith.constant 0 : index
    %80 = vector.load %arg7[%c0_46, %c0_47, %c0_48, %c0_49] : memref<1x8x8x128xbf16, #tpu.memory_space<vmem>>, vector<1x8x8x128xbf16>
    %81 = vector.shape_cast %80 : vector<1x8x8x128xbf16> to vector<8x8x128xbf16>
    %82 = vector.shape_cast %79 : vector<8x8x128xbf16> to vector<1x8x8x128xbf16>
    tpu.vector_store %arg7[%c0_46, %c0_47, %c0_48, %c0_49], %82 {strides = array<i32>} : memref<1x8x8x128xbf16, #tpu.memory_space<vmem>>, vector<1x8x8x128xbf16>,
    %cst_50 = arith.constant dense<0.000000e+00> : vector<128xf32>
    %83 = vector.multi_reduction <add>, %77, %cst_50 [0] : vector<64x128xf32> to vector<128xf32>
    %84 = vector.shape_cast %83 : vector<128xf32> to vector<1x128xf32>
    %85 = arith.mulf %77, %77 : vector<64x128xf32>
    %cst_51 = arith.constant dense<0.000000e+00> : vector<128xf32>
    %86 = vector.multi_reduction <add>, %85, %cst_51 [0] : vector<64x128xf32> to vector<128xf32>
    %87 = vector.shape_cast %86 : vector<128xf32> to vector<1x128xf32>
    %cst_52 = arith.constant 0.000000e+00 : f32
    %88 = vector.broadcast %cst_52 : f32 to vector<6x128xf32>
    %89 = tpu.concatenate %84, %87, %88 in 0 : vector<1x128xf32>, vector<1x128xf32>, vector<6x128xf32> -> vector<8x128xf32>
    %c0_53 = arith.constant 0 : index
    %c0_54 = arith.constant 0 : index
    %c0_55 = arith.constant 0 : index
    %c0_56 = arith.constant 0 : index
    %90 = vector.load %arg8[%c0_53, %c0_54, %c0_55, %c0_56] : memref<1x1x8x128xf32, #tpu.memory_space<vmem>>, vector<1x1x8x128xf32>
    %91 = vector.shape_cast %90 : vector<1x1x8x128xf32> to vector<8x128xf32>
    %92 = vector.shape_cast %89 : vector<8x128xf32> to vector<1x1x8x128xf32>
    tpu.vector_store %arg8[%c0_53, %c0_54, %c0_55, %c0_56], %92 {strides = array<i32>} : memref<1x1x8x128xf32, #tpu.memory_space<vmem>>, vector<1x1x8x128xf32>,
    return
  }
  func.func @transform_0(%arg0: i32, %arg1: i32) -> (i32, i32, i32, i32, i32) {
    %c0_i32 = arith.constant 0 : i32
    %c0_i32_0 = arith.constant 0 : i32
    %c0_i32_1 = arith.constant 0 : i32
    %c0_i32_2 = arith.constant 0 : i32
    return %arg0, %arg1, %c0_i32, %c0_i32_0, %c0_i32_1 : i32, i32, i32, i32, i32
  }
  func.func @transform_1(%arg0: i32, %arg1: i32) -> (i32, i32, i32) {
    %c0_i32 = arith.constant 0 : i32
    %c0_i32_0 = arith.constant 0 : i32
    %c0_i32_1 = arith.constant 0 : i32
    %c0_i32_2 = arith.constant 0 : i32
    return %c0_i32, %c0_i32_0, %c0_i32_1 : i32, i32, i32
  }
  func.func @transform_2(%arg0: i32, %arg1: i32) -> (i32, i32, i32) {
    %c0_i32 = arith.constant 0 : i32
    %c0_i32_0 = arith.constant 0 : i32
    %c0_i32_1 = arith.constant 0 : i32
    %c0_i32_2 = arith.constant 0 : i32
    return %c0_i32, %c0_i32_0, %c0_i32_1 : i32, i32, i32
  }
  func.func @transform_3(%arg0: i32, %arg1: i32) -> (i32, i32, i32, i32) {
    %c0_i32 = arith.constant 0 : i32
    %c0_i32_0 = arith.constant 0 : i32
    %c0_i32_1 = arith.constant 0 : i32
    return %arg0, %arg1, %c0_i32, %c0_i32_0 : i32, i32, i32, i32
  }
  func.func @transform_4(%arg0: i32, %arg1: i32) -> (i32, i32, i32, i32) {
    %c0_i32 = arith.constant 0 : i32
    %c0_i32_0 = arith.constant 0 : i32
    %c0_i32_1 = arith.constant 0 : i32
    return %arg0, %arg1, %c0_i32, %c0_i32_0 : i32, i32, i32, i32
  }
  func.func @transform_5(%arg0: i32, %arg1: i32) -> (i32, i32, i32, i32) {
    %c0_i32 = arith.constant 0 : i32
    %c0_i32_0 = arith.constant 0 : i32
    %c0_i32_1 = arith.constant 0 : i32
    return %arg0, %arg1, %c0_i32, %c0_i32_0 : i32, i32, i32, i32
  }
  func.func @transform_6(%arg0: i32, %arg1: i32) -> (i32, i32, i32, i32) {
    %c0_i32 = arith.constant 0 : i32
    %c0_i32_0 = arith.constant 0 : i32
    %c0_i32_1 = arith.constant 0 : i32
    return %arg0, %arg1, %c0_i32, %c0_i32_0 : i32, i32, i32, i32
  }
}

module attributes {stable_mosaic.version = 11 : i64} {
  func.func @kernel(%arg0: i32, %arg1: i32, %arg2: memref<1x1x10x10x128xbf16, #tpu.memory_space<vmem>>, %arg3: memref<1x128xf32, #tpu.memory_space<vmem>>, %arg4: memref<1x128xf32, #tpu.memory_space<vmem>>, %arg5: memref<9x128x128xbf16, #tpu.memory_space<vmem>>, %arg6: memref<1x8x8x128xbf16, #tpu.memory_space<vmem>>, %arg7: memref<1x1x8x128xf32, #tpu.memory_space<vmem>>) attributes {dimension_semantics = [#tpu.dimension_semantics<parallel>, #tpu.dimension_semantics<parallel>], iteration_bounds = array<i64: 2, 1>, scalar_prefetch = 0 : i64, scratch_operands = 0 : i64, tpu.core_type = #tpu.core_type<tc>, window_params = [{transform_indices = @transform_0, window_bounds = array<i64: 1, 1, 10, 10, 128>}, {pipeline_mode = #tpu.pipeline_mode<synchronous>, transform_indices = @transform_1, window_bounds = array<i64: 1, 128>}, {pipeline_mode = #tpu.pipeline_mode<synchronous>, transform_indices = @transform_2, window_bounds = array<i64: 1, 128>}, {pipeline_mode = #tpu.pipeline_mode<synchronous>, transform_indices = @transform_3, window_bounds = array<i64: 9, 128, 128>}, {transform_indices = @transform_4, window_bounds = array<i64: 1, 8, 8, 128>}, {transform_indices = @transform_5, window_bounds = array<i64: 1, 1, 8, 128>}]} {
    %c0 = arith.constant 0 : index
    %c0_0 = arith.constant 0 : index
    %c0_1 = arith.constant 0 : index
    %c0_2 = arith.constant 0 : index
    %c0_3 = arith.constant 0 : index
    %0 = vector.load %arg2[%c0, %c0_0, %c0_1, %c0_2, %c0_3] : memref<1x1x10x10x128xbf16, #tpu.memory_space<vmem>>, vector<1x1x10x10x128xbf16>
    %1 = vector.shape_cast %0 : vector<1x1x10x10x128xbf16> to vector<10x10x128xbf16>
    %2 = arith.extf %1 : vector<10x10x128xbf16> to vector<10x10x128xf32>
    %c0_4 = arith.constant 0 : index
    %c0_5 = arith.constant 0 : index
    %3 = vector.load %arg3[%c0_4, %c0_5] : memref<1x128xf32, #tpu.memory_space<vmem>>, vector<1x128xf32>
    %4 = vector.shape_cast %3 : vector<1x128xf32> to vector<1x1x128xf32>
    %5 = vector.broadcast %4 : vector<1x1x128xf32> to vector<10x10x128xf32>
    %6 = arith.mulf %2, %5 : vector<10x10x128xf32>
    %c0_6 = arith.constant 0 : index
    %c0_7 = arith.constant 0 : index
    %7 = vector.load %arg4[%c0_6, %c0_7] : memref<1x128xf32, #tpu.memory_space<vmem>>, vector<1x128xf32>
    %8 = vector.shape_cast %7 : vector<1x128xf32> to vector<1x1x128xf32>
    %9 = vector.broadcast %8 : vector<1x1x128xf32> to vector<10x10x128xf32>
    %10 = arith.addf %6, %9 : vector<10x10x128xf32>
    %cst = arith.constant 0.000000e+00 : f32
    %11 = vector.broadcast %cst : f32 to vector<10x10x128xf32>
    %12 = arith.maximumf %10, %11 : vector<10x10x128xf32>
    %13 = tpu.iota {dimensions = array<i32: 0>} : vector<10x10x1xi32>
    %c8_i32 = arith.constant 8 : i32
    %14 = arith.muli %arg1, %c8_i32 : i32
    %15 = vector.broadcast %14 : i32 to vector<10x10x1xi32>
    %16 = arith.addi %13, %15 : vector<10x10x1xi32>
    %17 = tpu.iota {dimensions = array<i32: 1>} : vector<10x10x1xi32>
    %c1_i32 = arith.constant 1 : i32
    %18 = vector.broadcast %c1_i32 : i32 to vector<10x10x1xi32>
    %19 = arith.cmpi sge, %16, %18 : vector<10x10x1xi32>
    %c8_i32_8 = arith.constant 8 : i32
    %20 = vector.broadcast %c8_i32_8 : i32 to vector<10x10x1xi32>
    %21 = arith.cmpi sle, %16, %20 : vector<10x10x1xi32>
    %22 = arith.andi %19, %21 : vector<10x10x1xi1>
    %c1_i32_9 = arith.constant 1 : i32
    %23 = vector.broadcast %c1_i32_9 : i32 to vector<10x10x1xi32>
    %24 = arith.cmpi sge, %17, %23 : vector<10x10x1xi32>
    %25 = arith.andi %22, %24 : vector<10x10x1xi1>
    %c8_i32_10 = arith.constant 8 : i32
    %26 = vector.broadcast %c8_i32_10 : i32 to vector<10x10x1xi32>
    %27 = arith.cmpi sle, %17, %26 : vector<10x10x1xi32>
    %28 = arith.andi %25, %27 : vector<10x10x1xi1>
    %cst_11 = arith.constant 0.000000e+00 : f32
    %29 = vector.shape_cast %28 : vector<10x10x1xi1> to vector<10x10x1xi1>
    %30 = vector.broadcast %29 : vector<10x10x1xi1> to vector<10x10x128xi1>
    %31 = vector.broadcast %cst_11 : f32 to vector<10x10x128xf32>
    %32 = arith.select %30, %12, %31 : vector<10x10x128xi1>, vector<10x10x128xf32>
    %33 = arith.truncf %32 : vector<10x10x128xf32> to vector<10x10x128xbf16>
    %34 = vector.extract_strided_slice %33 {offsets = [0, 0, 0], sizes = [10, 8, 128], strides = [1, 1, 1]} : vector<10x10x128xbf16> to vector<10x8x128xbf16>
    %35 = vector.extract_strided_slice %34 {offsets = [0, 0, 0], sizes = [8, 8, 128], strides = [1, 1, 1]} : vector<10x8x128xbf16> to vector<8x8x128xbf16>
    %36 = vector.shape_cast %35 : vector<8x8x128xbf16> to vector<64x128xbf16>
    %c0_12 = arith.constant 0 : index
    %c0_13 = arith.constant 0 : index
    %c0_14 = arith.constant 0 : index
    %37 = vector.load %arg5[%c0_12, %c0_13, %c0_14] : memref<9x128x128xbf16, #tpu.memory_space<vmem>>, vector<1x128x128xbf16>
    %38 = vector.shape_cast %37 : vector<1x128x128xbf16> to vector<128x128xbf16>
    %cst_15 = arith.constant dense<0.000000e+00> : vector<64x128xf32>
    %39 = tpu.matmul %36, %38, %cst_15 {dimension_numbers = #tpu.dot_dimension_numbers<[1], [0], [0], [1], [0, 0, 1, 1], [], []>} : vector<64x128xbf16>, vector<128x128xbf16>, vector<64x128xf32> -> vector<64x128xf32>
    %40 = vector.extract_strided_slice %34 {offsets = [1, 0, 0], sizes = [8, 8, 128], strides = [1, 1, 1]} : vector<10x8x128xbf16> to vector<8x8x128xbf16>
    %41 = vector.shape_cast %40 : vector<8x8x128xbf16> to vector<64x128xbf16>
    %c3 = arith.constant 3 : index
    %c0_16 = arith.constant 0 : index
    %c0_17 = arith.constant 0 : index
    %42 = vector.load %arg5[%c3, %c0_16, %c0_17] : memref<9x128x128xbf16, #tpu.memory_space<vmem>>, vector<1x128x128xbf16>
    %43 = vector.shape_cast %42 : vector<1x128x128xbf16> to vector<128x128xbf16>
    %cst_18 = arith.constant dense<0.000000e+00> : vector<64x128xf32>
    %44 = tpu.matmul %41, %43, %cst_18 {dimension_numbers = #tpu.dot_dimension_numbers<[1], [0], [0], [1], [0, 0, 1, 1], [], []>} : vector<64x128xbf16>, vector<128x128xbf16>, vector<64x128xf32> -> vector<64x128xf32>
    %45 = arith.addf %39, %44 : vector<64x128xf32>
    %46 = vector.extract_strided_slice %34 {offsets = [2, 0, 0], sizes = [8, 8, 128], strides = [1, 1, 1]} : vector<10x8x128xbf16> to vector<8x8x128xbf16>
    %47 = vector.shape_cast %46 : vector<8x8x128xbf16> to vector<64x128xbf16>
    %c6 = arith.constant 6 : index
    %c0_19 = arith.constant 0 : index
    %c0_20 = arith.constant 0 : index
    %48 = vector.load %arg5[%c6, %c0_19, %c0_20] : memref<9x128x128xbf16, #tpu.memory_space<vmem>>, vector<1x128x128xbf16>
    %49 = vector.shape_cast %48 : vector<1x128x128xbf16> to vector<128x128xbf16>
    %cst_21 = arith.constant dense<0.000000e+00> : vector<64x128xf32>
    %50 = tpu.matmul %47, %49, %cst_21 {dimension_numbers = #tpu.dot_dimension_numbers<[1], [0], [0], [1], [0, 0, 1, 1], [], []>} : vector<64x128xbf16>, vector<128x128xbf16>, vector<64x128xf32> -> vector<64x128xf32>
    %51 = arith.addf %45, %50 : vector<64x128xf32>
    %52 = vector.extract_strided_slice %33 {offsets = [0, 1, 0], sizes = [10, 8, 128], strides = [1, 1, 1]} : vector<10x10x128xbf16> to vector<10x8x128xbf16>
    %53 = vector.extract_strided_slice %52 {offsets = [0, 0, 0], sizes = [8, 8, 128], strides = [1, 1, 1]} : vector<10x8x128xbf16> to vector<8x8x128xbf16>
    %54 = vector.shape_cast %53 : vector<8x8x128xbf16> to vector<64x128xbf16>
    %c1 = arith.constant 1 : index
    %c0_22 = arith.constant 0 : index
    %c0_23 = arith.constant 0 : index
    %55 = vector.load %arg5[%c1, %c0_22, %c0_23] : memref<9x128x128xbf16, #tpu.memory_space<vmem>>, vector<1x128x128xbf16>
    %56 = vector.shape_cast %55 : vector<1x128x128xbf16> to vector<128x128xbf16>
    %cst_24 = arith.constant dense<0.000000e+00> : vector<64x128xf32>
    %57 = tpu.matmul %54, %56, %cst_24 {dimension_numbers = #tpu.dot_dimension_numbers<[1], [0], [0], [1], [0, 0, 1, 1], [], []>} : vector<64x128xbf16>, vector<128x128xbf16>, vector<64x128xf32> -> vector<64x128xf32>
    %58 = arith.addf %51, %57 : vector<64x128xf32>
    %59 = vector.extract_strided_slice %52 {offsets = [1, 0, 0], sizes = [8, 8, 128], strides = [1, 1, 1]} : vector<10x8x128xbf16> to vector<8x8x128xbf16>
    %60 = vector.shape_cast %59 : vector<8x8x128xbf16> to vector<64x128xbf16>
    %c4 = arith.constant 4 : index
    %c0_25 = arith.constant 0 : index
    %c0_26 = arith.constant 0 : index
    %61 = vector.load %arg5[%c4, %c0_25, %c0_26] : memref<9x128x128xbf16, #tpu.memory_space<vmem>>, vector<1x128x128xbf16>
    %62 = vector.shape_cast %61 : vector<1x128x128xbf16> to vector<128x128xbf16>
    %cst_27 = arith.constant dense<0.000000e+00> : vector<64x128xf32>
    %63 = tpu.matmul %60, %62, %cst_27 {dimension_numbers = #tpu.dot_dimension_numbers<[1], [0], [0], [1], [0, 0, 1, 1], [], []>} : vector<64x128xbf16>, vector<128x128xbf16>, vector<64x128xf32> -> vector<64x128xf32>
    %64 = arith.addf %58, %63 : vector<64x128xf32>
    %65 = vector.extract_strided_slice %52 {offsets = [2, 0, 0], sizes = [8, 8, 128], strides = [1, 1, 1]} : vector<10x8x128xbf16> to vector<8x8x128xbf16>
    %66 = vector.shape_cast %65 : vector<8x8x128xbf16> to vector<64x128xbf16>
    %c7 = arith.constant 7 : index
    %c0_28 = arith.constant 0 : index
    %c0_29 = arith.constant 0 : index
    %67 = vector.load %arg5[%c7, %c0_28, %c0_29] : memref<9x128x128xbf16, #tpu.memory_space<vmem>>, vector<1x128x128xbf16>
    %68 = vector.shape_cast %67 : vector<1x128x128xbf16> to vector<128x128xbf16>
    %cst_30 = arith.constant dense<0.000000e+00> : vector<64x128xf32>
    %69 = tpu.matmul %66, %68, %cst_30 {dimension_numbers = #tpu.dot_dimension_numbers<[1], [0], [0], [1], [0, 0, 1, 1], [], []>} : vector<64x128xbf16>, vector<128x128xbf16>, vector<64x128xf32> -> vector<64x128xf32>
    %70 = arith.addf %64, %69 : vector<64x128xf32>
    %71 = vector.extract_strided_slice %33 {offsets = [0, 2, 0], sizes = [10, 8, 128], strides = [1, 1, 1]} : vector<10x10x128xbf16> to vector<10x8x128xbf16>
    %72 = vector.extract_strided_slice %71 {offsets = [0, 0, 0], sizes = [8, 8, 128], strides = [1, 1, 1]} : vector<10x8x128xbf16> to vector<8x8x128xbf16>
    %73 = vector.shape_cast %72 : vector<8x8x128xbf16> to vector<64x128xbf16>
    %c2 = arith.constant 2 : index
    %c0_31 = arith.constant 0 : index
    %c0_32 = arith.constant 0 : index
    %74 = vector.load %arg5[%c2, %c0_31, %c0_32] : memref<9x128x128xbf16, #tpu.memory_space<vmem>>, vector<1x128x128xbf16>
    %75 = vector.shape_cast %74 : vector<1x128x128xbf16> to vector<128x128xbf16>
    %cst_33 = arith.constant dense<0.000000e+00> : vector<64x128xf32>
    %76 = tpu.matmul %73, %75, %cst_33 {dimension_numbers = #tpu.dot_dimension_numbers<[1], [0], [0], [1], [0, 0, 1, 1], [], []>} : vector<64x128xbf16>, vector<128x128xbf16>, vector<64x128xf32> -> vector<64x128xf32>
    %77 = arith.addf %70, %76 : vector<64x128xf32>
    %78 = vector.extract_strided_slice %71 {offsets = [1, 0, 0], sizes = [8, 8, 128], strides = [1, 1, 1]} : vector<10x8x128xbf16> to vector<8x8x128xbf16>
    %79 = vector.shape_cast %78 : vector<8x8x128xbf16> to vector<64x128xbf16>
    %c5 = arith.constant 5 : index
    %c0_34 = arith.constant 0 : index
    %c0_35 = arith.constant 0 : index
    %80 = vector.load %arg5[%c5, %c0_34, %c0_35] : memref<9x128x128xbf16, #tpu.memory_space<vmem>>, vector<1x128x128xbf16>
    %81 = vector.shape_cast %80 : vector<1x128x128xbf16> to vector<128x128xbf16>
    %cst_36 = arith.constant dense<0.000000e+00> : vector<64x128xf32>
    %82 = tpu.matmul %79, %81, %cst_36 {dimension_numbers = #tpu.dot_dimension_numbers<[1], [0], [0], [1], [0, 0, 1, 1], [], []>} : vector<64x128xbf16>, vector<128x128xbf16>, vector<64x128xf32> -> vector<64x128xf32>
    %83 = arith.addf %77, %82 : vector<64x128xf32>
    %84 = vector.extract_strided_slice %71 {offsets = [2, 0, 0], sizes = [8, 8, 128], strides = [1, 1, 1]} : vector<10x8x128xbf16> to vector<8x8x128xbf16>
    %85 = vector.shape_cast %84 : vector<8x8x128xbf16> to vector<64x128xbf16>
    %c8 = arith.constant 8 : index
    %c0_37 = arith.constant 0 : index
    %c0_38 = arith.constant 0 : index
    %86 = vector.load %arg5[%c8, %c0_37, %c0_38] : memref<9x128x128xbf16, #tpu.memory_space<vmem>>, vector<1x128x128xbf16>
    %87 = vector.shape_cast %86 : vector<1x128x128xbf16> to vector<128x128xbf16>
    %cst_39 = arith.constant dense<0.000000e+00> : vector<64x128xf32>
    %88 = tpu.matmul %85, %87, %cst_39 {dimension_numbers = #tpu.dot_dimension_numbers<[1], [0], [0], [1], [0, 0, 1, 1], [], []>} : vector<64x128xbf16>, vector<128x128xbf16>, vector<64x128xf32> -> vector<64x128xf32>
    %89 = arith.addf %83, %88 : vector<64x128xf32>
    %90 = vector.shape_cast %89 : vector<64x128xf32> to vector<8x8x128xf32>
    %91 = arith.truncf %90 : vector<8x8x128xf32> to vector<8x8x128xbf16>
    %c0_40 = arith.constant 0 : index
    %c0_41 = arith.constant 0 : index
    %c0_42 = arith.constant 0 : index
    %c0_43 = arith.constant 0 : index
    %92 = vector.load %arg6[%c0_40, %c0_41, %c0_42, %c0_43] : memref<1x8x8x128xbf16, #tpu.memory_space<vmem>>, vector<1x8x8x128xbf16>
    %93 = vector.shape_cast %92 : vector<1x8x8x128xbf16> to vector<8x8x128xbf16>
    %94 = vector.shape_cast %91 : vector<8x8x128xbf16> to vector<1x8x8x128xbf16>
    tpu.vector_store %arg6[%c0_40, %c0_41, %c0_42, %c0_43], %94 {strides = array<i32>} : memref<1x8x8x128xbf16, #tpu.memory_space<vmem>>, vector<1x8x8x128xbf16>,
    %cst_44 = arith.constant dense<0.000000e+00> : vector<128xf32>
    %95 = vector.multi_reduction <add>, %89, %cst_44 [0] : vector<64x128xf32> to vector<128xf32>
    %96 = vector.shape_cast %95 : vector<128xf32> to vector<1x128xf32>
    %97 = arith.mulf %89, %89 : vector<64x128xf32>
    %cst_45 = arith.constant dense<0.000000e+00> : vector<128xf32>
    %98 = vector.multi_reduction <add>, %97, %cst_45 [0] : vector<64x128xf32> to vector<128xf32>
    %99 = vector.shape_cast %98 : vector<128xf32> to vector<1x128xf32>
    %cst_46 = arith.constant 0.000000e+00 : f32
    %100 = vector.broadcast %cst_46 : f32 to vector<6x128xf32>
    %101 = tpu.concatenate %96, %99, %100 in 0 : vector<1x128xf32>, vector<1x128xf32>, vector<6x128xf32> -> vector<8x128xf32>
    %c0_47 = arith.constant 0 : index
    %c0_48 = arith.constant 0 : index
    %c0_49 = arith.constant 0 : index
    %c0_50 = arith.constant 0 : index
    %102 = vector.load %arg7[%c0_47, %c0_48, %c0_49, %c0_50] : memref<1x1x8x128xf32, #tpu.memory_space<vmem>>, vector<1x1x8x128xf32>
    %103 = vector.shape_cast %102 : vector<1x1x8x128xf32> to vector<8x128xf32>
    %104 = vector.shape_cast %101 : vector<8x128xf32> to vector<1x1x8x128xf32>
    tpu.vector_store %arg7[%c0_47, %c0_48, %c0_49, %c0_50], %104 {strides = array<i32>} : memref<1x1x8x128xf32, #tpu.memory_space<vmem>>, vector<1x1x8x128xf32>,
    return
  }
  func.func @transform_0(%arg0: i32, %arg1: i32) -> (i32, i32, i32, i32, i32) {
    %c0_i32 = arith.constant 0 : i32
    %c0_i32_0 = arith.constant 0 : i32
    %c0_i32_1 = arith.constant 0 : i32
    %c0_i32_2 = arith.constant 0 : i32
    return %arg0, %arg1, %c0_i32, %c0_i32_0, %c0_i32_1 : i32, i32, i32, i32, i32
  }
  func.func @transform_1(%arg0: i32, %arg1: i32) -> (i32, i32) {
    %c0_i32 = arith.constant 0 : i32
    %c0_i32_0 = arith.constant 0 : i32
    %c0_i32_1 = arith.constant 0 : i32
    return %c0_i32, %c0_i32_0 : i32, i32
  }
  func.func @transform_2(%arg0: i32, %arg1: i32) -> (i32, i32) {
    %c0_i32 = arith.constant 0 : i32
    %c0_i32_0 = arith.constant 0 : i32
    %c0_i32_1 = arith.constant 0 : i32
    return %c0_i32, %c0_i32_0 : i32, i32
  }
  func.func @transform_3(%arg0: i32, %arg1: i32) -> (i32, i32, i32) {
    %c0_i32 = arith.constant 0 : i32
    %c0_i32_0 = arith.constant 0 : i32
    %c0_i32_1 = arith.constant 0 : i32
    %c0_i32_2 = arith.constant 0 : i32
    return %c0_i32, %c0_i32_0, %c0_i32_1 : i32, i32, i32
  }
  func.func @transform_4(%arg0: i32, %arg1: i32) -> (i32, i32, i32, i32) {
    %c0_i32 = arith.constant 0 : i32
    %c0_i32_0 = arith.constant 0 : i32
    %c0_i32_1 = arith.constant 0 : i32
    return %arg0, %arg1, %c0_i32, %c0_i32_0 : i32, i32, i32, i32
  }
  func.func @transform_5(%arg0: i32, %arg1: i32) -> (i32, i32, i32, i32) {
    %c0_i32 = arith.constant 0 : i32
    %c0_i32_0 = arith.constant 0 : i32
    %c0_i32_1 = arith.constant 0 : i32
    return %arg0, %arg1, %c0_i32, %c0_i32_0 : i32, i32, i32, i32
  }
}

module attributes {stable_mosaic.version = 11 : i64} {
  func.func @_bn_relu_add_proj_kernel(%arg0: i32, %arg1: i32, %arg2: memref<1x8x8x128xbf16, #tpu.memory_space<vmem>>, %arg3: memref<1x128xf32, #tpu.memory_space<vmem>>, %arg4: memref<1x128xf32, #tpu.memory_space<vmem>>, %arg5: memref<1x8x8x128xbf16, #tpu.memory_space<vmem>>, %arg6: memref<1x128xf32, #tpu.memory_space<vmem>>, %arg7: memref<1x128xf32, #tpu.memory_space<vmem>>, %arg8: memref<1x8x8x128xf32, #tpu.memory_space<vmem>>) attributes {dimension_semantics = [#tpu.dimension_semantics<parallel>, #tpu.dimension_semantics<parallel>], iteration_bounds = array<i64: 2, 1>, scalar_prefetch = 0 : i64, scratch_operands = 0 : i64, tpu.core_type = #tpu.core_type<tc>, window_params = [{transform_indices = @transform_0, window_bounds = array<i64: 1, 8, 8, 128>}, {pipeline_mode = #tpu.pipeline_mode<synchronous>, transform_indices = @transform_1, window_bounds = array<i64: 1, 128>}, {pipeline_mode = #tpu.pipeline_mode<synchronous>, transform_indices = @transform_2, window_bounds = array<i64: 1, 128>}, {transform_indices = @transform_3, window_bounds = array<i64: 1, 8, 8, 128>}, {pipeline_mode = #tpu.pipeline_mode<synchronous>, transform_indices = @transform_4, window_bounds = array<i64: 1, 128>}, {pipeline_mode = #tpu.pipeline_mode<synchronous>, transform_indices = @transform_5, window_bounds = array<i64: 1, 128>}, {transform_indices = @transform_6, window_bounds = array<i64: 1, 8, 8, 128>}]} {
    %c0 = arith.constant 0 : index
    %c0_0 = arith.constant 0 : index
    %c0_1 = arith.constant 0 : index
    %c0_2 = arith.constant 0 : index
    %0 = vector.load %arg2[%c0, %c0_0, %c0_1, %c0_2] : memref<1x8x8x128xbf16, #tpu.memory_space<vmem>>, vector<1x8x8x128xbf16>
    %1 = vector.shape_cast %0 : vector<1x8x8x128xbf16> to vector<8x8x128xbf16>
    %2 = arith.extf %1 : vector<8x8x128xbf16> to vector<8x8x128xf32>
    %c0_3 = arith.constant 0 : index
    %c0_4 = arith.constant 0 : index
    %3 = vector.load %arg3[%c0_3, %c0_4] : memref<1x128xf32, #tpu.memory_space<vmem>>, vector<1x128xf32>
    %4 = vector.shape_cast %3 : vector<1x128xf32> to vector<1x1x128xf32>
    %5 = vector.broadcast %4 : vector<1x1x128xf32> to vector<8x8x128xf32>
    %6 = arith.mulf %2, %5 : vector<8x8x128xf32>
    %c0_5 = arith.constant 0 : index
    %c0_6 = arith.constant 0 : index
    %7 = vector.load %arg4[%c0_5, %c0_6] : memref<1x128xf32, #tpu.memory_space<vmem>>, vector<1x128xf32>
    %8 = vector.shape_cast %7 : vector<1x128xf32> to vector<1x1x128xf32>
    %9 = vector.broadcast %8 : vector<1x1x128xf32> to vector<8x8x128xf32>
    %10 = arith.addf %6, %9 : vector<8x8x128xf32>
    %c0_7 = arith.constant 0 : index
    %c0_8 = arith.constant 0 : index
    %c0_9 = arith.constant 0 : index
    %c0_10 = arith.constant 0 : index
    %11 = vector.load %arg5[%c0_7, %c0_8, %c0_9, %c0_10] : memref<1x8x8x128xbf16, #tpu.memory_space<vmem>>, vector<1x8x8x128xbf16>
    %12 = vector.shape_cast %11 : vector<1x8x8x128xbf16> to vector<8x8x128xbf16>
    %13 = arith.extf %12 : vector<8x8x128xbf16> to vector<8x8x128xf32>
    %c0_11 = arith.constant 0 : index
    %c0_12 = arith.constant 0 : index
    %14 = vector.load %arg6[%c0_11, %c0_12] : memref<1x128xf32, #tpu.memory_space<vmem>>, vector<1x128xf32>
    %15 = vector.shape_cast %14 : vector<1x128xf32> to vector<1x1x128xf32>
    %16 = vector.broadcast %15 : vector<1x1x128xf32> to vector<8x8x128xf32>
    %17 = arith.mulf %13, %16 : vector<8x8x128xf32>
    %c0_13 = arith.constant 0 : index
    %c0_14 = arith.constant 0 : index
    %18 = vector.load %arg7[%c0_13, %c0_14] : memref<1x128xf32, #tpu.memory_space<vmem>>, vector<1x128xf32>
    %19 = vector.shape_cast %18 : vector<1x128xf32> to vector<1x1x128xf32>
    %20 = vector.broadcast %19 : vector<1x1x128xf32> to vector<8x8x128xf32>
    %21 = arith.addf %17, %20 : vector<8x8x128xf32>
    %22 = arith.addf %10, %21 : vector<8x8x128xf32>
    %cst = arith.constant 0.000000e+00 : f32
    %23 = vector.broadcast %cst : f32 to vector<8x8x128xf32>
    %24 = arith.maximumf %22, %23 : vector<8x8x128xf32>
    %c0_15 = arith.constant 0 : index
    %c0_16 = arith.constant 0 : index
    %c0_17 = arith.constant 0 : index
    %c0_18 = arith.constant 0 : index
    %25 = vector.load %arg8[%c0_15, %c0_16, %c0_17, %c0_18] : memref<1x8x8x128xf32, #tpu.memory_space<vmem>>, vector<1x8x8x128xf32>
    %26 = vector.shape_cast %25 : vector<1x8x8x128xf32> to vector<8x8x128xf32>
    %27 = vector.shape_cast %24 : vector<8x8x128xf32> to vector<1x8x8x128xf32>
    tpu.vector_store %arg8[%c0_15, %c0_16, %c0_17, %c0_18], %27 {strides = array<i32>} : memref<1x8x8x128xf32, #tpu.memory_space<vmem>>, vector<1x8x8x128xf32>,
    return
  }
  func.func @transform_0(%arg0: i32, %arg1: i32) -> (i32, i32, i32, i32) {
    %c0_i32 = arith.constant 0 : i32
    %c0_i32_0 = arith.constant 0 : i32
    %c0_i32_1 = arith.constant 0 : i32
    return %arg0, %arg1, %c0_i32, %c0_i32_0 : i32, i32, i32, i32
  }
  func.func @transform_1(%arg0: i32, %arg1: i32) -> (i32, i32) {
    %c0_i32 = arith.constant 0 : i32
    %c0_i32_0 = arith.constant 0 : i32
    %c0_i32_1 = arith.constant 0 : i32
    return %c0_i32, %c0_i32_0 : i32, i32
  }
  func.func @transform_2(%arg0: i32, %arg1: i32) -> (i32, i32) {
    %c0_i32 = arith.constant 0 : i32
    %c0_i32_0 = arith.constant 0 : i32
    %c0_i32_1 = arith.constant 0 : i32
    return %c0_i32, %c0_i32_0 : i32, i32
  }
  func.func @transform_3(%arg0: i32, %arg1: i32) -> (i32, i32, i32, i32) {
    %c0_i32 = arith.constant 0 : i32
    %c0_i32_0 = arith.constant 0 : i32
    %c0_i32_1 = arith.constant 0 : i32
    return %arg0, %arg1, %c0_i32, %c0_i32_0 : i32, i32, i32, i32
  }
  func.func @transform_4(%arg0: i32, %arg1: i32) -> (i32, i32) {
    %c0_i32 = arith.constant 0 : i32
    %c0_i32_0 = arith.constant 0 : i32
    %c0_i32_1 = arith.constant 0 : i32
    return %c0_i32, %c0_i32_0 : i32, i32
  }
  func.func @transform_5(%arg0: i32, %arg1: i32) -> (i32, i32) {
    %c0_i32 = arith.constant 0 : i32
    %c0_i32_0 = arith.constant 0 : i32
    %c0_i32_1 = arith.constant 0 : i32
    return %c0_i32, %c0_i32_0 : i32, i32
  }
  func.func @transform_6(%arg0: i32, %arg1: i32) -> (i32, i32, i32, i32) {
    %c0_i32 = arith.constant 0 : i32
    %c0_i32_0 = arith.constant 0 : i32
    %c0_i32_1 = arith.constant 0 : i32
    return %arg0, %arg1, %c0_i32, %c0_i32_0 : i32, i32, i32, i32
  }
}

</mosaic_0001>

<llo_original>
// kernel: basic_block_forward.5
$region0: #{basic_block_forward.5}
  #allocation0 [shape = 'u32[]', space=smem, size = 0x4, offset = 0x4, fixed_abs, tag = 'smem constant byte address 0x4 - core index']
  #allocation1 [shape = 'u32[144,128]{1,0:T(1,128)}', space=vmem, size = 0x12000, scoped, tag = 'internal scratch']
  %s0 = inlined_call_operand.vmem [shape: bf16[2,8,8,128], index: 0, kind: input, shape index: {}]
  %s1 = inlined_call_operand.vmem [shape: f32[1,128], index: 1, kind: input, shape index: {}]
  %s2 = inlined_call_operand.vmem [shape: f32[1,128], index: 2, kind: input, shape index: {}]
  %s3 = inlined_call_operand.vmem [shape: bf16[2,8,8,128], index: 3, kind: input, shape index: {}]
  %s4 = inlined_call_operand.vmem [shape: f32[1,128], index: 4, kind: input, shape index: {}]
  %s5 = inlined_call_operand.vmem [shape: f32[1,128], index: 5, kind: input, shape index: {}]
  %s6 = inlined_call_operand.vmem [shape: f32[2,8,8,128], index: 6, kind: output, shape index: {}]
  %s7 = sld [smem:[#allocation0]]
  $region57: #{basic_block_forward.5} parent=0
    _
  %s9 = ssub.s32 1, %s7
  %s10 = scalar_select 0, %s9, %s7
  loop: start=0, step=1, limit=4
  $region2: #{basic_block_forward.5} parent=0 // loop_pre_header
    _
  $region3: #{basic_block_forward.5} parent=0 // loop_header
    %s12 = sphi 0, %s16
    %p13 = scmp.ge.s32.totalorder %s12, 4
    %s19 = sphi 0, %s31
    %s20 = sphi 0, %s27
    %s21 = sphi 0, %s19
    %s22 = sphi 0, %s20
    %s23 = sphi 0, %s21
    %s24 = sphi 0, %s22
    %s36 = sphi 0, %s38
    %s39 = sphi 0, %s36
    %s40 = sphi 0, %s39
    %s56 = sphi 0, %s40
    %s60 = sphi 0, %s60
    %s62 = sphi 0, %s60
    %s63 = sphi 0, %s62
    %s77 = sphi 0, %s63
    %s81 = sphi 0, %s81
    %s83 = sphi 0, %s81
    %s84 = sphi 0, %s83
    %s98 = sphi 0, %s84
    %s106 = sphi 0, %s108
    %s109 = sphi 0, %s106
    %s110 = sphi 0, %s109
    %s126 = sphi 0, %s110
    %s130 = sphi 0, %s130
    %s132 = sphi 0, %s130
    %s133 = sphi 0, %s132
    %s147 = sphi 0, %s133
    %s151 = sphi 0, %s151
    %s153 = sphi 0, %s151
    %s154 = sphi 0, %s153
    %s168 = sphi 0, %s154
    %s176 = sphi 0, %s178
    %s179 = sphi 0, %s176
    %s180 = sphi 0, %s179
    %s196 = sphi 0, %s180
  $region4: #{basic_block_forward.5} parent=0 // loop_header_branch
    %15 = sbr.rel (%p13) target = $region8
  $region5: #{basic_block_forward.5} parent=0 // loop_body
    %s17 = ssub.s32 %s12, 1
    %s18 = ssub.s32 %s12, 2
    %s25 = sadd.s32 1, %s20
    %p26 = scmp.ge.s32.totalorder %s25, 1
    %s27 = scalar_select %p26, 0, %s25
    %s28 = sadd.s32 1, %s19
    %s29 = scalar_select %p26, %s28, %s19
    %p30 = scmp.ge.s32.totalorder %s29, 2
    %s31 = scalar_select %p30, 0, %s29
    %s32 = ssub.s32 %s19, %s31
    %s33 = ssub.s32 %s20, %s27
    %s34 = sor.u32 %s32, %s33
    %p35 = scmp.eq.s32.totalorder %s34, 0
    %s37 = sadd.s32 %s36, 1
    %s38 = scalar_select %p35, %s36, %s37
    %p41 = pneg %p35
    %p42 = scmp.eq.s32.totalorder %s12, 1
    %p43 = por %p41, %p42
    %p44 = scmp.ne.s32.totalorder %s36, %s39
    %p45 = scmp.eq.s32.totalorder %s12, 0
    %p46 = por %p44, %p45
    %p47 = scmp.ne.s32.totalorder %s36, %s39
    %p48 = scmp.eq.s32.totalorder %s17, 1
    %p49 = por %p47, %p48
    %p50 = scmp.ne.s32.totalorder %s39, %s40
    %p51 = scmp.eq.s32.totalorder %s17, 0
    %p52 = por %p50, %p51
    %p53 = scmp.ne.s32.totalorder %s39, %s40
    %p54 = scmp.eq.s32.totalorder %s18, 1
    %p55 = por %p53, %p54
    %p57 = scmp.ne.s32.totalorder %s40, %s56
    %p58 = scmp.eq.s32.totalorder %s18, 0
    %p59 = por %p57, %p58
    %s61 = sadd.s32 %s60, 1
    %p64 = scmp.eq.s32.totalorder %s12, 1
    %p65 = scmp.ne.s32.totalorder %s60, %s62
    %p66 = scmp.eq.s32.totalorder %s12, 0
    %p67 = por %p65, %p66
    %p68 = scmp.ne.s32.totalorder %s60, %s62
    %p69 = scmp.eq.s32.totalorder %s17, 1
    %p70 = por %p68, %p69
    %p71 = scmp.ne.s32.totalorder %s62, %s63
    %p72 = scmp.eq.s32.totalorder %s17, 0
    %p73 = por %p71, %p72
    %p74 = scmp.ne.s32.totalorder %s62, %s63
    %p75 = scmp.eq.s32.totalorder %s18, 1
    %p76 = por %p74, %p75
    %p78 = scmp.ne.s32.totalorder %s63, %s77
    %p79 = scmp.eq.s32.totalorder %s18, 0
    %p80 = por %p78, %p79
    %s82 = sadd.s32 %s81, 1
    %p85 = scmp.eq.s32.totalorder %s12, 1
    %p86 = scmp.ne.s32.totalorder %s81, %s83
    %p87 = scmp.eq.s32.totalorder %s12, 0
    %p88 = por %p86, %p87
    %p89 = scmp.ne.s32.totalorder %s81, %s83
    %p90 = scmp.eq.s32.totalorder %s17, 1
    %p91 = por %p89, %p90
    %p92 = scmp.ne.s32.totalorder %s83, %s84
    %p93 = scmp.eq.s32.totalorder %s17, 0
    %p94 = por %p92, %p93
    %p95 = scmp.ne.s32.totalorder %s83, %s84
    %p96 = scmp.eq.s32.totalorder %s18, 1
    %p97 = por %p95, %p96
    %p99 = scmp.ne.s32.totalorder %s84, %s98
    %p100 = scmp.eq.s32.totalorder %s18, 0
    %p101 = por %p99, %p100
    %s102 = ssub.s32 %s19, %s31
    %s103 = ssub.s32 %s20, %s27
    %s104 = sor.u32 %s102, %s103
    %p105 = scmp.eq.s32.totalorder %s104, 0
    %s107 = sadd.s32 %s106, 1
    %s108 = scalar_select %p105, %s106, %s107
    %p111 = pneg %p105
    %p112 = scmp.eq.s32.totalorder %s12, 1
    %p113 = por %p111, %p112
    %p114 = scmp.ne.s32.totalorder %s106, %s109
    %p115 = scmp.eq.s32.totalorder %s12, 0
    %p116 = por %p114, %p115
    %p117 = scmp.ne.s32.totalorder %s106, %s109
    %p118 = scmp.eq.s32.totalorder %s17, 1
    %p119 = por %p117, %p118
    %p120 = scmp.ne.s32.totalorder %s109, %s110
    %p121 = scmp.eq.s32.totalorder %s17, 0
    %p122 = por %p120, %p121
    %p123 = scmp.ne.s32.totalorder %s109, %s110
    %p124 = scmp.eq.s32.totalorder %s18, 1
    %p125 = por %p123, %p124
    %p127 = scmp.ne.s32.totalorder %s110, %s126
    %p128 = scmp.eq.s32.totalorder %s18, 0
    %p129 = por %p127, %p128
    %s131 = sadd.s32 %s130, 1
    %p134 = scmp.eq.s32.totalorder %s12, 1
    %p135 = scmp.ne.s32.totalorder %s130, %s132
    %p136 = scmp.eq.s32.totalorder %s12, 0
    %p137 = por %p135, %p136
    %p138 = scmp.ne.s32.totalorder %s130, %s132
    %p139 = scmp.eq.s32.totalorder %s17, 1
    %p140 = por %p138, %p139
    %p141 = scmp.ne.s32.totalorder %s132, %s133
    %p142 = scmp.eq.s32.totalorder %s17, 0
    %p143 = por %p141, %p142
    %p144 = scmp.ne.s32.totalorder %s132, %s133
    %p145 = scmp.eq.s32.totalorder %s18, 1
    %p146 = por %p144, %p145
    %p148 = scmp.ne.s32.totalorder %s133, %s147
    %p149 = scmp.eq.s32.totalorder %s18, 0
    %p150 = por %p148, %p149
    %s152 = sadd.s32 %s151, 1
    %p155 = scmp.eq.s32.totalorder %s12, 1
    %p156 = scmp.ne.s32.totalorder %s151, %s153
    %p157 = scmp.eq.s32.totalorder %s12, 0
    %p158 = por %p156, %p157
    %p159 = scmp.ne.s32.totalorder %s151, %s153
    %p160 = scmp.eq.s32.totalorder %s17, 1
    %p161 = por %p159, %p160
    %p162 = scmp.ne.s32.totalorder %s153, %s154
    %p163 = scmp.eq.s32.totalorder %s17, 0
    %p164 = por %p162, %p163
    %p165 = scmp.ne.s32.totalorder %s153, %s154
    %p166 = scmp.eq.s32.totalorder %s18, 1
    %p167 = por %p165, %p166
    %p169 = scmp.ne.s32.totalorder %s154, %s168
    %p170 = scmp.eq.s32.totalorder %s18, 0
    %p171 = por %p169, %p170
    %s172 = ssub.s32 %s19, %s31
    %s173 = ssub.s32 %s20, %s27
    %s174 = sor.u32 %s172, %s173
    %p175 = scmp.eq.s32.totalorder %s174, 0
    %s177 = sadd.s32 %s176, 1
    %s178 = scalar_select %p175, %s176, %s177
    %p181 = pneg %p175
    %p182 = scmp.eq.s32.totalorder %s12, 1
    %p183 = por %p181, %p182
    %p184 = scmp.ne.s32.totalorder %s176, %s179
    %p185 = scmp.eq.s32.totalorder %s12, 0
    %p186 = por %p184, %p185
    %p187 = scmp.ne.s32.totalorder %s176, %s179
    %p188 = scmp.eq.s32.totalorder %s17, 1
    %p189 = por %p187, %p188
    %p190 = scmp.ne.s32.totalorder %s179, %s180
    %p191 = scmp.eq.s32.totalorder %s17, 0
    %p192 = por %p190, %p191
    %p193 = scmp.ne.s32.totalorder %s179, %s180
    %p194 = scmp.eq.s32.totalorder %s18, 1
    %p195 = por %p193, %p194
    %p197 = scmp.ne.s32.totalorder %s180, %s196
    %p198 = scmp.eq.s32.totalorder %s18, 0
    %p199 = por %p197, %p198
    %p200 = scmp.le.s32.totalorder 1, %s12
    %p201 = scmp.lt.s32.totalorder %s12, 3
    %p202 = pnand %p200, %p201
    %p203 = pneg %p202
    // Predicated region
    $region9: #{basic_block_forward.5} parent=5 // pred_check
      _
    $region10: #{basic_block_forward.5} parent=5 // pred_check_branch
      %205 = sbr.rel (%p202) target = $region12
    $region11: #{basic_block_forward.5} parent=5 // pred_region
      %s206 = ssub.s32 %s12, 1
      // Predicated region
      $region13: #{basic_block_forward.5} parent=11 // pred_check
        %p207 = pneg %p73
      $region14: #{basic_block_forward.5} parent=11 // pred_check_branch
        %209 = sbr.rel (%p207) target = $region16
      $region15: #{basic_block_forward.5} parent=11 // pred_region
        _
      $region16: #{basic_block_forward.5} parent=11 // pred_fallthru
        _
      // Predicated region
      $region17: #{basic_block_forward.5} parent=11 // pred_check
        %p210 = pneg %p94
      $region18: #{basic_block_forward.5} parent=11 // pred_check_branch
        %212 = sbr.rel (%p210) target = $region20
      $region19: #{basic_block_forward.5} parent=11 // pred_region
        _
      $region20: #{basic_block_forward.5} parent=11 // pred_fallthru
        _
      // Predicated region
      $region21: #{basic_block_forward.5} parent=11 // pred_check
        %p213 = pneg %p143
      $region22: #{basic_block_forward.5} parent=11 // pred_check_branch
        %215 = sbr.rel (%p213) target = $region24
      $region23: #{basic_block_forward.5} parent=11 // pred_region
        _
      $region24: #{basic_block_forward.5} parent=11 // pred_fallthru
        _
      // Predicated region
      $region25: #{basic_block_forward.5} parent=11 // pred_check
        %p216 = pneg %p164
      $region26: #{basic_block_forward.5} parent=11 // pred_check_branch
        %218 = sbr.rel (%p216) target = $region28
      $region27: #{basic_block_forward.5} parent=11 // pred_region
        _
      $region28: #{basic_block_forward.5} parent=11 // pred_fallthru
        _
    $region12: #{basic_block_forward.5} parent=5 // pred_fallthru
      _
    %p219 = scmp.lt.s32.totalorder %s12, 2
    // Predicated region
    $region29: #{basic_block_forward.5} parent=5 // pred_check
      %p220 = pneg %p219
    $region30: #{basic_block_forward.5} parent=5 // pred_check_branch
      %222 = sbr.rel (%p220) target = $region32
    $region31: #{basic_block_forward.5} parent=5 // pred_region
      // Predicated region
      $region33: #{basic_block_forward.5} parent=31 // pred_check
        %p223 = pneg %p46
      $region34: #{basic_block_forward.5} parent=31 // pred_check_branch
        %225 = sbr.rel (%p223) target = $region36
      $region35: #{basic_block_forward.5} parent=31 // pred_region
        %s226 = smul.u32 8, %s20
        %p227 = scmp.lt.s32.totalorder %s19, 1
        %s228 = scalar_select %p227, %s19, 1
        %p229 = scmp.lt.s32.totalorder %s226, 7
        %s230 = scalar_select %p229, %s226, 7
        %s231 = smul.addr %s228, 8
        %s232 = sadd.s32 %s230, %s231
        %s233 = smul.addr %s232, 4
        %s234 = scalar_lea.vmem %s0, %s233
        %s235 = smul.u32 8, %s20
      $region36: #{basic_block_forward.5} parent=31 // pred_fallthru
        _
      // Predicated region
      $region37: #{basic_block_forward.5} parent=31 // pred_check
        %p236 = pneg %p116
      $region38: #{basic_block_forward.5} parent=31 // pred_check_branch
        %238 = sbr.rel (%p236) target = $region40
      $region39: #{basic_block_forward.5} parent=31 // pred_region
        %s239 = smul.u32 8, %s20
        %p240 = scmp.lt.s32.totalorder %s19, 1
        %s241 = scalar_select %p240, %s19, 1
        %p242 = scmp.lt.s32.totalorder %s239, 7
        %s243 = scalar_select %p242, %s239, 7
        %s244 = smul.addr %s241, 8
        %s245 = sadd.s32 %s243, %s244
        %s246 = smul.addr %s245, 4
        %s247 = scalar_lea.vmem %s3, %s246
        %s248 = smul.u32 8, %s20
      $region40: #{basic_block_forward.5} parent=31 // pred_fallthru
        _
    $region32: #{basic_block_forward.5} parent=5 // pred_fallthru
      _
    %p249 = scmp.le.s32.totalorder 1, %s12
    %p250 = scmp.lt.s32.totalorder %s12, 3
    %p251 = pnand %p249, %p250
    %p252 = pneg %p251
    // Predicated region
    $region41: #{basic_block_forward.5} parent=5 // pred_check
      _
    $region42: #{basic_block_forward.5} parent=5 // pred_check_branch
      %254 = sbr.rel (%p251) target = $region44
    $region43: #{basic_block_forward.5} parent=5 // pred_region
      %s255 = ssub.s32 %s12, 1
      %s256 = smul.u32 8, %s22
      %p257 = scmp.lt.s32.totalorder %s21, 1
      %s258 = scalar_select %p257, %s21, 1
      %p259 = scmp.lt.s32.totalorder %s256, 7
      %s260 = scalar_select %p259, %s256, 7
      %s261 = smul.addr %s258, 8
      %s262 = sadd.s32 %s260, %s261
      %s263 = smul.addr %s262, 4
      %s264 = scalar_lea.vmem %s0, %s263
      %p265 = pneg %p52
      %p266 = pneg %p49
      %p267 = pneg %p73
      %p268 = pneg %p70
      %p269 = pneg %p94
      %p270 = pneg %p91
      %s271 = smul.u32 8, %s22
      %p272 = scmp.lt.s32.totalorder %s21, 1
      %s273 = scalar_select %p272, %s21, 1
      %p274 = scmp.lt.s32.totalorder %s271, 7
      %s275 = scalar_select %p274, %s271, 7
      %s276 = smul.addr %s273, 8
      %s277 = sadd.s32 %s275, %s276
      %s278 = smul.addr %s277, 4
      %s279 = scalar_lea.vmem %s3, %s278
      %p280 = pneg %p122
      %p281 = pneg %p119
      %p282 = pneg %p143
      %p283 = pneg %p140
      %p284 = pneg %p164
      %p285 = pneg %p161
      %p286 = pneg %p192
      %p287 = pneg %p189
      %s288 = smul.u32 8, %s22
      %p289 = scmp.lt.s32.totalorder %s21, 1
      %s290 = scalar_select %p289, %s21, 1
      %p291 = scmp.lt.s32.totalorder %s288, 7
      %s292 = scalar_select %p291, %s288, 7
      %s293 = smul.addr %s290, 8
      %s294 = sadd.s32 %s292, %s293
      %s295 = smul.addr %s294, 8
      %s296 = scalar_lea.vmem %s6, %s295
      %s297 = smul.u32 8, %s22
      %p298 = scmp.lt.s32.totalorder %s21, 1
      %s299 = scalar_select %p298, %s21, 1
      %p300 = scmp.lt.s32.totalorder %s297, 7
      %s301 = scalar_select %p300, %s297, 7
      %s302 = smul.addr %s299, 8
      %s303 = sadd.s32 %s301, %s302
      %s304 = smul.addr %s303, 4
      %s305 = scalar_lea.vmem %s0, %s304
      %s306 = smul.u32 8, %s22
      %s307 = smul.u32 8, %s22
      %p308 = scmp.lt.s32.totalorder %s21, 1
      %s309 = scalar_select %p308, %s21, 1
      %p310 = scmp.lt.s32.totalorder %s307, 7
      %s311 = scalar_select %p310, %s307, 7
      %s312 = smul.addr %s309, 8
      %s313 = sadd.s32 %s311, %s312
      %s314 = smul.addr %s313, 4
      %s315 = scalar_lea.vmem %s3, %s314
      %s316 = smul.u32 8, %s22
      %s317 = smul.u32 8, %s22
      %p318 = scmp.lt.s32.totalorder %s21, 1
      %s319 = scalar_select %p318, %s21, 1
      %p320 = scmp.lt.s32.totalorder %s317, 7
      %s321 = scalar_select %p320, %s317, 7
      %s322 = smul.addr %s319, 8
      %s323 = sadd.s32 %s321, %s322
      %s324 = smul.addr %s323, 8
      %s325 = scalar_lea.vmem %s6, %s324
      %s326 = smul.u32 8, %s22
      %v327 = vld [vmem:[%s305] sm:$0xf]
      %v328 = vld [vmem:[%s305 + $0x4] sm:$0xf]
      %v329 = vld [vmem:[%s305 + $0x8] sm:$0xf]
      %v330 = vld [vmem:[%s305 + $0xc] sm:$0xf]
      %v331 = vld [vmem:[%s305 + $0x10] sm:$0xf]
      %v332 = vld [vmem:[%s305 + $0x14] sm:$0xf]
      %v333 = vld [vmem:[%s305 + $0x18] sm:$0xf]
      %v334 = vld [vmem:[%s305 + $0x1c] sm:$0xf]
      %v335 = vunpack.c.l.bf16 %v327
      %v336 = vunpack.c.l.bf16 %v328
      %v337 = vunpack.c.l.bf16 %v329
      %v338 = vunpack.c.l.bf16 %v330
      %v339 = vunpack.c.l.bf16 %v331
      %v340 = vunpack.c.l.bf16 %v332
      %v341 = vunpack.c.l.bf16 %v333
      %v342 = vunpack.c.l.bf16 %v334
      %v343 = vld [vmem:[%s1] sm:$0x1]
      %v345 = vlaneseq
      %v346 = vshrl.u32 %v345, 7
      %v347 = vsub.s32 0, %v346
      %v348 = vrot.slane %v343, %v347
      %v350 = vmul.f32 %v335, %v348
      %v351 = vmul.f32 %v336, %v348
      %v352 = vmul.f32 %v337, %v348
      %v353 = vmul.f32 %v338, %v348
      %v354 = vmul.f32 %v339, %v348
      %v355 = vmul.f32 %v340, %v348
      %v356 = vmul.f32 %v341, %v348
      %v357 = vmul.f32 %v342, %v348
      %v358 = vld [vmem:[%s2] sm:$0x1]
      %v360 = vlaneseq
      %v361 = vshrl.u32 %v360, 7
      %v362 = vsub.s32 0, %v361
      %v363 = vrot.slane %v358, %v362
      %v365 = vadd.f32 %v350, %v363
      %v366 = vadd.f32 %v351, %v363
      %v367 = vadd.f32 %v352, %v363
      %v368 = vadd.f32 %v353, %v363
      %v369 = vadd.f32 %v354, %v363
      %v370 = vadd.f32 %v355, %v363
      %v371 = vadd.f32 %v356, %v363
      %v372 = vadd.f32 %v357, %v363
      %v373 = vld [vmem:[%s315] sm:$0xf]
      %v374 = vld [vmem:[%s315 + $0x4] sm:$0xf]
      %v375 = vld [vmem:[%s315 + $0x8] sm:$0xf]
      %v376 = vld [vmem:[%s315 + $0xc] sm:$0xf]
      %v377 = vld [vmem:[%s315 + $0x10] sm:$0xf]
      %v378 = vld [vmem:[%s315 + $0x14] sm:$0xf]
      %v379 = vld [vmem:[%s315 + $0x18] sm:$0xf]
      %v380 = vld [vmem:[%s315 + $0x1c] sm:$0xf]
      %v381 = vunpack.c.l.bf16 %v373
      %v382 = vunpack.c.l.bf16 %v374
      %v383 = vunpack.c.l.bf16 %v375
      %v384 = vunpack.c.l.bf16 %v376
      %v385 = vunpack.c.l.bf16 %v377
      %v386 = vunpack.c.l.bf16 %v378
      %v387 = vunpack.c.l.bf16 %v379
      %v388 = vunpack.c.l.bf16 %v380
      %v389 = vld [vmem:[%s4] sm:$0x1]
      %v391 = vlaneseq
      %v392 = vshrl.u32 %v391, 7
      %v393 = vsub.s32 0, %v392
      %v394 = vrot.slane %v389, %v393
      %v396 = vmul.f32 %v381, %v394
      %v397 = vmul.f32 %v382, %v394
      %v398 = vmul.f32 %v383, %v394
      %v399 = vmul.f32 %v384, %v394
      %v400 = vmul.f32 %v385, %v394
      %v401 = vmul.f32 %v386, %v394
      %v402 = vmul.f32 %v387, %v394
      %v403 = vmul.f32 %v388, %v394
      %v404 = vld [vmem:[%s5] sm:$0x1]
      %v406 = vlaneseq
      %v407 = vshrl.u32 %v406, 7
      %v408 = vsub.s32 0, %v407
      %v409 = vrot.slane %v404, %v408
      %v411 = vadd.f32 %v396, %v409
      %v412 = vadd.f32 %v397, %v409
      %v413 = vadd.f32 %v398, %v409
      %v414 = vadd.f32 %v399, %v409
      %v415 = vadd.f32 %v400, %v409
      %v416 = vadd.f32 %v401, %v409
      %v417 = vadd.f32 %v402, %v409
      %v418 = vadd.f32 %v403, %v409
      %v419 = vadd.f32 %v365, %v411
      %v420 = vadd.f32 %v366, %v412
      %v421 = vadd.f32 %v367, %v413
      %v422 = vadd.f32 %v368, %v414
      %v423 = vadd.f32 %v369, %v415
      %v424 = vadd.f32 %v370, %v416
      %v425 = vadd.f32 %v371, %v417
      %v426 = vadd.f32 %v372, %v418
      %v427 = vmax.f32 %v419, 0.0
      %v428 = vmax.f32 %v420, 0.0
      %v429 = vmax.f32 %v421, 0.0
      %v430 = vmax.f32 %v422, 0.0
      %v431 = vmax.f32 %v423, 0.0
      %v432 = vmax.f32 %v424, 0.0
      %v433 = vmax.f32 %v425, 0.0
      %v434 = vmax.f32 %v426, 0.0
      %435 = vst [vmem:[%s325] sm:$0xff] %v427
      %436 = vst [vmem:[%s325 + $0x8] sm:$0xff] %v428
      %437 = vst [vmem:[%s325 + $0x10] sm:$0xff] %v429
      %438 = vst [vmem:[%s325 + $0x18] sm:$0xff] %v430
      %439 = vst [vmem:[%s325 + $0x20] sm:$0xff] %v431
      %440 = vst [vmem:[%s325 + $0x28] sm:$0xff] %v432
      %441 = vst [vmem:[%s325 + $0x30] sm:$0xff] %v433
      %442 = vst [vmem:[%s325 + $0x38] sm:$0xff] %v434
      %s443 = smul.u32 8, %s22
      %p444 = scmp.lt.s32.totalorder %s21, 1
      %s445 = scalar_select %p444, %s21, 1
      %p446 = scmp.lt.s32.totalorder %s443, 7
      %s447 = scalar_select %p446, %s443, 7
      %s448 = smul.addr %s445, 8
      %s449 = sadd.s32 %s447, %s448
      %s450 = smul.addr %s449, 8
      %s451 = scalar_lea.vmem %s6, %s450
      // Predicated region
      $region45: #{basic_block_forward.5} parent=43 // pred_check
        %p452 = pneg %p189
      $region46: #{basic_block_forward.5} parent=43 // pred_check_branch
        %454 = sbr.rel (%p452) target = $region48
      $region47: #{basic_block_forward.5} parent=43 // pred_region
        %s455 = smul.u32 8, %s22
      $region48: #{basic_block_forward.5} parent=43 // pred_fallthru
        _
    $region44: #{basic_block_forward.5} parent=5 // pred_fallthru
      _
    %p456 = scmp.le.s32.totalorder 2, %s12
    // Predicated region
    $region49: #{basic_block_forward.5} parent=5 // pred_check
      %p457 = pneg %p456
    $region50: #{basic_block_forward.5} parent=5 // pred_check_branch
      %459 = sbr.rel (%p457) target = $region52
    $region51: #{basic_block_forward.5} parent=5 // pred_region
      %s460 = ssub.s32 %s12, 2
      // Predicated region
      $region53: #{basic_block_forward.5} parent=51 // pred_check
        %p461 = pneg %p195
      $region54: #{basic_block_forward.5} parent=51 // pred_check_branch
        %463 = sbr.rel (%p461) target = $region56
      $region55: #{basic_block_forward.5} parent=51 // pred_region
        %s464 = smul.u32 8, %s24
        %p465 = scmp.lt.s32.totalorder %s23, 1
        %s466 = scalar_select %p465, %s23, 1
        %p467 = scmp.lt.s32.totalorder %s464, 7
        %s468 = scalar_select %p467, %s464, 7
        %s469 = smul.addr %s466, 8
        %s470 = sadd.s32 %s468, %s469
        %s471 = smul.addr %s470, 8
        %s472 = scalar_lea.vmem %s6, %s471
      $region56: #{basic_block_forward.5} parent=51 // pred_fallthru
        _
    $region52: #{basic_block_forward.5} parent=5 // pred_fallthru
      _
  $region6: #{basic_block_forward.5} parent=0 // loop_footer
    %s16 = sadd.s32 1, %s12
  $region7: #{basic_block_forward.5} parent=0 // loop_footer_branch
    %11 = sbr.rel target = $region3
  $region8: #{basic_block_forward.5} parent=0 // loop_exit
    _

// kernel: basic_block_forward.3
$region0: #{basic_block_forward.3}
  #allocation0 [shape = 'u32[]', space=smem, size = 0x4, offset = 0x4, fixed_abs, tag = 'smem constant byte address 0x4 - core index']
  #allocation1 [shape = 'u32[144,128]{1,0:T(1,128)}', space=vmem, size = 0x12000, scoped, tag = 'internal scratch']
  %s0 = inlined_call_operand.vmem [shape: bf16[2,1,9,9,512], index: 0, kind: input, shape index: {}]
  %s1 = inlined_call_operand.vmem [shape: bf16[9,128,128], index: 1, kind: input, shape index: {}]
  %s2 = inlined_call_operand.vmem [shape: bf16[1,128,128], index: 2, kind: input, shape index: {}]
  %s3 = inlined_call_operand.vmem [shape: bf16[2,8,8,128], index: 3, kind: output, shape index: {0}]
  %s4 = inlined_call_operand.vmem [shape: f32[2,1,8,128], index: 4, kind: output, shape index: {1}]
  %s5 = inlined_call_operand.vmem [shape: bf16[2,8,8,128], index: 5, kind: output, shape index: {2}]
  %s6 = inlined_call_operand.vmem [shape: f32[2,1,8,128], index: 6, kind: output, shape index: {3}]
  %7 = xla_tuple %s3, %s4, %s5, %s6
  %s8 = sld [smem:[#allocation0]]
  $region69: #{basic_block_forward.3} parent=0
    _
  %s10 = ssub.s32 1, %s8
  %s11 = scalar_select 0, %s10, %s8
  loop: start=0, step=1, limit=4
  $region2: #{basic_block_forward.3} parent=0 // loop_pre_header
    _
  $region3: #{basic_block_forward.3} parent=0 // loop_header
    %s13 = sphi 0, %s17
    %p14 = scmp.ge.s32.totalorder %s13, 4
    %s20 = sphi 0, %s32
    %s21 = sphi 0, %s28
    %s22 = sphi 0, %s20
    %s23 = sphi 0, %s21
    %s24 = sphi 0, %s22
    %s25 = sphi 0, %s23
    %s37 = sphi 0, %s39
    %s40 = sphi 0, %s37
    %s41 = sphi 0, %s40
    %s57 = sphi 0, %s41
    %s61 = sphi 0, %s61
    %s63 = sphi 0, %s61
    %s64 = sphi 0, %s63
    %s78 = sphi 0, %s64
    %s82 = sphi 0, %s82
    %s84 = sphi 0, %s82
    %s85 = sphi 0, %s84
    %s99 = sphi 0, %s85
    %s107 = sphi 0, %s109
    %s110 = sphi 0, %s107
    %s111 = sphi 0, %s110
    %s127 = sphi 0, %s111
    %s135 = sphi 0, %s137
    %s138 = sphi 0, %s135
    %s139 = sphi 0, %s138
    %s155 = sphi 0, %s139
    %s163 = sphi 0, %s165
    %s166 = sphi 0, %s163
    %s167 = sphi 0, %s166
    %s183 = sphi 0, %s167
    %s191 = sphi 0, %s193
    %s194 = sphi 0, %s191
    %s195 = sphi 0, %s194
    %s211 = sphi 0, %s195
  $region4: #{basic_block_forward.3} parent=0 // loop_header_branch
    %16 = sbr.rel (%p14) target = $region8
  $region5: #{basic_block_forward.3} parent=0 // loop_body
    %s18 = ssub.s32 %s13, 1
    %s19 = ssub.s32 %s13, 2
    %s26 = sadd.s32 1, %s21
    %p27 = scmp.ge.s32.totalorder %s26, 1
    %s28 = scalar_select %p27, 0, %s26
    %s29 = sadd.s32 1, %s20
    %s30 = scalar_select %p27, %s29, %s20
    %p31 = scmp.ge.s32.totalorder %s30, 2
    %s32 = scalar_select %p31, 0, %s30
    %s33 = ssub.s32 %s20, %s32
    %s34 = ssub.s32 %s21, %s28
    %s35 = sor.u32 %s33, %s34
    %p36 = scmp.eq.s32.totalorder %s35, 0
    %s38 = sadd.s32 %s37, 1
    %s39 = scalar_select %p36, %s37, %s38
    %p42 = pneg %p36
    %p43 = scmp.eq.s32.totalorder %s13, 1
    %p44 = por %p42, %p43
    %p45 = scmp.ne.s32.totalorder %s37, %s40
    %p46 = scmp.eq.s32.totalorder %s13, 0
    %p47 = por %p45, %p46
    %p48 = scmp.ne.s32.totalorder %s37, %s40
    %p49 = scmp.eq.s32.totalorder %s18, 1
    %p50 = por %p48, %p49
    %p51 = scmp.ne.s32.totalorder %s40, %s41
    %p52 = scmp.eq.s32.totalorder %s18, 0
    %p53 = por %p51, %p52
    %p54 = scmp.ne.s32.totalorder %s40, %s41
    %p55 = scmp.eq.s32.totalorder %s19, 1
    %p56 = por %p54, %p55
    %p58 = scmp.ne.s32.totalorder %s41, %s57
    %p59 = scmp.eq.s32.totalorder %s19, 0
    %p60 = por %p58, %p59
    %s62 = sadd.s32 %s61, 1
    %p65 = scmp.eq.s32.totalorder %s13, 1
    %p66 = scmp.ne.s32.totalorder %s61, %s63
    %p67 = scmp.eq.s32.totalorder %s13, 0
    %p68 = por %p66, %p67
    %p69 = scmp.ne.s32.totalorder %s61, %s63
    %p70 = scmp.eq.s32.totalorder %s18, 1
    %p71 = por %p69, %p70
    %p72 = scmp.ne.s32.totalorder %s63, %s64
    %p73 = scmp.eq.s32.totalorder %s18, 0
    %p74 = por %p72, %p73
    %p75 = scmp.ne.s32.totalorder %s63, %s64
    %p76 = scmp.eq.s32.totalorder %s19, 1
    %p77 = por %p75, %p76
    %p79 = scmp.ne.s32.totalorder %s64, %s78
    %p80 = scmp.eq.s32.totalorder %s19, 0
    %p81 = por %p79, %p80
    %s83 = sadd.s32 %s82, 1
    %p86 = scmp.eq.s32.totalorder %s13, 1
    %p87 = scmp.ne.s32.totalorder %s82, %s84
    %p88 = scmp.eq.s32.totalorder %s13, 0
    %p89 = por %p87, %p88
    %p90 = scmp.ne.s32.totalorder %s82, %s84
    %p91 = scmp.eq.s32.totalorder %s18, 1
    %p92 = por %p90, %p91
    %p93 = scmp.ne.s32.totalorder %s84, %s85
    %p94 = scmp.eq.s32.totalorder %s18, 0
    %p95 = por %p93, %p94
    %p96 = scmp.ne.s32.totalorder %s84, %s85
    %p97 = scmp.eq.s32.totalorder %s19, 1
    %p98 = por %p96, %p97
    %p100 = scmp.ne.s32.totalorder %s85, %s99
    %p101 = scmp.eq.s32.totalorder %s19, 0
    %p102 = por %p100, %p101
    %s103 = ssub.s32 %s20, %s32
    %s104 = ssub.s32 %s21, %s28
    %s105 = sor.u32 %s103, %s104
    %p106 = scmp.eq.s32.totalorder %s105, 0
    %s108 = sadd.s32 %s107, 1
    %s109 = scalar_select %p106, %s107, %s108
    %p112 = pneg %p106
    %p113 = scmp.eq.s32.totalorder %s13, 1
    %p114 = por %p112, %p113
    %p115 = scmp.ne.s32.totalorder %s107, %s110
    %p116 = scmp.eq.s32.totalorder %s13, 0
    %p117 = por %p115, %p116
    %p118 = scmp.ne.s32.totalorder %s107, %s110
    %p119 = scmp.eq.s32.totalorder %s18, 1
    %p120 = por %p118, %p119
    %p121 = scmp.ne.s32.totalorder %s110, %s111
    %p122 = scmp.eq.s32.totalorder %s18, 0
    %p123 = por %p121, %p122
    %p124 = scmp.ne.s32.totalorder %s110, %s111
    %p125 = scmp.eq.s32.totalorder %s19, 1
    %p126 = por %p124, %p125
    %p128 = scmp.ne.s32.totalorder %s111, %s127
    %p129 = scmp.eq.s32.totalorder %s19, 0
    %p130 = por %p128, %p129
    %s131 = ssub.s32 %s20, %s32
    %s132 = ssub.s32 %s21, %s28
    %s133 = sor.u32 %s131, %s132
    %p134 = scmp.eq.s32.totalorder %s133, 0
    %s136 = sadd.s32 %s135, 1
    %s137 = scalar_select %p134, %s135, %s136
    %p140 = pneg %p134
    %p141 = scmp.eq.s32.totalorder %s13, 1
    %p142 = por %p140, %p141
    %p143 = scmp.ne.s32.totalorder %s135, %s138
    %p144 = scmp.eq.s32.totalorder %s13, 0
    %p145 = por %p143, %p144
    %p146 = scmp.ne.s32.totalorder %s135, %s138
    %p147 = scmp.eq.s32.totalorder %s18, 1
    %p148 = por %p146, %p147
    %p149 = scmp.ne.s32.totalorder %s138, %s139
    %p150 = scmp.eq.s32.totalorder %s18, 0
    %p151 = por %p149, %p150
    %p152 = scmp.ne.s32.totalorder %s138, %s139
    %p153 = scmp.eq.s32.totalorder %s19, 1
    %p154 = por %p152, %p153
    %p156 = scmp.ne.s32.totalorder %s139, %s155
    %p157 = scmp.eq.s32.totalorder %s19, 0
    %p158 = por %p156, %p157
    %s159 = ssub.s32 %s20, %s32
    %s160 = ssub.s32 %s21, %s28
    %s161 = sor.u32 %s159, %s160
    %p162 = scmp.eq.s32.totalorder %s161, 0
    %s164 = sadd.s32 %s163, 1
    %s165 = scalar_select %p162, %s163, %s164
    %p168 = pneg %p162
    %p169 = scmp.eq.s32.totalorder %s13, 1
    %p170 = por %p168, %p169
    %p171 = scmp.ne.s32.totalorder %s163, %s166
    %p172 = scmp.eq.s32.totalorder %s13, 0
    %p173 = por %p171, %p172
    %p174 = scmp.ne.s32.totalorder %s163, %s166
    %p175 = scmp.eq.s32.totalorder %s18, 1
    %p176 = por %p174, %p175
    %p177 = scmp.ne.s32.totalorder %s166, %s167
    %p178 = scmp.eq.s32.totalorder %s18, 0
    %p179 = por %p177, %p178
    %p180 = scmp.ne.s32.totalorder %s166, %s167
    %p181 = scmp.eq.s32.totalorder %s19, 1
    %p182 = por %p180, %p181
    %p184 = scmp.ne.s32.totalorder %s167, %s183
    %p185 = scmp.eq.s32.totalorder %s19, 0
    %p186 = por %p184, %p185
    %s187 = ssub.s32 %s20, %s32
    %s188 = ssub.s32 %s21, %s28
    %s189 = sor.u32 %s187, %s188
    %p190 = scmp.eq.s32.totalorder %s189, 0
    %s192 = sadd.s32 %s191, 1
    %s193 = scalar_select %p190, %s191, %s192
    %p196 = pneg %p190
    %p197 = scmp.eq.s32.totalorder %s13, 1
    %p198 = por %p196, %p197
    %p199 = scmp.ne.s32.totalorder %s191, %s194
    %p200 = scmp.eq.s32.totalorder %s13, 0
    %p201 = por %p199, %p200
    %p202 = scmp.ne.s32.totalorder %s191, %s194
    %p203 = scmp.eq.s32.totalorder %s18, 1
    %p204 = por %p202, %p203
    %p205 = scmp.ne.s32.totalorder %s194, %s195
    %p206 = scmp.eq.s32.totalorder %s18, 0
    %p207 = por %p205, %p206
    %p208 = scmp.ne.s32.totalorder %s194, %s195
    %p209 = scmp.eq.s32.totalorder %s19, 1
    %p210 = por %p208, %p209
    %p212 = scmp.ne.s32.totalorder %s195, %s211
    %p213 = scmp.eq.s32.totalorder %s19, 0
    %p214 = por %p212, %p213
    %p215 = scmp.le.s32.totalorder 1, %s13
    %p216 = scmp.lt.s32.totalorder %s13, 3
    %p217 = pnand %p215, %p216
    %p218 = pneg %p217
    // Predicated region
    $region9: #{basic_block_forward.3} parent=5 // pred_check
      _
    $region10: #{basic_block_forward.3} parent=5 // pred_check_branch
      %220 = sbr.rel (%p217) target = $region12
    $region11: #{basic_block_forward.3} parent=5 // pred_region
      %s221 = ssub.s32 %s13, 1
      // Predicated region
      $region13: #{basic_block_forward.3} parent=11 // pred_check
        %p222 = pneg %p74
      $region14: #{basic_block_forward.3} parent=11 // pred_check_branch
        %224 = sbr.rel (%p222) target = $region16
      $region15: #{basic_block_forward.3} parent=11 // pred_region
        _
      $region16: #{basic_block_forward.3} parent=11 // pred_fallthru
        _
      // Predicated region
      $region17: #{basic_block_forward.3} parent=11 // pred_check
        %p225 = pneg %p95
      $region18: #{basic_block_forward.3} parent=11 // pred_check_branch
        %227 = sbr.rel (%p225) target = $region20
      $region19: #{basic_block_forward.3} parent=11 // pred_region
        _
      $region20: #{basic_block_forward.3} parent=11 // pred_fallthru
        _
    $region12: #{basic_block_forward.3} parent=5 // pred_fallthru
      _
    %p228 = scmp.lt.s32.totalorder %s13, 2
    // Predicated region
    $region21: #{basic_block_forward.3} parent=5 // pred_check
      %p229 = pneg %p228
    $region22: #{basic_block_forward.3} parent=5 // pred_check_branch
      %231 = sbr.rel (%p229) target = $region24
    $region23: #{basic_block_forward.3} parent=5 // pred_region
      // Predicated region
      $region25: #{basic_block_forward.3} parent=23 // pred_check
        %p232 = pneg %p47
      $region26: #{basic_block_forward.3} parent=23 // pred_check_branch
        %234 = sbr.rel (%p232) target = $region28
      $region27: #{basic_block_forward.3} parent=23 // pred_region
        %p235 = scmp.lt.s32.totalorder %s20, 1
        %s236 = scalar_select %p235, %s20, 1
        %p237 = scmp.lt.s32.totalorder %s21, 0
        %s238 = scalar_select %p237, %s21, 0
        %s239 = smul.addr %s238, 72
        %s240 = smul.addr %s236, 72
        %s241 = sadd.s32 %s239, %s240
        %s242 = smul.addr %s241, 4
        %s243 = scalar_lea.vmem %s0, %s242
      $region28: #{basic_block_forward.3} parent=23 // pred_fallthru
        _
    $region24: #{basic_block_forward.3} parent=5 // pred_fallthru
      _
    %p244 = scmp.le.s32.totalorder 1, %s13
    %p245 = scmp.lt.s32.totalorder %s13, 3
    %p246 = pnand %p244, %p245
    %p247 = pneg %p246
    // Predicated region
    $region29: #{basic_block_forward.3} parent=5 // pred_check
      _
    $region30: #{basic_block_forward.3} parent=5 // pred_check_branch
      %249 = sbr.rel (%p246) target = $region32
    $region31: #{basic_block_forward.3} parent=5 // pred_region
      %s250 = ssub.s32 %s13, 1
      %p251 = scmp.lt.s32.totalorder %s22, 1
      %s252 = scalar_select %p251, %s22, 1
      %p253 = scmp.lt.s32.totalorder %s23, 0
      %s254 = scalar_select %p253, %s23, 0
      %s255 = smul.addr %s254, 72
      %s256 = smul.addr %s252, 72
      %s257 = sadd.s32 %s255, %s256
      %s258 = smul.addr %s257, 4
      %s259 = scalar_lea.vmem %s0, %s258
      %p260 = pneg %p53
      %p261 = pneg %p50
      %p262 = pneg %p74
      %p263 = pneg %p71
      %p264 = pneg %p95
      %p265 = pneg %p92
      %p266 = pneg %p123
      %p267 = pneg %p120
      %s268 = smul.u32 8, %s23
      %p269 = scmp.lt.s32.totalorder %s22, 1
      %s270 = scalar_select %p269, %s22, 1
      %p271 = scmp.lt.s32.totalorder %s268, 7
      %s272 = scalar_select %p271, %s268, 7
      %s273 = smul.addr %s270, 8
      %s274 = sadd.s32 %s272, %s273
      %s275 = smul.addr %s274, 4
      %s276 = scalar_lea.vmem %s3, %s275
      %p277 = pneg %p151
      %p278 = pneg %p148
      %p279 = scmp.lt.s32.totalorder %s22, 1
      %s280 = scalar_select %p279, %s22, 1
      %p281 = scmp.lt.s32.totalorder %s23, 0
      %s282 = scalar_select %p281, %s23, 0
      %s283 = sadd.s32 %s282, %s280
      %s284 = smul.addr %s283, 8
      %s285 = scalar_lea.vmem %s4, %s284
      %p286 = pneg %p179
      %p287 = pneg %p176
      %s288 = smul.u32 8, %s23
      %p289 = scmp.lt.s32.totalorder %s22, 1
      %s290 = scalar_select %p289, %s22, 1
      %p291 = scmp.lt.s32.totalorder %s288, 7
      %s292 = scalar_select %p291, %s288, 7
      %s293 = smul.addr %s290, 8
      %s294 = sadd.s32 %s292, %s293
      %s295 = smul.addr %s294, 4
      %s296 = scalar_lea.vmem %s5, %s295
      %p297 = pneg %p207
      %p298 = pneg %p204
      %p299 = scmp.lt.s32.totalorder %s22, 1
      %s300 = scalar_select %p299, %s22, 1
      %p301 = scmp.lt.s32.totalorder %s23, 0
      %s302 = scalar_select %p301, %s23, 0
      %s303 = sadd.s32 %s302, %s300
      %s304 = smul.addr %s303, 8
      %s305 = scalar_lea.vmem %s6, %s304
      %p306 = scmp.lt.s32.totalorder %s22, 1
      %s307 = scalar_select %p306, %s22, 1
      %p308 = scmp.lt.s32.totalorder %s23, 0
      %s309 = scalar_select %p308, %s23, 0
      %s310 = smul.addr %s309, 72
      %s311 = smul.addr %s307, 72
      %s312 = sadd.s32 %s310, %s311
      %s313 = smul.addr %s312, 4
      %s314 = scalar_lea.vmem %s0, %s313
      %s315 = smul.u32 8, %s23
      %p316 = scmp.lt.s32.totalorder %s22, 1
      %s317 = scalar_select %p316, %s22, 1
      %p318 = scmp.lt.s32.totalorder %s315, 7
      %s319 = scalar_select %p318, %s315, 7
      %s320 = smul.addr %s317, 8
      %s321 = sadd.s32 %s319, %s320
      %s322 = smul.addr %s321, 4
      %s323 = scalar_lea.vmem %s3, %s322
      %s324 = smul.u32 8, %s23
      %p325 = scmp.lt.s32.totalorder %s22, 1
      %s326 = scalar_select %p325, %s22, 1
      %p327 = scmp.lt.s32.totalorder %s23, 0
      %s328 = scalar_select %p327, %s23, 0
      %s329 = sadd.s32 %s328, %s326
      %s330 = smul.addr %s329, 8
      %s331 = scalar_lea.vmem %s4, %s330
      %s332 = smul.u32 8, %s23
      %p333 = scmp.lt.s32.totalorder %s22, 1
      %s334 = scalar_select %p333, %s22, 1
      %p335 = scmp.lt.s32.totalorder %s332, 7
      %s336 = scalar_select %p335, %s332, 7
      %s337 = smul.addr %s334, 8
      %s338 = sadd.s32 %s336, %s337
      %s339 = smul.addr %s338, 4
      %s340 = scalar_lea.vmem %s5, %s339
      %s341 = smul.u32 8, %s23
      %p342 = scmp.lt.s32.totalorder %s22, 1
      %s343 = scalar_select %p342, %s22, 1
      %p344 = scmp.lt.s32.totalorder %s23, 0
      %s345 = scalar_select %p344, %s23, 0
      %s346 = sadd.s32 %s345, %s343
      %s347 = smul.addr %s346, 8
      %s348 = scalar_lea.vmem %s6, %s347
      %v350 = vld [vmem:[%s314] sm:$0xff]
      %v351 = vld [vmem:[%s314 + $0x8] sm:$0xff]
      %v352 = vld [vmem:[%s314 + $0x10] sm:$0x11]
      %v353 = vld [vmem:[%s314 + $0x18] sm:$0x11]
      %v354 = vld [vmem:[%s314 + $0x20] sm:$0xff]
      %v355 = vld [vmem:[%s314 + $0x28] sm:$0xff]
      %v356 = vld [vmem:[%s314 + $0x30] sm:$0x11]
      %v357 = vld [vmem:[%s314 + $0x38] sm:$0x11]
      %v358 = vld [vmem:[%s314 + $0x40] sm:$0xff]
      %v359 = vld [vmem:[%s314 + $0x48] sm:$0xff]
      %v360 = vld [vmem:[%s314 + $0x50] sm:$0x11]
      %v361 = vld [vmem:[%s314 + $0x58] sm:$0x11]
      %v362 = vld [vmem:[%s314 + $0x60] sm:$0xff]
      %v363 = vld [vmem:[%s314 + $0x68] sm:$0xff]
      %v364 = vld [vmem:[%s314 + $0x70] sm:$0x11]
      %v365 = vld [vmem:[%s314 + $0x78] sm:$0x11]
      %v366 = vld [vmem:[%s314 + $0x80] sm:$0xff]
      %v367 = vld [vmem:[%s314 + $0x88] sm:$0xff]
      %v368 = vld [vmem:[%s314 + $0x90] sm:$0x11]
      %v369 = vld [vmem:[%s314 + $0x98] sm:$0x11]
      %v370 = vld [vmem:[%s314 + $0xa0] sm:$0xff]
      %v371 = vld [vmem:[%s314 + $0xa8] sm:$0xff]
      %v372 = vld [vmem:[%s314 + $0xb0] sm:$0x11]
      %v373 = vld [vmem:[%s314 + $0xb8] sm:$0x11]
      %v374 = vld [vmem:[%s314 + $0xc0] sm:$0xff]
      %v375 = vld [vmem:[%s314 + $0xc8] sm:$0xff]
      %v376 = vld [vmem:[%s314 + $0xd0] sm:$0x11]
      %v377 = vld [vmem:[%s314 + $0xd8] sm:$0x11]
      %v378 = vld [vmem:[%s314 + $0xe0] sm:$0xff]
      %v379 = vld [vmem:[%s314 + $0xe8] sm:$0xff]
      %v380 = vld [vmem:[%s314 + $0xf0] sm:$0x11]
      %v381 = vld [vmem:[%s314 + $0xf8] sm:$0x11]
      %v382 = vld [vmem:[%s314 + $0x100] sm:$0xff]
      %v383 = vld [vmem:[%s314 + $0x110] sm:$0x11]
      %v384 = vld [vmem:[%s1] sm:$0xf]
      %v385 = vld [vmem:[%s1 + $0x4] sm:$0xf]
      %v386 = vld [vmem:[%s1 + $0x8] sm:$0xf]
      %v387 = vld [vmem:[%s1 + $0xc] sm:$0xf]
      %v388 = vld [vmem:[%s1 + $0x10] sm:$0xf]
      %v389 = vld [vmem:[%s1 + $0x14] sm:$0xf]
      %v390 = vld [vmem:[%s1 + $0x18] sm:$0xf]
      %v391 = vld [vmem:[%s1 + $0x1c] sm:$0xf]
      %v392 = vld [vmem:[%s1 + $0x20] sm:$0xf]
      %v393 = vld [vmem:[%s1 + $0x24] sm:$0xf]
      %v394 = vld [vmem:[%s1 + $0x28] sm:$0xf]
      %v395 = vld [vmem:[%s1 + $0x2c] sm:$0xf]
      %v396 = vld [vmem:[%s1 + $0x30] sm:$0xf]
      %v397 = vld [vmem:[%s1 + $0x34] sm:$0xf]
      %v398 = vld [vmem:[%s1 + $0x38] sm:$0xf]
      %v399 = vld [vmem:[%s1 + $0x3c] sm:$0xf]
      %v408 = vrot.slane %v350, 4
      %v409 = vrot.slane %v354, 4
      %v410 = vrot.slane %v358, 4
      %v411 = vrot.slane %v362, 4
      %v412 = vrot.slane %v366, 4
      %v413 = vrot.slane %v370, 4
      %v414 = vrot.slane %v374, 4
      %v415 = vrot.slane %v378, 4
      %s416 = scalar_lea.vmem %s1, 64
      %v417 = vld [vmem:[%s416] sm:$0xf]
      %v418 = vld [vmem:[%s416 + $0x4] sm:$0xf]
      %v419 = vld [vmem:[%s416 + $0x8] sm:$0xf]
      %v420 = vld [vmem:[%s416 + $0xc] sm:$0xf]
      %v421 = vld [vmem:[%s416 + $0x10] sm:$0xf]
      %v422 = vld [vmem:[%s416 + $0x14] sm:$0xf]
      %v423 = vld [vmem:[%s416 + $0x18] sm:$0xf]
      %v424 = vld [vmem:[%s416 + $0x1c] sm:$0xf]
      %v425 = vld [vmem:[%s416 + $0x20] sm:$0xf]
      %v426 = vld [vmem:[%s416 + $0x24] sm:$0xf]
      %v427 = vld [vmem:[%s416 + $0x28] sm:$0xf]
      %v428 = vld [vmem:[%s416 + $0x2c] sm:$0xf]
      %v429 = vld [vmem:[%s416 + $0x30] sm:$0xf]
      %v430 = vld [vmem:[%s416 + $0x34] sm:$0xf]
      %v431 = vld [vmem:[%s416 + $0x38] sm:$0xf]
      %v432 = vld [vmem:[%s416 + $0x3c] sm:$0xf]
      %v433 = vunpack.c.l.b16 %v408
      %v434 = vunpack.c.l.b16 %v409
      %v435 = vunpack.c.l.b16 %v410
      %v436 = vunpack.c.l.b16 %v411
      %v437 = vunpack.c.l.b16 %v412
      %v438 = vunpack.c.l.b16 %v413
      %v439 = vunpack.c.l.b16 %v414
      %v440 = vunpack.c.l.b16 %v415
      %v441 = vpack.c.b16 %v434, %v433
      %v442 = vpack.c.b16 %v436, %v435
      %v443 = vpack.c.b16 %v438, %v437
      %v444 = vpack.c.b16 %v440, %v439
      %v465 = vunpack.c.l.b16 %v417
      %v466 = vunpack.c.l.b16 %v418
      %v467 = vunpack.c.l.b16 %v419
      %v468 = vunpack.c.l.b16 %v420
      %v469 = vunpack.c.l.b16 %v421
      %v470 = vunpack.c.l.b16 %v422
      %v471 = vunpack.c.l.b16 %v423
      %v472 = vunpack.c.l.b16 %v424
      %v473 = vunpack.c.l.b16 %v425
      %v474 = vunpack.c.l.b16 %v426
      %v475 = vunpack.c.l.b16 %v427
      %v476 = vunpack.c.l.b16 %v428
      %v477 = vunpack.c.l.b16 %v429
      %v478 = vunpack.c.l.b16 %v430
      %v479 = vunpack.c.l.b16 %v431
      %v480 = vunpack.c.l.b16 %v432
      %v481 = vpack.c.b16 %v466, %v465
      %v482 = vpack.c.b16 %v468, %v467
      %v483 = vpack.c.b16 %v470, %v469
      %v484 = vpack.c.b16 %v472, %v471
      %v485 = vpack.c.b16 %v474, %v473
      %v486 = vpack.c.b16 %v476, %v475
      %v487 = vpack.c.b16 %v478, %v477
      %v488 = vpack.c.b16 %v480, %v479
      %497 = vmatprep.subr.bf16.mxu0 0
      %498 = vmatpush1.bf16.msra.mxu0 %v488
      %499 = vmatprep.subr.bf16.mxu0 0
      %500 = vmatpush1.bf16.msra.mxu0 %v487
      %501 = vmatprep.subr.bf16.mxu0 0
      %502 = vmatpush1.bf16.msra.mxu0 %v486
      %503 = vmatprep.subr.bf16.mxu0 0
      %504 = vmatpush1.bf16.msra.mxu0 %v485
      %505 = vmatprep.subr.bf16.mxu0 0
      %506 = vmatpush1.bf16.msra.mxu0 %v484
      %507 = vmatprep.subr.bf16.mxu0 0
      %508 = vmatpush1.bf16.msra.mxu0 %v483
      %509 = vmatprep.subr.bf16.mxu0 0
      %510 = vmatpush1.bf16.msra.mxu0 %v482
      %511 = vmatprep.subr.bf16.mxu0 0
      %512 = vmatpush1.bf16.msra.mxu0 %v481
      %513 = vmatprep.subr.bf16.mxu0 0
      %514 = vmatpush2.bf16.msra.mxu0 0
      %515 = vmatprep.subr.bf16.mxu0 0
      %516 = vmatpush2.bf16.msra.mxu0 0
      %517 = vmatprep.subr.bf16.mxu0 0
      %518 = vmatpush2.bf16.msra.mxu0 0
      %519 = vmatprep.subr.bf16.mxu0 0
      %520 = vmatpush2.bf16.msra.mxu0 0
      %521 = vmatprep.subr.bf16.mxu0 0
      %522 = vmatpush2.bf16.msra.mxu0 0
      %523 = vmatprep.subr.bf16.mxu0 0
      %524 = vmatpush2.bf16.msra.mxu0 0
      %525 = vmatprep.subr.bf16.mxu0 0
      %526 = vmatpush2.bf16.msra.mxu0 0
      %527 = vmatprep.subr.bf16.mxu0 0
      %528 = vmatpush2.bf16.msra.mxu0 0
      %529 = vmatprep.mubr.bf16.mxu0 0
      %530 = vmatmul.mubr.bf16.gmra.mxu0 %v441
      %v531 = vpop.f32.mrf.mxu0
      %v532 = vadd.f32 0.0, %v531
      %v533 = vpop.f32.mrf.mxu0
      %v534 = vpop.f32.mrf.mxu0
      %v535 = vadd.f32 0.0, %v534
      %v536 = vpop.f32.mrf.mxu0
      %537 = vmatprep.mubr.bf16.mxu0 0
      %538 = vmatmul.mubr.bf16.gmra.mxu0 %v442
      %v539 = vpop.f32.mrf.mxu0
      %v540 = vadd.f32 0.0, %v539
      %v541 = vpop.f32.mrf.mxu0
      %v542 = vpop.f32.mrf.mxu0
      %v543 = vadd.f32 0.0, %v542
      %v544 = vpop.f32.mrf.mxu0
      %545 = vmatprep.mubr.bf16.mxu0 0
      %546 = vmatmul.mubr.bf16.gmra.mxu0 %v443
      %v547 = vpop.f32.mrf.mxu0
      %v548 = vadd.f32 0.0, %v547
      %v549 = vpop.f32.mrf.mxu0
      %v550 = vpop.f32.mrf.mxu0
      %v551 = vadd.f32 0.0, %v550
      %v552 = vpop.f32.mrf.mxu0
      %553 = vmatprep.mubr.bf16.mxu0 0
      %554 = vmatmul.mubr.bf16.gmra.mxu0 %v444
      %v555 = vpop.f32.mrf.mxu0
      %v556 = vadd.f32 0.0, %v555
      %v557 = vpop.f32.mrf.mxu0
      %v558 = vpop.f32.mrf.mxu0
      %v559 = vadd.f32 0.0, %v558
      %v560 = vpop.f32.mrf.mxu0
      %561 = vdwg.mxu0
      %v562 = vunpack.c.l.b16 %v350
      %v563 = vunpack.c.l.b16 %v354
      %v564 = vunpack.c.l.b16 %v358
      %v565 = vunpack.c.l.b16 %v362
      %v566 = vunpack.c.l.b16 %v366
      %v567 = vunpack.c.l.b16 %v370
      %v568 = vunpack.c.l.b16 %v374
      %v569 = vunpack.c.l.b16 %v378
      %v570 = vpack.c.b16 %v563, %v562
      %v571 = vpack.c.b16 %v565, %v564
      %v572 = vpack.c.b16 %v567, %v566
      %v573 = vpack.c.b16 %v569, %v568
      %v594 = vunpack.c.l.b16 %v384
      %v595 = vunpack.c.l.b16 %v385
      %v596 = vunpack.c.l.b16 %v386
      %v597 = vunpack.c.l.b16 %v387
      %v598 = vunpack.c.l.b16 %v388
      %v599 = vunpack.c.l.b16 %v389
      %v600 = vunpack.c.l.b16 %v390
      %v601 = vunpack.c.l.b16 %v391
      %v602 = vunpack.c.l.b16 %v392
      %v603 = vunpack.c.l.b16 %v393
      %v604 = vunpack.c.l.b16 %v394
      %v605 = vunpack.c.l.b16 %v395
      %v606 = vunpack.c.l.b16 %v396
      %v607 = vunpack.c.l.b16 %v397
      %v608 = vunpack.c.l.b16 %v398
      %v609 = vunpack.c.l.b16 %v399
      %v610 = vpack.c.b16 %v595, %v594
      %v611 = vpack.c.b16 %v597, %v596
      %v612 = vpack.c.b16 %v599, %v598
      %v613 = vpack.c.b16 %v601, %v600
      %v614 = vpack.c.b16 %v603, %v602
      %v615 = vpack.c.b16 %v605, %v604
      %v616 = vpack.c.b16 %v607, %v606
      %v617 = vpack.c.b16 %v609, %v608
      %626 = vmatprep.subr.bf16.mxu0 0
      %627 = vmatpush1.bf16.msra.mxu0 %v617
      %628 = vmatprep.subr.bf16.mxu0 0
      %629 = vmatpush1.bf16.msra.mxu0 %v616
      %630 = vmatprep.subr.bf16.mxu0 0
      %631 = vmatpush1.bf16.msra.mxu0 %v615
      %632 = vmatprep.subr.bf16.mxu0 0
      %633 = vmatpush1.bf16.msra.mxu0 %v614
      %634 = vmatprep.subr.bf16.mxu0 0
      %635 = vmatpush1.bf16.msra.mxu0 %v613
      %636 = vmatprep.subr.bf16.mxu0 0
      %637 = vmatpush1.bf16.msra.mxu0 %v612
      %638 = vmatprep.subr.bf16.mxu0 0
      %639 = vmatpush1.bf16.msra.mxu0 %v611
      %640 = vmatprep.subr.bf16.mxu0 0
      %641 = vmatpush1.bf16.msra.mxu0 %v610
      %642 = vmatprep.subr.bf16.mxu0 0
      %643 = vmatpush2.bf16.msra.mxu0 0
      %644 = vmatprep.subr.bf16.mxu0 0
      %645 = vmatpush2.bf16.msra.mxu0 0
      %646 = vmatprep.subr.bf16.mxu0 0
      %647 = vmatpush2.bf16.msra.mxu0 0
      %648 = vmatprep.subr.bf16.mxu0 0
      %649 = vmatpush2.bf16.msra.mxu0 0
      %650 = vmatprep.subr.bf16.mxu0 0
      %651 = vmatpush2.bf16.msra.mxu0 0
      %652 = vmatprep.subr.bf16.mxu0 0
      %653 = vmatpush2.bf16.msra.mxu0 0
      %654 = vmatprep.subr.bf16.mxu0 0
      %655 = vmatpush2.bf16.msra.mxu0 0
      %656 = vmatprep.subr.bf16.mxu0 0
      %657 = vmatpush2.bf16.msra.mxu0 0
      %658 = vmatprep.mubr.bf16.mxu0 0
      %659 = vmatmul.mubr.bf16.gmra.mxu0 %v570
      %v660 = vpop.f32.mrf.mxu0
      %v661 = vadd.f32 %v532, %v660
      %v662 = vpop.f32.mrf.mxu0
      %v663 = vpop.f32.mrf.mxu0
      %v664 = vadd.f32 %v535, %v663
      %v665 = vpop.f32.mrf.mxu0
      %666 = vmatprep.mubr.bf16.mxu0 0
      %667 = vmatmul.mubr.bf16.gmra.mxu0 %v571
      %v668 = vpop.f32.mrf.mxu0
      %v669 = vadd.f32 %v540, %v668
      %v670 = vpop.f32.mrf.mxu0
      %v671 = vpop.f32.mrf.mxu0
      %v672 = vadd.f32 %v543, %v671
      %v673 = vpop.f32.mrf.mxu0
      %674 = vmatprep.mubr.bf16.mxu0 0
      %675 = vmatmul.mubr.bf16.gmra.mxu0 %v572
      %v676 = vpop.f32.mrf.mxu0
      %v677 = vadd.f32 %v548, %v676
      %v678 = vpop.f32.mrf.mxu0
      %v679 = vpop.f32.mrf.mxu0
      %v680 = vadd.f32 %v551, %v679
      %v681 = vpop.f32.mrf.mxu0
      %682 = vmatprep.mubr.bf16.mxu0 0
      %683 = vmatmul.mubr.bf16.gmra.mxu0 %v573
      %v684 = vpop.f32.mrf.mxu0
      %v685 = vadd.f32 %v556, %v684
      %v686 = vpop.f32.mrf.mxu0
      %v687 = vpop.f32.mrf.mxu0
      %v688 = vadd.f32 %v559, %v687
      %v689 = vpop.f32.mrf.mxu0
      %690 = vdwg.mxu0
      %s691 = scalar_lea.vmem %s1, 192
      %v692 = vld [vmem:[%s691] sm:$0xf]
      %v693 = vld [vmem:[%s691 + $0x4] sm:$0xf]
      %v694 = vld [vmem:[%s691 + $0x8] sm:$0xf]
      %v695 = vld [vmem:[%s691 + $0xc] sm:$0xf]
      %v696 = vld [vmem:[%s691 + $0x10] sm:$0xf]
      %v697 = vld [vmem:[%s691 + $0x14] sm:$0xf]
      %v698 = vld [vmem:[%s691 + $0x18] sm:$0xf]
      %v699 = vld [vmem:[%s691 + $0x1c] sm:$0xf]
      %v700 = vld [vmem:[%s691 + $0x20] sm:$0xf]
      %v701 = vld [vmem:[%s691 + $0x24] sm:$0xf]
      %v702 = vld [vmem:[%s691 + $0x28] sm:$0xf]
      %v703 = vld [vmem:[%s691 + $0x2c] sm:$0xf]
      %v704 = vld [vmem:[%s691 + $0x30] sm:$0xf]
      %v705 = vld [vmem:[%s691 + $0x34] sm:$0xf]
      %v706 = vld [vmem:[%s691 + $0x38] sm:$0xf]
      %v707 = vld [vmem:[%s691 + $0x3c] sm:$0xf]
      %v716 = vunpack.c.l.b16 %v351
      %v717 = vunpack.c.l.b16 %v355
      %v718 = vunpack.c.l.b16 %v359
      %v719 = vunpack.c.l.b16 %v363
      %v720 = vunpack.c.l.b16 %v367
      %v721 = vunpack.c.l.b16 %v371
      %v722 = vunpack.c.l.b16 %v375
      %v723 = vunpack.c.l.b16 %v379
      %v724 = vpack.c.b16 %v717, %v716
      %v725 = vpack.c.b16 %v719, %v718
      %v726 = vpack.c.b16 %v721, %v720
      %v727 = vpack.c.b16 %v723, %v722
      %v748 = vunpack.c.l.b16 %v692
      %v749 = vunpack.c.l.b16 %v693
      %v750 = vunpack.c.l.b16 %v694
      %v751 = vunpack.c.l.b16 %v695
      %v752 = vunpack.c.l.b16 %v696
      %v753 = vunpack.c.l.b16 %v697
      %v754 = vunpack.c.l.b16 %v698
      %v755 = vunpack.c.l.b16 %v699
      %v756 = vunpack.c.l.b16 %v700
      %v757 = vunpack.c.l.b16 %v701
      %v758 = vunpack.c.l.b16 %v702
      %v759 = vunpack.c.l.b16 %v703
      %v760 = vunpack.c.l.b16 %v704
      %v761 = vunpack.c.l.b16 %v705
      %v762 = vunpack.c.l.b16 %v706
      %v763 = vunpack.c.l.b16 %v707
      %v764 = vpack.c.b16 %v749, %v748
      %v765 = vpack.c.b16 %v751, %v750
      %v766 = vpack.c.b16 %v753, %v752
      %v767 = vpack.c.b16 %v755, %v754
      %v768 = vpack.c.b16 %v757, %v756
      %v769 = vpack.c.b16 %v759, %v758
      %v770 = vpack.c.b16 %v761, %v760
      %v771 = vpack.c.b16 %v763, %v762
      %780 = vmatprep.subr.bf16.mxu0 0
      %781 = vmatpush1.bf16.msra.mxu0 %v771
      %782 = vmatprep.subr.bf16.mxu0 0
      %783 = vmatpush1.bf16.msra.mxu0 %v770
      %784 = vmatprep.subr.bf16.mxu0 0
      %785 = vmatpush1.bf16.msra.mxu0 %v769
      %786 = vmatprep.subr.bf16.mxu0 0
      %787 = vmatpush1.bf16.msra.mxu0 %v768
      %788 = vmatprep.subr.bf16.mxu0 0
      %789 = vmatpush1.bf16.msra.mxu0 %v767
      %790 = vmatprep.subr.bf16.mxu0 0
      %791 = vmatpush1.bf16.msra.mxu0 %v766
      %792 = vmatprep.subr.bf16.mxu0 0
      %793 = vmatpush1.bf16.msra.mxu0 %v765
      %794 = vmatprep.subr.bf16.mxu0 0
      %795 = vmatpush1.bf16.msra.mxu0 %v764
      %796 = vmatprep.subr.bf16.mxu0 0
      %797 = vmatpush2.bf16.msra.mxu0 0
      %798 = vmatprep.subr.bf16.mxu0 0
      %799 = vmatpush2.bf16.msra.mxu0 0
      %800 = vmatprep.subr.bf16.mxu0 0
      %801 = vmatpush2.bf16.msra.mxu0 0
      %802 = vmatprep.subr.bf16.mxu0 0
      %803 = vmatpush2.bf16.msra.mxu0 0
      %804 = vmatprep.subr.bf16.mxu0 0
      %805 = vmatpush2.bf16.msra.mxu0 0
      %806 = vmatprep.subr.bf16.mxu0 0
      %807 = vmatpush2.bf16.msra.mxu0 0
      %808 = vmatprep.subr.bf16.mxu0 0
      %809 = vmatpush2.bf16.msra.mxu0 0
      %810 = vmatprep.subr.bf16.mxu0 0
      %811 = vmatpush2.bf16.msra.mxu0 0
      %812 = vmatprep.mubr.bf16.mxu0 0
      %813 = vmatmul.mubr.bf16.gmra.mxu0 %v724
      %v814 = vpop.f32.mrf.mxu0
      %v815 = vadd.f32 0.0, %v814
      %v816 = vpop.f32.mrf.mxu0
      %v817 = vpop.f32.mrf.mxu0
      %v818 = vadd.f32 0.0, %v817
      %v819 = vpop.f32.mrf.mxu0
      %820 = vmatprep.mubr.bf16.mxu0 0
      %821 = vmatmul.mubr.bf16.gmra.mxu0 %v725
      %v822 = vpop.f32.mrf.mxu0
      %v823 = vadd.f32 0.0, %v822
      %v824 = vpop.f32.mrf.mxu0
      %v825 = vpop.f32.mrf.mxu0
      %v826 = vadd.f32 0.0, %v825
      %v827 = vpop.f32.mrf.mxu0
      %828 = vmatprep.mubr.bf16.mxu0 0
      %829 = vmatmul.mubr.bf16.gmra.mxu0 %v726
      %v830 = vpop.f32.mrf.mxu0
      %v831 = vadd.f32 0.0, %v830
      %v832 = vpop.f32.mrf.mxu0
      %v833 = vpop.f32.mrf.mxu0
      %v834 = vadd.f32 0.0, %v833
      %v835 = vpop.f32.mrf.mxu0
      %836 = vmatprep.mubr.bf16.mxu0 0
      %837 = vmatmul.mubr.bf16.gmra.mxu0 %v727
      %v838 = vpop.f32.mrf.mxu0
      %v839 = vadd.f32 0.0, %v838
      %v840 = vpop.f32.mrf.mxu0
      %v841 = vpop.f32.mrf.mxu0
      %v842 = vadd.f32 0.0, %v841
      %v843 = vpop.f32.mrf.mxu0
      %844 = vdwg.mxu0
      %v845 = vadd.f32 %v661, %v815
      %v846 = vadd.f32 %v664, %v818
      %v847 = vadd.f32 %v669, %v823
      %v848 = vadd.f32 %v672, %v826
      %v849 = vadd.f32 %v677, %v831
      %v850 = vadd.f32 %v680, %v834
      %v851 = vadd.f32 %v685, %v839
      %v852 = vadd.f32 %v688, %v842
      %v853 = vrot.slane %v351, 4
      %v854 = vrot.slane %v355, 4
      %v855 = vrot.slane %v359, 4
      %v856 = vrot.slane %v363, 4
      %v857 = vrot.slane %v367, 4
      %v858 = vrot.slane %v371, 4
      %v859 = vrot.slane %v375, 4
      %v860 = vrot.slane %v379, 4
      %s861 = scalar_lea.vmem %s1, 256
      %v862 = vld [vmem:[%s861] sm:$0xf]
      %v863 = vld [vmem:[%s861 + $0x4] sm:$0xf]
      %v864 = vld [vmem:[%s861 + $0x8] sm:$0xf]
      %v865 = vld [vmem:[%s861 + $0xc] sm:$0xf]
      %v866 = vld [vmem:[%s861 + $0x10] sm:$0xf]
      %v867 = vld [vmem:[%s861 + $0x14] sm:$0xf]
      %v868 = vld [vmem:[%s861 + $0x18] sm:$0xf]
      %v869 = vld [vmem:[%s861 + $0x1c] sm:$0xf]
      %v870 = vld [vmem:[%s861 + $0x20] sm:$0xf]
      %v871 = vld [vmem:[%s861 + $0x24] sm:$0xf]
      %v872 = vld [vmem:[%s861 + $0x28] sm:$0xf]
      %v873 = vld [vmem:[%s861 + $0x2c] sm:$0xf]
      %v874 = vld [vmem:[%s861 + $0x30] sm:$0xf]
      %v875 = vld [vmem:[%s861 + $0x34] sm:$0xf]
      %v876 = vld [vmem:[%s861 + $0x38] sm:$0xf]
      %v877 = vld [vmem:[%s861 + $0x3c] sm:$0xf]
      %v878 = vunpack.c.l.b16 %v853
      %v879 = vunpack.c.l.b16 %v854
      %v880 = vunpack.c.l.b16 %v855
      %v881 = vunpack.c.l.b16 %v856
      %v882 = vunpack.c.l.b16 %v857
      %v883 = vunpack.c.l.b16 %v858
      %v884 = vunpack.c.l.b16 %v859
      %v885 = vunpack.c.l.b16 %v860
      %v886 = vpack.c.b16 %v879, %v878
      %v887 = vpack.c.b16 %v881, %v880
      %v888 = vpack.c.b16 %v883, %v882
      %v889 = vpack.c.b16 %v885, %v884
      %v910 = vunpack.c.l.b16 %v862
      %v911 = vunpack.c.l.b16 %v863
      %v912 = vunpack.c.l.b16 %v864
      %v913 = vunpack.c.l.b16 %v865
      %v914 = vunpack.c.l.b16 %v866
      %v915 = vunpack.c.l.b16 %v867
      %v916 = vunpack.c.l.b16 %v868
      %v917 = vunpack.c.l.b16 %v869
      %v918 = vunpack.c.l.b16 %v870
      %v919 = vunpack.c.l.b16 %v871
      %v920 = vunpack.c.l.b16 %v872
      %v921 = vunpack.c.l.b16 %v873
      %v922 = vunpack.c.l.b16 %v874
      %v923 = vunpack.c.l.b16 %v875
      %v924 = vunpack.c.l.b16 %v876
      %v925 = vunpack.c.l.b16 %v877
      %v926 = vpack.c.b16 %v911, %v910
      %v927 = vpack.c.b16 %v913, %v912
      %v928 = vpack.c.b16 %v915, %v914
      %v929 = vpack.c.b16 %v917, %v916
      %v930 = vpack.c.b16 %v919, %v918
      %v931 = vpack.c.b16 %v921, %v920
      %v932 = vpack.c.b16 %v923, %v922
      %v933 = vpack.c.b16 %v925, %v924
      %942 = vmatprep.subr.bf16.mxu0 0
      %943 = vmatpush1.bf16.msra.mxu0 %v933
      %944 = vmatprep.subr.bf16.mxu0 0
      %945 = vmatpush1.bf16.msra.mxu0 %v932
      %946 = vmatprep.subr.bf16.mxu0 0
      %947 = vmatpush1.bf16.msra.mxu0 %v931
      %948 = vmatprep.subr.bf16.mxu0 0
      %949 = vmatpush1.bf16.msra.mxu0 %v930
      %950 = vmatprep.subr.bf16.mxu0 0
      %951 = vmatpush1.bf16.msra.mxu0 %v929
      %952 = vmatprep.subr.bf16.mxu0 0
      %953 = vmatpush1.bf16.msra.mxu0 %v928
      %954 = vmatprep.subr.bf16.mxu0 0
      %955 = vmatpush1.bf16.msra.mxu0 %v927
      %956 = vmatprep.subr.bf16.mxu0 0
      %957 = vmatpush1.bf16.msra.mxu0 %v926
      %958 = vmatprep.subr.bf16.mxu0 0
      %959 = vmatpush2.bf16.msra.mxu0 0
      %960 = vmatprep.subr.bf16.mxu0 0
      %961 = vmatpush2.bf16.msra.mxu0 0
      %962 = vmatprep.subr.bf16.mxu0 0
      %963 = vmatpush2.bf16.msra.mxu0 0
      %964 = vmatprep.subr.bf16.mxu0 0
      %965 = vmatpush2.bf16.msra.mxu0 0
      %966 = vmatprep.subr.bf16.mxu0 0
      %967 = vmatpush2.bf16.msra.mxu0 0
      %968 = vmatprep.subr.bf16.mxu0 0
      %969 = vmatpush2.bf16.msra.mxu0 0
      %970 = vmatprep.subr.bf16.mxu0 0
      %971 = vmatpush2.bf16.msra.mxu0 0
      %972 = vmatprep.subr.bf16.mxu0 0
      %973 = vmatpush2.bf16.msra.mxu0 0
      %974 = vmatprep.mubr.bf16.mxu0 0
      %975 = vmatmul.mubr.bf16.gmra.mxu0 %v886
      %v976 = vpop.f32.mrf.mxu0
      %v977 = vadd.f32 0.0, %v976
      %v978 = vpop.f32.mrf.mxu0
      %v979 = vpop.f32.mrf.mxu0
      %v980 = vadd.f32 0.0, %v979
      %v981 = vpop.f32.mrf.mxu0
      %982 = vmatprep.mubr.bf16.mxu0 0
      %983 = vmatmul.mubr.bf16.gmra.mxu0 %v887
      %v984 = vpop.f32.mrf.mxu0
      %v985 = vadd.f32 0.0, %v984
      %v986 = vpop.f32.mrf.mxu0
      %v987 = vpop.f32.mrf.mxu0
      %v988 = vadd.f32 0.0, %v987
      %v989 = vpop.f32.mrf.mxu0
      %990 = vmatprep.mubr.bf16.mxu0 0
      %991 = vmatmul.mubr.bf16.gmra.mxu0 %v888
      %v992 = vpop.f32.mrf.mxu0
      %v993 = vadd.f32 0.0, %v992
      %v994 = vpop.f32.mrf.mxu0
      %v995 = vpop.f32.mrf.mxu0
      %v996 = vadd.f32 0.0, %v995
      %v997 = vpop.f32.mrf.mxu0
      %998 = vmatprep.mubr.bf16.mxu0 0
      %999 = vmatmul.mubr.bf16.gmra.mxu0 %v889
      %v1000 = vpop.f32.mrf.mxu0
      %v1001 = vadd.f32 0.0, %v1000
      %v1002 = vpop.f32.mrf.mxu0
      %v1003 = vpop.f32.mrf.mxu0
      %v1004 = vadd.f32 0.0, %v1003
      %v1005 = vpop.f32.mrf.mxu0
      %1006 = vdwg.mxu0
      %v1007 = vadd.f32 %v845, %v977
      %v1008 = vadd.f32 %v846, %v980
      %v1009 = vadd.f32 %v847, %v985
      %v1010 = vadd.f32 %v848, %v988
      %v1011 = vadd.f32 %v849, %v993
      %v1012 = vadd.f32 %v850, %v996
      %v1013 = vadd.f32 %v851, %v1001
      %v1014 = vadd.f32 %v852, %v1004
      %s1015 = scalar_lea.vmem %s1, 384
      %v1016 = vld [vmem:[%s1015] sm:$0xf]
      %v1017 = vld [vmem:[%s1015 + $0x4] sm:$0xf]
      %v1018 = vld [vmem:[%s1015 + $0x8] sm:$0xf]
      %v1019 = vld [vmem:[%s1015 + $0xc] sm:$0xf]
      %v1020 = vld [vmem:[%s1015 + $0x10] sm:$0xf]
      %v1021 = vld [vmem:[%s1015 + $0x14] sm:$0xf]
      %v1022 = vld [vmem:[%s1015 + $0x18] sm:$0xf]
      %v1023 = vld [vmem:[%s1015 + $0x1c] sm:$0xf]
      %v1024 = vld [vmem:[%s1015 + $0x20] sm:$0xf]
      %v1025 = vld [vmem:[%s1015 + $0x24] sm:$0xf]
      %v1026 = vld [vmem:[%s1015 + $0x28] sm:$0xf]
      %v1027 = vld [vmem:[%s1015 + $0x2c] sm:$0xf]
      %v1028 = vld [vmem:[%s1015 + $0x30] sm:$0xf]
      %v1029 = vld [vmem:[%s1015 + $0x34] sm:$0xf]
      %v1030 = vld [vmem:[%s1015 + $0x38] sm:$0xf]
      %v1031 = vld [vmem:[%s1015 + $0x3c] sm:$0xf]
      %v1033 = vunpack.c.l.b16 %v382
      %v1034 = vpack.c.b16 %v564, %v563
      %v1035 = vpack.c.b16 %v566, %v565
      %v1036 = vpack.c.b16 %v568, %v567
      %v1037 = vpack.c.b16 %v1033, %v569
      %v1058 = vunpack.c.l.b16 %v1016
      %v1059 = vunpack.c.l.b16 %v1017
      %v1060 = vunpack.c.l.b16 %v1018
      %v1061 = vunpack.c.l.b16 %v1019
      %v1062 = vunpack.c.l.b16 %v1020
      %v1063 = vunpack.c.l.b16 %v1021
      %v1064 = vunpack.c.l.b16 %v1022
      %v1065 = vunpack.c.l.b16 %v1023
      %v1066 = vunpack.c.l.b16 %v1024
      %v1067 = vunpack.c.l.b16 %v1025
      %v1068 = vunpack.c.l.b16 %v1026
      %v1069 = vunpack.c.l.b16 %v1027
      %v1070 = vunpack.c.l.b16 %v1028
      %v1071 = vunpack.c.l.b16 %v1029
      %v1072 = vunpack.c.l.b16 %v1030
      %v1073 = vunpack.c.l.b16 %v1031
      %v1074 = vpack.c.b16 %v1059, %v1058
      %v1075 = vpack.c.b16 %v1061, %v1060
      %v1076 = vpack.c.b16 %v1063, %v1062
      %v1077 = vpack.c.b16 %v1065, %v1064
      %v1078 = vpack.c.b16 %v1067, %v1066
      %v1079 = vpack.c.b16 %v1069, %v1068
      %v1080 = vpack.c.b16 %v1071, %v1070
      %v1081 = vpack.c.b16 %v1073, %v1072
      %1090 = vmatprep.subr.bf16.mxu0 0
      %1091 = vmatpush1.bf16.msra.mxu0 %v1081
      %1092 = vmatprep.subr.bf16.mxu0 0
      %1093 = vmatpush1.bf16.msra.mxu0 %v1080
      %1094 = vmatprep.subr.bf16.mxu0 0
      %1095 = vmatpush1.bf16.msra.mxu0 %v1079
      %1096 = vmatprep.subr.bf16.mxu0 0
      %1097 = vmatpush1.bf16.msra.mxu0 %v1078
      %1098 = vmatprep.subr.bf16.mxu0 0
      %1099 = vmatpush1.bf16.msra.mxu0 %v1077
      %1100 = vmatprep.subr.bf16.mxu0 0
      %1101 = vmatpush1.bf16.msra.mxu0 %v1076
      %1102 = vmatprep.subr.bf16.mxu0 0
      %1103 = vmatpush1.bf16.msra.mxu0 %v1075
      %1104 = vmatprep.subr.bf16.mxu0 0
      %1105 = vmatpush1.bf16.msra.mxu0 %v1074
      %1106 = vmatprep.subr.bf16.mxu0 0
      %1107 = vmatpush2.bf16.msra.mxu0 0
      %1108 = vmatprep.subr.bf16.mxu0 0
      %1109 = vmatpush2.bf16.msra.mxu0 0
      %1110 = vmatprep.subr.bf16.mxu0 0
      %1111 = vmatpush2.bf16.msra.mxu0 0
      %1112 = vmatprep.subr.bf16.mxu0 0
      %1113 = vmatpush2.bf16.msra.mxu0 0
      %1114 = vmatprep.subr.bf16.mxu0 0
      %1115 = vmatpush2.bf16.msra.mxu0 0
      %1116 = vmatprep.subr.bf16.mxu0 0
      %1117 = vmatpush2.bf16.msra.mxu0 0
      %1118 = vmatprep.subr.bf16.mxu0 0
      %1119 = vmatpush2.bf16.msra.mxu0 0
      %1120 = vmatprep.subr.bf16.mxu0 0
      %1121 = vmatpush2.bf16.msra.mxu0 0
      %1122 = vmatprep.mubr.bf16.mxu0 0
      %1123 = vmatmul.mubr.bf16.gmra.mxu0 %v1034
      %v1124 = vpop.f32.mrf.mxu0
      %v1125 = vadd.f32 0.0, %v1124
      %v1126 = vpop.f32.mrf.mxu0
      %v1127 = vpop.f32.mrf.mxu0
      %v1128 = vadd.f32 0.0, %v1127
      %v1129 = vpop.f32.mrf.mxu0
      %1130 = vmatprep.mubr.bf16.mxu0 0
      %1131 = vmatmul.mubr.bf16.gmra.mxu0 %v1035
      %v1132 = vpop.f32.mrf.mxu0
      %v1133 = vadd.f32 0.0, %v1132
      %v1134 = vpop.f32.mrf.mxu0
      %v1135 = vpop.f32.mrf.mxu0
      %v1136 = vadd.f32 0.0, %v1135
      %v1137 = vpop.f32.mrf.mxu0
      %1138 = vmatprep.mubr.bf16.mxu0 0
      %1139 = vmatmul.mubr.bf16.gmra.mxu0 %v1036
      %v1140 = vpop.f32.mrf.mxu0
      %v1141 = vadd.f32 0.0, %v1140
      %v1142 = vpop.f32.mrf.mxu0
      %v1143 = vpop.f32.mrf.mxu0
      %v1144 = vadd.f32 0.0, %v1143
      %v1145 = vpop.f32.mrf.mxu0
      %1146 = vmatprep.mubr.bf16.mxu0 0
      %1147 = vmatmul.mubr.bf16.gmra.mxu0 %v1037
      %v1148 = vpop.f32.mrf.mxu0
      %v1149 = vadd.f32 0.0, %v1148
      %v1150 = vpop.f32.mrf.mxu0
      %v1151 = vpop.f32.mrf.mxu0
      %v1152 = vadd.f32 0.0, %v1151
      %v1153 = vpop.f32.mrf.mxu0
      %1154 = vdwg.mxu0
      %v1155 = vadd.f32 %v1007, %v1125
      %v1156 = vadd.f32 %v1008, %v1128
      %v1157 = vadd.f32 %v1009, %v1133
      %v1158 = vadd.f32 %v1010, %v1136
      %v1159 = vadd.f32 %v1011, %v1141
      %v1160 = vadd.f32 %v1012, %v1144
      %v1161 = vadd.f32 %v1013, %v1149
      %v1162 = vadd.f32 %v1014, %v1152
      %v1163 = vrot.slane %v382, 4
      %s1164 = scalar_lea.vmem %s1, 448
      %v1165 = vld [vmem:[%s1164] sm:$0xf]
      %v1166 = vld [vmem:[%s1164 + $0x4] sm:$0xf]
      %v1167 = vld [vmem:[%s1164 + $0x8] sm:$0xf]
      %v1168 = vld [vmem:[%s1164 + $0xc] sm:$0xf]
      %v1169 = vld [vmem:[%s1164 + $0x10] sm:$0xf]
      %v1170 = vld [vmem:[%s1164 + $0x14] sm:$0xf]
      %v1171 = vld [vmem:[%s1164 + $0x18] sm:$0xf]
      %v1172 = vld [vmem:[%s1164 + $0x1c] sm:$0xf]
      %v1173 = vld [vmem:[%s1164 + $0x20] sm:$0xf]
      %v1174 = vld [vmem:[%s1164 + $0x24] sm:$0xf]
      %v1175 = vld [vmem:[%s1164 + $0x28] sm:$0xf]
      %v1176 = vld [vmem:[%s1164 + $0x2c] sm:$0xf]
      %v1177 = vld [vmem:[%s1164 + $0x30] sm:$0xf]
      %v1178 = vld [vmem:[%s1164 + $0x34] sm:$0xf]
      %v1179 = vld [vmem:[%s1164 + $0x38] sm:$0xf]
      %v1180 = vld [vmem:[%s1164 + $0x3c] sm:$0xf]
      %v1181 = vunpack.c.l.b16 %v1163
      %v1182 = vpack.c.b16 %v435, %v434
      %v1183 = vpack.c.b16 %v437, %v436
      %v1184 = vpack.c.b16 %v439, %v438
      %v1185 = vpack.c.b16 %v1181, %v440
      %v1206 = vunpack.c.l.b16 %v1165
      %v1207 = vunpack.c.l.b16 %v1166
      %v1208 = vunpack.c.l.b16 %v1167
      %v1209 = vunpack.c.l.b16 %v1168
      %v1210 = vunpack.c.l.b16 %v1169
      %v1211 = vunpack.c.l.b16 %v1170
      %v1212 = vunpack.c.l.b16 %v1171
      %v1213 = vunpack.c.l.b16 %v1172
      %v1214 = vunpack.c.l.b16 %v1173
      %v1215 = vunpack.c.l.b16 %v1174
      %v1216 = vunpack.c.l.b16 %v1175
      %v1217 = vunpack.c.l.b16 %v1176
      %v1218 = vunpack.c.l.b16 %v1177
      %v1219 = vunpack.c.l.b16 %v1178
      %v1220 = vunpack.c.l.b16 %v1179
      %v1221 = vunpack.c.l.b16 %v1180
      %v1222 = vpack.c.b16 %v1207, %v1206
      %v1223 = vpack.c.b16 %v1209, %v1208
      %v1224 = vpack.c.b16 %v1211, %v1210
      %v1225 = vpack.c.b16 %v1213, %v1212
      %v1226 = vpack.c.b16 %v1215, %v1214
      %v1227 = vpack.c.b16 %v1217, %v1216
      %v1228 = vpack.c.b16 %v1219, %v1218
      %v1229 = vpack.c.b16 %v1221, %v1220
      %1238 = vmatprep.subr.bf16.mxu0 0
      %1239 = vmatpush1.bf16.msra.mxu0 %v1229
      %1240 = vmatprep.subr.bf16.mxu0 0
      %1241 = vmatpush1.bf16.msra.mxu0 %v1228
      %1242 = vmatprep.subr.bf16.mxu0 0
      %1243 = vmatpush1.bf16.msra.mxu0 %v1227
      %1244 = vmatprep.subr.bf16.mxu0 0
      %1245 = vmatpush1.bf16.msra.mxu0 %v1226
      %1246 = vmatprep.subr.bf16.mxu0 0
      %1247 = vmatpush1.bf16.msra.mxu0 %v1225
      %1248 = vmatprep.subr.bf16.mxu0 0
      %1249 = vmatpush1.bf16.msra.mxu0 %v1224
      %1250 = vmatprep.subr.bf16.mxu0 0
      %1251 = vmatpush1.bf16.msra.mxu0 %v1223
      %1252 = vmatprep.subr.bf16.mxu0 0
      %1253 = vmatpush1.bf16.msra.mxu0 %v1222
      %1254 = vmatprep.subr.bf16.mxu0 0
      %1255 = vmatpush2.bf16.msra.mxu0 0
      %1256 = vmatprep.subr.bf16.mxu0 0
      %1257 = vmatpush2.bf16.msra.mxu0 0
      %1258 = vmatprep.subr.bf16.mxu0 0
      %1259 = vmatpush2.bf16.msra.mxu0 0
      %1260 = vmatprep.subr.bf16.mxu0 0
      %1261 = vmatpush2.bf16.msra.mxu0 0
      %1262 = vmatprep.subr.bf16.mxu0 0
      %1263 = vmatpush2.bf16.msra.mxu0 0
      %1264 = vmatprep.subr.bf16.mxu0 0
      %1265 = vmatpush2.bf16.msra.mxu0 0
      %1266 = vmatprep.subr.bf16.mxu0 0
      %1267 = vmatpush2.bf16.msra.mxu0 0
      %1268 = vmatprep.subr.bf16.mxu0 0
      %1269 = vmatpush2.bf16.msra.mxu0 0
      %1270 = vmatprep.mubr.bf16.mxu0 0
      %1271 = vmatmul.mubr.bf16.gmra.mxu0 %v1182
      %v1272 = vpop.f32.mrf.mxu0
      %v1273 = vadd.f32 0.0, %v1272
      %v1274 = vpop.f32.mrf.mxu0
      %v1275 = vpop.f32.mrf.mxu0
      %v1276 = vadd.f32 0.0, %v1275
      %v1277 = vpop.f32.mrf.mxu0
      %1278 = vmatprep.mubr.bf16.mxu0 0
      %1279 = vmatmul.mubr.bf16.gmra.mxu0 %v1183
      %v1280 = vpop.f32.mrf.mxu0
      %v1281 = vadd.f32 0.0, %v1280
      %v1282 = vpop.f32.mrf.mxu0
      %v1283 = vpop.f32.mrf.mxu0
      %v1284 = vadd.f32 0.0, %v1283
      %v1285 = vpop.f32.mrf.mxu0
      %1286 = vmatprep.mubr.bf16.mxu0 0
      %1287 = vmatmul.mubr.bf16.gmra.mxu0 %v1184
      %v1288 = vpop.f32.mrf.mxu0
      %v1289 = vadd.f32 0.0, %v1288
      %v1290 = vpop.f32.mrf.mxu0
      %v1291 = vpop.f32.mrf.mxu0
      %v1292 = vadd.f32 0.0, %v1291
      %v1293 = vpop.f32.mrf.mxu0
      %1294 = vmatprep.mubr.bf16.mxu0 0
      %1295 = vmatmul.mubr.bf16.gmra.mxu0 %v1185
      %v1296 = vpop.f32.mrf.mxu0
      %v1297 = vadd.f32 0.0, %v1296
      %v1298 = vpop.f32.mrf.mxu0
      %v1299 = vpop.f32.mrf.mxu0
      %v1300 = vadd.f32 0.0, %v1299
      %v1301 = vpop.f32.mrf.mxu0
      %1302 = vdwg.mxu0
      %v1303 = vadd.f32 %v1155, %v1273
      %v1304 = vadd.f32 %v1156, %v1276
      %v1305 = vadd.f32 %v1157, %v1281
      %v1306 = vadd.f32 %v1158, %v1284
      %v1307 = vadd.f32 %v1159, %v1289
      %v1308 = vadd.f32 %v1160, %v1292
      %v1309 = vadd.f32 %v1161, %v1297
      %v1310 = vadd.f32 %v1162, %v1300
      %vm1311 = vsmask.f32 3328
      %vm1312 = vsmask.f32 7440
      %vm1313 = vmor %vm1311, %vm1312
      %v1315 = vshrl.u32 %v350, 16
      %v1317 = vrot.slane %v1315, 4
      %v1318 = vshll.u32 %v350, 16
      %v1320 = vrot.slane %v1318, 5
      %v1321 = vor.u32 %v1317, %v1320
      %v1322 = vrot.slane %v1321, 4
      %v1324 = vshll.u32 %v352, 16
      %v1326 = vrot.slane %v1324, 5
      %v1327 = vsel %vm1313, %v1322, %v1326
      %v1329 = vshrl.u32 %v354, 16
      %v1331 = vrot.slane %v1329, 4
      %v1332 = vshll.u32 %v354, 16
      %v1334 = vrot.slane %v1332, 5
      %v1335 = vor.u32 %v1331, %v1334
      %v1336 = vrot.slane %v1335, 4
      %v1338 = vshll.u32 %v356, 16
      %v1340 = vrot.slane %v1338, 5
      %v1341 = vsel %vm1313, %v1336, %v1340
      %v1343 = vshrl.u32 %v358, 16
      %v1345 = vrot.slane %v1343, 4
      %v1346 = vshll.u32 %v358, 16
      %v1348 = vrot.slane %v1346, 5
      %v1349 = vor.u32 %v1345, %v1348
      %v1350 = vrot.slane %v1349, 4
      %v1352 = vshll.u32 %v360, 16
      %v1354 = vrot.slane %v1352, 5
      %v1355 = vsel %vm1313, %v1350, %v1354
      %v1357 = vshrl.u32 %v362, 16
      %v1359 = vrot.slane %v1357, 4
      %v1360 = vshll.u32 %v362, 16
      %v1362 = vrot.slane %v1360, 5
      %v1363 = vor.u32 %v1359, %v1362
      %v1364 = vrot.slane %v1363, 4
      %v1366 = vshll.u32 %v364, 16
      %v1368 = vrot.slane %v1366, 5
      %v1369 = vsel %vm1313, %v1364, %v1368
      %v1371 = vshrl.u32 %v366, 16
      %v1373 = vrot.slane %v1371, 4
      %v1374 = vshll.u32 %v366, 16
      %v1376 = vrot.slane %v1374, 5
      %v1377 = vor.u32 %v1373, %v1376
      %v1378 = vrot.slane %v1377, 4
      %v1380 = vshll.u32 %v368, 16
      %v1382 = vrot.slane %v1380, 5
      %v1383 = vsel %vm1313, %v1378, %v1382
      %v1385 = vshrl.u32 %v370, 16
      %v1387 = vrot.slane %v1385, 4
      %v1388 = vshll.u32 %v370, 16
      %v1390 = vrot.slane %v1388, 5
      %v1391 = vor.u32 %v1387, %v1390
      %v1392 = vrot.slane %v1391, 4
      %v1394 = vshll.u32 %v372, 16
      %v1396 = vrot.slane %v1394, 5
      %v1397 = vsel %vm1313, %v1392, %v1396
      %v1399 = vshrl.u32 %v374, 16
      %v1401 = vrot.slane %v1399, 4
      %v1402 = vshll.u32 %v374, 16
      %v1404 = vrot.slane %v1402, 5
      %v1405 = vor.u32 %v1401, %v1404
      %v1406 = vrot.slane %v1405, 4
      %v1408 = vshll.u32 %v376, 16
      %v1410 = vrot.slane %v1408, 5
      %v1411 = vsel %vm1313, %v1406, %v1410
      %v1413 = vshrl.u32 %v378, 16
      %v1415 = vrot.slane %v1413, 4
      %v1416 = vshll.u32 %v378, 16
      %v1418 = vrot.slane %v1416, 5
      %v1419 = vor.u32 %v1415, %v1418
      %v1420 = vrot.slane %v1419, 4
      %v1422 = vshll.u32 %v380, 16
      %v1424 = vrot.slane %v1422, 5
      %v1425 = vsel %vm1313, %v1420, %v1424
      %s1426 = scalar_lea.vmem %s1, 128
      %v1427 = vld [vmem:[%s1426] sm:$0xf]
      %v1428 = vld [vmem:[%s1426 + $0x4] sm:$0xf]
      %v1429 = vld [vmem:[%s1426 + $0x8] sm:$0xf]
      %v1430 = vld [vmem:[%s1426 + $0xc] sm:$0xf]
      %v1431 = vld [vmem:[%s1426 + $0x10] sm:$0xf]
      %v1432 = vld [vmem:[%s1426 + $0x14] sm:$0xf]
      %v1433 = vld [vmem:[%s1426 + $0x18] sm:$0xf]
      %v1434 = vld [vmem:[%s1426 + $0x1c] sm:$0xf]
      %v1435 = vld [vmem:[%s1426 + $0x20] sm:$0xf]
      %v1436 = vld [vmem:[%s1426 + $0x24] sm:$0xf]
      %v1437 = vld [vmem:[%s1426 + $0x28] sm:$0xf]
      %v1438 = vld [vmem:[%s1426 + $0x2c] sm:$0xf]
      %v1439 = vld [vmem:[%s1426 + $0x30] sm:$0xf]
      %v1440 = vld [vmem:[%s1426 + $0x34] sm:$0xf]
      %v1441 = vld [vmem:[%s1426 + $0x38] sm:$0xf]
      %v1442 = vld [vmem:[%s1426 + $0x3c] sm:$0xf]
      %v1443 = vunpack.c.l.b16 %v1327
      %v1444 = vunpack.c.l.b16 %v1341
      %v1445 = vunpack.c.l.b16 %v1355
      %v1446 = vunpack.c.l.b16 %v1369
      %v1447 = vunpack.c.l.b16 %v1383
      %v1448 = vunpack.c.l.b16 %v1397
      %v1449 = vunpack.c.l.b16 %v1411
      %v1450 = vunpack.c.l.b16 %v1425
      %v1451 = vpack.c.b16 %v1444, %v1443
      %v1452 = vpack.c.b16 %v1446, %v1445
      %v1453 = vpack.c.b16 %v1448, %v1447
      %v1454 = vpack.c.b16 %v1450, %v1449
      %v1475 = vunpack.c.l.b16 %v1427
      %v1476 = vunpack.c.l.b16 %v1428
      %v1477 = vunpack.c.l.b16 %v1429
      %v1478 = vunpack.c.l.b16 %v1430
      %v1479 = vunpack.c.l.b16 %v1431
      %v1480 = vunpack.c.l.b16 %v1432
      %v1481 = vunpack.c.l.b16 %v1433
      %v1482 = vunpack.c.l.b16 %v1434
      %v1483 = vunpack.c.l.b16 %v1435
      %v1484 = vunpack.c.l.b16 %v1436
      %v1485 = vunpack.c.l.b16 %v1437
      %v1486 = vunpack.c.l.b16 %v1438
      %v1487 = vunpack.c.l.b16 %v1439
      %v1488 = vunpack.c.l.b16 %v1440
      %v1489 = vunpack.c.l.b16 %v1441
      %v1490 = vunpack.c.l.b16 %v1442
      %v1491 = vpack.c.b16 %v1476, %v1475
      %v1492 = vpack.c.b16 %v1478, %v1477
      %v1493 = vpack.c.b16 %v1480, %v1479
      %v1494 = vpack.c.b16 %v1482, %v1481
      %v1495 = vpack.c.b16 %v1484, %v1483
      %v1496 = vpack.c.b16 %v1486, %v1485
      %v1497 = vpack.c.b16 %v1488, %v1487
      %v1498 = vpack.c.b16 %v1490, %v1489
      %1507 = vmatprep.subr.bf16.mxu0 0
      %1508 = vmatpush1.bf16.msra.mxu0 %v1498
      %1509 = vmatprep.subr.bf16.mxu0 0
      %1510 = vmatpush1.bf16.msra.mxu0 %v1497
      %1511 = vmatprep.subr.bf16.mxu0 0
      %1512 = vmatpush1.bf16.msra.mxu0 %v1496
      %1513 = vmatprep.subr.bf16.mxu0 0
      %1514 = vmatpush1.bf16.msra.mxu0 %v1495
      %1515 = vmatprep.subr.bf16.mxu0 0
      %1516 = vmatpush1.bf16.msra.mxu0 %v1494
      %1517 = vmatprep.subr.bf16.mxu0 0
      %1518 = vmatpush1.bf16.msra.mxu0 %v1493
      %1519 = vmatprep.subr.bf16.mxu0 0
      %1520 = vmatpush1.bf16.msra.mxu0 %v1492
      %1521 = vmatprep.subr.bf16.mxu0 0
      %1522 = vmatpush1.bf16.msra.mxu0 %v1491
      %1523 = vmatprep.subr.bf16.mxu0 0
      %1524 = vmatpush2.bf16.msra.mxu0 0
      %1525 = vmatprep.subr.bf16.mxu0 0
      %1526 = vmatpush2.bf16.msra.mxu0 0
      %1527 = vmatprep.subr.bf16.mxu0 0
      %1528 = vmatpush2.bf16.msra.mxu0 0
      %1529 = vmatprep.subr.bf16.mxu0 0
      %1530 = vmatpush2.bf16.msra.mxu0 0
      %1531 = vmatprep.subr.bf16.mxu0 0
      %1532 = vmatpush2.bf16.msra.mxu0 0
      %1533 = vmatprep.subr.bf16.mxu0 0
      %1534 = vmatpush2.bf16.msra.mxu0 0
      %1535 = vmatprep.subr.bf16.mxu0 0
      %1536 = vmatpush2.bf16.msra.mxu0 0
      %1537 = vmatprep.subr.bf16.mxu0 0
      %1538 = vmatpush2.bf16.msra.mxu0 0
      %1539 = vmatprep.mubr.bf16.mxu0 0
      %1540 = vmatmul.mubr.bf16.gmra.mxu0 %v1451
      %v1541 = vpop.f32.mrf.mxu0
      %v1542 = vadd.f32 0.0, %v1541
      %v1543 = vpop.f32.mrf.mxu0
      %v1544 = vpop.f32.mrf.mxu0
      %v1545 = vadd.f32 0.0, %v1544
      %v1546 = vpop.f32.mrf.mxu0
      %1547 = vmatprep.mubr.bf16.mxu0 0
      %1548 = vmatmul.mubr.bf16.gmra.mxu0 %v1452
      %v1549 = vpop.f32.mrf.mxu0
      %v1550 = vadd.f32 0.0, %v1549
      %v1551 = vpop.f32.mrf.mxu0
      %v1552 = vpop.f32.mrf.mxu0
      %v1553 = vadd.f32 0.0, %v1552
      %v1554 = vpop.f32.mrf.mxu0
      %1555 = vmatprep.mubr.bf16.mxu0 0
      %1556 = vmatmul.mubr.bf16.gmra.mxu0 %v1453
      %v1557 = vpop.f32.mrf.mxu0
      %v1558 = vadd.f32 0.0, %v1557
      %v1559 = vpop.f32.mrf.mxu0
      %v1560 = vpop.f32.mrf.mxu0
      %v1561 = vadd.f32 0.0, %v1560
      %v1562 = vpop.f32.mrf.mxu0
      %1563 = vmatprep.mubr.bf16.mxu0 0
      %1564 = vmatmul.mubr.bf16.gmra.mxu0 %v1454
      %v1565 = vpop.f32.mrf.mxu0
      %v1566 = vadd.f32 0.0, %v1565
      %v1567 = vpop.f32.mrf.mxu0
      %v1568 = vpop.f32.mrf.mxu0
      %v1569 = vadd.f32 0.0, %v1568
      %v1570 = vpop.f32.mrf.mxu0
      %1571 = vdwg.mxu0
      %v1572 = vadd.f32 %v1303, %v1542
      %v1573 = vadd.f32 %v1304, %v1545
      %v1574 = vadd.f32 %v1305, %v1550
      %v1575 = vadd.f32 %v1306, %v1553
      %v1576 = vadd.f32 %v1307, %v1558
      %v1577 = vadd.f32 %v1308, %v1561
      %v1578 = vadd.f32 %v1309, %v1566
      %v1579 = vadd.f32 %v1310, %v1569
      %v1581 = vshrl.u32 %v351, 16
      %v1583 = vrot.slane %v1581, 4
      %v1584 = vshll.u32 %v351, 16
      %v1586 = vrot.slane %v1584, 5
      %v1587 = vor.u32 %v1583, %v1586
      %v1588 = vrot.slane %v1587, 4
      %v1590 = vshll.u32 %v353, 16
      %v1592 = vrot.slane %v1590, 5
      %v1593 = vsel %vm1313, %v1588, %v1592
      %v1595 = vshrl.u32 %v355, 16
      %v1597 = vrot.slane %v1595, 4
      %v1598 = vshll.u32 %v355, 16
      %v1600 = vrot.slane %v1598, 5
      %v1601 = vor.u32 %v1597, %v1600
      %v1602 = vrot.slane %v1601, 4
      %v1604 = vshll.u32 %v357, 16
      %v1606 = vrot.slane %v1604, 5
      %v1607 = vsel %vm1313, %v1602, %v1606
      %v1609 = vshrl.u32 %v359, 16
      %v1611 = vrot.slane %v1609, 4
      %v1612 = vshll.u32 %v359, 16
      %v1614 = vrot.slane %v1612, 5
      %v1615 = vor.u32 %v1611, %v1614
      %v1616 = vrot.slane %v1615, 4
      %v1618 = vshll.u32 %v361, 16
      %v1620 = vrot.slane %v1618, 5
      %v1621 = vsel %vm1313, %v1616, %v1620
      %v1623 = vshrl.u32 %v363, 16
      %v1625 = vrot.slane %v1623, 4
      %v1626 = vshll.u32 %v363, 16
      %v1628 = vrot.slane %v1626, 5
      %v1629 = vor.u32 %v1625, %v1628
      %v1630 = vrot.slane %v1629, 4
      %v1632 = vshll.u32 %v365, 16
      %v1634 = vrot.slane %v1632, 5
      %v1635 = vsel %vm1313, %v1630, %v1634
      %v1637 = vshrl.u32 %v367, 16
      %v1639 = vrot.slane %v1637, 4
      %v1640 = vshll.u32 %v367, 16
      %v1642 = vrot.slane %v1640, 5
      %v1643 = vor.u32 %v1639, %v1642
      %v1644 = vrot.slane %v1643, 4
      %v1646 = vshll.u32 %v369, 16
      %v1648 = vrot.slane %v1646, 5
      %v1649 = vsel %vm1313, %v1644, %v1648
      %v1651 = vshrl.u32 %v371, 16
      %v1653 = vrot.slane %v1651, 4
      %v1654 = vshll.u32 %v371, 16
      %v1656 = vrot.slane %v1654, 5
      %v1657 = vor.u32 %v1653, %v1656
      %v1658 = vrot.slane %v1657, 4
      %v1660 = vshll.u32 %v373, 16
      %v1662 = vrot.slane %v1660, 5
      %v1663 = vsel %vm1313, %v1658, %v1662
      %v1665 = vshrl.u32 %v375, 16
      %v1667 = vrot.slane %v1665, 4
      %v1668 = vshll.u32 %v375, 16
      %v1670 = vrot.slane %v1668, 5
      %v1671 = vor.u32 %v1667, %v1670
      %v1672 = vrot.slane %v1671, 4
      %v1674 = vshll.u32 %v377, 16
      %v1676 = vrot.slane %v1674, 5
      %v1677 = vsel %vm1313, %v1672, %v1676
      %v1679 = vshrl.u32 %v379, 16
      %v1681 = vrot.slane %v1679, 4
      %v1682 = vshll.u32 %v379, 16
      %v1684 = vrot.slane %v1682, 5
      %v1685 = vor.u32 %v1681, %v1684
      %v1686 = vrot.slane %v1685, 4
      %v1688 = vshll.u32 %v381, 16
      %v1690 = vrot.slane %v1688, 5
      %v1691 = vsel %vm1313, %v1686, %v1690
      %s1692 = scalar_lea.vmem %s1, 320
      %v1693 = vld [vmem:[%s1692] sm:$0xf]
      %v1694 = vld [vmem:[%s1692 + $0x4] sm:$0xf]
      %v1695 = vld [vmem:[%s1692 + $0x8] sm:$0xf]
      %v1696 = vld [vmem:[%s1692 + $0xc] sm:$0xf]
      %v1697 = vld [vmem:[%s1692 + $0x10] sm:$0xf]
      %v1698 = vld [vmem:[%s1692 + $0x14] sm:$0xf]
      %v1699 = vld [vmem:[%s1692 + $0x18] sm:$0xf]
      %v1700 = vld [vmem:[%s1692 + $0x1c] sm:$0xf]
      %v1701 = vld [vmem:[%s1692 + $0x20] sm:$0xf]
      %v1702 = vld [vmem:[%s1692 + $0x24] sm:$0xf]
      %v1703 = vld [vmem:[%s1692 + $0x28] sm:$0xf]
      %v1704 = vld [vmem:[%s1692 + $0x2c] sm:$0xf]
      %v1705 = vld [vmem:[%s1692 + $0x30] sm:$0xf]
      %v1706 = vld [vmem:[%s1692 + $0x34] sm:$0xf]
      %v1707 = vld [vmem:[%s1692 + $0x38] sm:$0xf]
      %v1708 = vld [vmem:[%s1692 + $0x3c] sm:$0xf]
      %v1709 = vunpack.c.l.b16 %v1593
      %v1710 = vunpack.c.l.b16 %v1607
      %v1711 = vunpack.c.l.b16 %v1621
      %v1712 = vunpack.c.l.b16 %v1635
      %v1713 = vunpack.c.l.b16 %v1649
      %v1714 = vunpack.c.l.b16 %v1663
      %v1715 = vunpack.c.l.b16 %v1677
      %v1716 = vunpack.c.l.b16 %v1691
      %v1717 = vpack.c.b16 %v1710, %v1709
      %v1718 = vpack.c.b16 %v1712, %v1711
      %v1719 = vpack.c.b16 %v1714, %v1713
      %v1720 = vpack.c.b16 %v1716, %v1715
      %v1741 = vunpack.c.l.b16 %v1693
      %v1742 = vunpack.c.l.b16 %v1694
      %v1743 = vunpack.c.l.b16 %v1695
      %v1744 = vunpack.c.l.b16 %v1696
      %v1745 = vunpack.c.l.b16 %v1697
      %v1746 = vunpack.c.l.b16 %v1698
      %v1747 = vunpack.c.l.b16 %v1699
      %v1748 = vunpack.c.l.b16 %v1700
      %v1749 = vunpack.c.l.b16 %v1701
      %v1750 = vunpack.c.l.b16 %v1702
      %v1751 = vunpack.c.l.b16 %v1703
      %v1752 = vunpack.c.l.b16 %v1704
      %v1753 = vunpack.c.l.b16 %v1705
      %v1754 = vunpack.c.l.b16 %v1706
      %v1755 = vunpack.c.l.b16 %v1707
      %v1756 = vunpack.c.l.b16 %v1708
      %v1757 = vpack.c.b16 %v1742, %v1741
      %v1758 = vpack.c.b16 %v1744, %v1743
      %v1759 = vpack.c.b16 %v1746, %v1745
      %v1760 = vpack.c.b16 %v1748, %v1747
      %v1761 = vpack.c.b16 %v1750, %v1749
      %v1762 = vpack.c.b16 %v1752, %v1751
      %v1763 = vpack.c.b16 %v1754, %v1753
      %v1764 = vpack.c.b16 %v1756, %v1755
      %1773 = vmatprep.subr.bf16.mxu0 0
      %1774 = vmatpush1.bf16.msra.mxu0 %v1764
      %1775 = vmatprep.subr.bf16.mxu0 0
      %1776 = vmatpush1.bf16.msra.mxu0 %v1763
      %1777 = vmatprep.subr.bf16.mxu0 0
      %1778 = vmatpush1.bf16.msra.mxu0 %v1762
      %1779 = vmatprep.subr.bf16.mxu0 0
      %1780 = vmatpush1.bf16.msra.mxu0 %v1761
      %1781 = vmatprep.subr.bf16.mxu0 0
      %1782 = vmatpush1.bf16.msra.mxu0 %v1760
      %1783 = vmatprep.subr.bf16.mxu0 0
      %1784 = vmatpush1.bf16.msra.mxu0 %v1759
      %1785 = vmatprep.subr.bf16.mxu0 0
      %1786 = vmatpush1.bf16.msra.mxu0 %v1758
      %1787 = vmatprep.subr.bf16.mxu0 0
      %1788 = vmatpush1.bf16.msra.mxu0 %v1757
      %1789 = vmatprep.subr.bf16.mxu0 0
      %1790 = vmatpush2.bf16.msra.mxu0 0
      %1791 = vmatprep.subr.bf16.mxu0 0
      %1792 = vmatpush2.bf16.msra.mxu0 0
      %1793 = vmatprep.subr.bf16.mxu0 0
      %1794 = vmatpush2.bf16.msra.mxu0 0
      %1795 = vmatprep.subr.bf16.mxu0 0
      %1796 = vmatpush2.bf16.msra.mxu0 0
      %1797 = vmatprep.subr.bf16.mxu0 0
      %1798 = vmatpush2.bf16.msra.mxu0 0
      %1799 = vmatprep.subr.bf16.mxu0 0
      %1800 = vmatpush2.bf16.msra.mxu0 0
      %1801 = vmatprep.subr.bf16.mxu0 0
      %1802 = vmatpush2.bf16.msra.mxu0 0
      %1803 = vmatprep.subr.bf16.mxu0 0
      %1804 = vmatpush2.bf16.msra.mxu0 0
      %1805 = vmatprep.mubr.bf16.mxu0 0
      %1806 = vmatmul.mubr.bf16.gmra.mxu0 %v1717
      %v1807 = vpop.f32.mrf.mxu0
      %v1808 = vadd.f32 0.0, %v1807
      %v1809 = vpop.f32.mrf.mxu0
      %v1810 = vpop.f32.mrf.mxu0
      %v1811 = vadd.f32 0.0, %v1810
      %v1812 = vpop.f32.mrf.mxu0
      %1813 = vmatprep.mubr.bf16.mxu0 0
      %1814 = vmatmul.mubr.bf16.gmra.mxu0 %v1718
      %v1815 = vpop.f32.mrf.mxu0
      %v1816 = vadd.f32 0.0, %v1815
      %v1817 = vpop.f32.mrf.mxu0
      %v1818 = vpop.f32.mrf.mxu0
      %v1819 = vadd.f32 0.0, %v1818
      %v1820 = vpop.f32.mrf.mxu0
      %1821 = vmatprep.mubr.bf16.mxu0 0
      %1822 = vmatmul.mubr.bf16.gmra.mxu0 %v1719
      %v1823 = vpop.f32.mrf.mxu0
      %v1824 = vadd.f32 0.0, %v1823
      %v1825 = vpop.f32.mrf.mxu0
      %v1826 = vpop.f32.mrf.mxu0
      %v1827 = vadd.f32 0.0, %v1826
      %v1828 = vpop.f32.mrf.mxu0
      %1829 = vmatprep.mubr.bf16.mxu0 0
      %1830 = vmatmul.mubr.bf16.gmra.mxu0 %v1720
      %v1831 = vpop.f32.mrf.mxu0
      %v1832 = vadd.f32 0.0, %v1831
      %v1833 = vpop.f32.mrf.mxu0
      %v1834 = vpop.f32.mrf.mxu0
      %v1835 = vadd.f32 0.0, %v1834
      %v1836 = vpop.f32.mrf.mxu0
      %1837 = vdwg.mxu0
      %v1838 = vadd.f32 %v1572, %v1808
      %v1839 = vadd.f32 %v1573, %v1811
      %v1840 = vadd.f32 %v1574, %v1816
      %v1841 = vadd.f32 %v1575, %v1819
      %v1842 = vadd.f32 %v1576, %v1824
      %v1843 = vadd.f32 %v1577, %v1827
      %v1844 = vadd.f32 %v1578, %v1832
      %v1845 = vadd.f32 %v1579, %v1835
      %v1847 = vshrl.u32 %v382, 16
      %v1849 = vrot.slane %v1847, 4
      %v1850 = vshll.u32 %v382, 16
      %v1852 = vrot.slane %v1850, 5
      %v1853 = vor.u32 %v1849, %v1852
      %v1854 = vrot.slane %v1853, 4
      %v1856 = vshll.u32 %v383, 16
      %v1858 = vrot.slane %v1856, 5
      %v1859 = vsel %vm1313, %v1854, %v1858
      %s1860 = scalar_lea.vmem %s1, 512
      %v1861 = vld [vmem:[%s1860] sm:$0xf]
      %v1862 = vld [vmem:[%s1860 + $0x4] sm:$0xf]
      %v1863 = vld [vmem:[%s1860 + $0x8] sm:$0xf]
      %v1864 = vld [vmem:[%s1860 + $0xc] sm:$0xf]
      %v1865 = vld [vmem:[%s1860 + $0x10] sm:$0xf]
      %v1866 = vld [vmem:[%s1860 + $0x14] sm:$0xf]
      %v1867 = vld [vmem:[%s1860 + $0x18] sm:$0xf]
      %v1868 = vld [vmem:[%s1860 + $0x1c] sm:$0xf]
      %v1869 = vld [vmem:[%s1860 + $0x20] sm:$0xf]
      %v1870 = vld [vmem:[%s1860 + $0x24] sm:$0xf]
      %v1871 = vld [vmem:[%s1860 + $0x28] sm:$0xf]
      %v1872 = vld [vmem:[%s1860 + $0x2c] sm:$0xf]
      %v1873 = vld [vmem:[%s1860 + $0x30] sm:$0xf]
      %v1874 = vld [vmem:[%s1860 + $0x34] sm:$0xf]
      %v1875 = vld [vmem:[%s1860 + $0x38] sm:$0xf]
      %v1876 = vld [vmem:[%s1860 + $0x3c] sm:$0xf]
      %v1877 = vunpack.c.l.b16 %v1859
      %v1878 = vpack.c.b16 %v1445, %v1444
      %v1879 = vpack.c.b16 %v1447, %v1446
      %v1880 = vpack.c.b16 %v1449, %v1448
      %v1881 = vpack.c.b16 %v1877, %v1450
      %v1902 = vunpack.c.l.b16 %v1861
      %v1903 = vunpack.c.l.b16 %v1862
      %v1904 = vunpack.c.l.b16 %v1863
      %v1905 = vunpack.c.l.b16 %v1864
      %v1906 = vunpack.c.l.b16 %v1865
      %v1907 = vunpack.c.l.b16 %v1866
      %v1908 = vunpack.c.l.b16 %v1867
      %v1909 = vunpack.c.l.b16 %v1868
      %v1910 = vunpack.c.l.b16 %v1869
      %v1911 = vunpack.c.l.b16 %v1870
      %v1912 = vunpack.c.l.b16 %v1871
      %v1913 = vunpack.c.l.b16 %v1872
      %v1914 = vunpack.c.l.b16 %v1873
      %v1915 = vunpack.c.l.b16 %v1874
      %v1916 = vunpack.c.l.b16 %v1875
      %v1917 = vunpack.c.l.b16 %v1876
      %v1918 = vpack.c.b16 %v1903, %v1902
      %v1919 = vpack.c.b16 %v1905, %v1904
      %v1920 = vpack.c.b16 %v1907, %v1906
      %v1921 = vpack.c.b16 %v1909, %v1908
      %v1922 = vpack.c.b16 %v1911, %v1910
      %v1923 = vpack.c.b16 %v1913, %v1912
      %v1924 = vpack.c.b16 %v1915, %v1914
      %v1925 = vpack.c.b16 %v1917, %v1916
      %1934 = vmatprep.subr.bf16.mxu0 0
      %1935 = vmatpush1.bf16.msra.mxu0 %v1925
      %1936 = vmatprep.subr.bf16.mxu0 0
      %1937 = vmatpush1.bf16.msra.mxu0 %v1924
      %1938 = vmatprep.subr.bf16.mxu0 0
      %1939 = vmatpush1.bf16.msra.mxu0 %v1923
      %1940 = vmatprep.subr.bf16.mxu0 0
      %1941 = vmatpush1.bf16.msra.mxu0 %v1922
      %1942 = vmatprep.subr.bf16.mxu0 0
      %1943 = vmatpush1.bf16.msra.mxu0 %v1921
      %1944 = vmatprep.subr.bf16.mxu0 0
      %1945 = vmatpush1.bf16.msra.mxu0 %v1920
      %1946 = vmatprep.subr.bf16.mxu0 0
      %1947 = vmatpush1.bf16.msra.mxu0 %v1919
      %1948 = vmatprep.subr.bf16.mxu0 0
      %1949 = vmatpush1.bf16.msra.mxu0 %v1918
      %1950 = vmatprep.subr.bf16.mxu0 0
      %1951 = vmatpush2.bf16.msra.mxu0 0
      %1952 = vmatprep.subr.bf16.mxu0 0
      %1953 = vmatpush2.bf16.msra.mxu0 0
      %1954 = vmatprep.subr.bf16.mxu0 0
      %1955 = vmatpush2.bf16.msra.mxu0 0
      %1956 = vmatprep.subr.bf16.mxu0 0
      %1957 = vmatpush2.bf16.msra.mxu0 0
      %1958 = vmatprep.subr.bf16.mxu0 0
      %1959 = vmatpush2.bf16.msra.mxu0 0
      %1960 = vmatprep.subr.bf16.mxu0 0
      %1961 = vmatpush2.bf16.msra.mxu0 0
      %1962 = vmatprep.subr.bf16.mxu0 0
      %1963 = vmatpush2.bf16.msra.mxu0 0
      %1964 = vmatprep.subr.bf16.mxu0 0
      %1965 = vmatpush2.bf16.msra.mxu0 0
      %1966 = vmatprep.mubr.bf16.mxu0 0
      %1967 = vmatmul.mubr.bf16.gmra.mxu0 %v1878
      %v1968 = vpop.f32.mrf.mxu0
      %v1969 = vadd.f32 0.0, %v1968
      %v1970 = vpop.f32.mrf.mxu0
      %v1971 = vpop.f32.mrf.mxu0
      %v1972 = vadd.f32 0.0, %v1971
      %v1973 = vpop.f32.mrf.mxu0
      %1974 = vmatprep.mubr.bf16.mxu0 0
      %1975 = vmatmul.mubr.bf16.gmra.mxu0 %v1879
      %v1976 = vpop.f32.mrf.mxu0
      %v1977 = vadd.f32 0.0, %v1976
      %v1978 = vpop.f32.mrf.mxu0
      %v1979 = vpop.f32.mrf.mxu0
      %v1980 = vadd.f32 0.0, %v1979
      %v1981 = vpop.f32.mrf.mxu0
      %1982 = vmatprep.mubr.bf16.mxu0 0
      %1983 = vmatmul.mubr.bf16.gmra.mxu0 %v1880
      %v1984 = vpop.f32.mrf.mxu0
      %v1985 = vadd.f32 0.0, %v1984
      %v1986 = vpop.f32.mrf.mxu0
      %v1987 = vpop.f32.mrf.mxu0
      %v1988 = vadd.f32 0.0, %v1987
      %v1989 = vpop.f32.mrf.mxu0
      %1990 = vmatprep.mubr.bf16.mxu0 0
      %1991 = vmatmul.mubr.bf16.gmra.mxu0 %v1881
      %v1992 = vpop.f32.mrf.mxu0
      %v1993 = vadd.f32 0.0, %v1992
      %v1994 = vpop.f32.mrf.mxu0
      %v1995 = vpop.f32.mrf.mxu0
      %v1996 = vadd.f32 0.0, %v1995
      %v1997 = vpop.f32.mrf.mxu0
      %1998 = vdwg.mxu0
      %v1999 = vadd.f32 %v1838, %v1969
      %v2000 = vadd.f32 %v1839, %v1972
      %v2001 = vadd.f32 %v1840, %v1977
      %v2002 = vadd.f32 %v1841, %v1980
      %v2003 = vadd.f32 %v1842, %v1985
      %v2004 = vadd.f32 %v1843, %v1988
      %v2005 = vadd.f32 %v1844, %v1993
      %v2006 = vadd.f32 %v1845, %v1996
      %v2007 = vpack.c.bf16 %v1999, %v1999
      %v2008 = vpack.c.bf16 %v2000, %v2000
      %v2009 = vpack.c.bf16 %v2001, %v2001
      %v2010 = vpack.c.bf16 %v2002, %v2002
      %v2011 = vpack.c.bf16 %v2003, %v2003
      %v2012 = vpack.c.bf16 %v2004, %v2004
      %v2013 = vpack.c.bf16 %v2005, %v2005
      %v2014 = vpack.c.bf16 %v2006, %v2006
      %2015 = vst [vmem:[%s323] sm:$0xf] %v2007
      %2016 = vst [vmem:[%s323 + $0x4] sm:$0xf] %v2008
      %2017 = vst [vmem:[%s323 + $0x8] sm:$0xf] %v2009
      %2018 = vst [vmem:[%s323 + $0xc] sm:$0xf] %v2010
      %2019 = vst [vmem:[%s323 + $0x10] sm:$0xf] %v2011
      %2020 = vst [vmem:[%s323 + $0x14] sm:$0xf] %v2012
      %2021 = vst [vmem:[%s323 + $0x18] sm:$0xf] %v2013
      %2022 = vst [vmem:[%s323 + $0x1c] sm:$0xf] %v2014
      %v2023 = vadd.f32 %v1999, %v2000
      %v2024 = vadd.f32 %v2023, %v2001
      %v2025 = vadd.f32 %v2024, %v2002
      %v2026 = vadd.f32 %v2025, %v2003
      %v2027 = vadd.f32 %v2026, %v2004
      %v2028 = vadd.f32 %v2027, %v2005
      %v2029 = vadd.f32 %v2028, %v2006
      %v2030 = vrot.slane %v2029, 4
      %v2031 = vadd.f32 %v2029, %v2030
      %v2032 = vrot.slane %v2031, 2
      %v2033 = vadd.f32 %v2031, %v2032
      %v2034 = vrot.slane %v2033, 1
      %v2035 = vadd.f32 %v2033, %v2034
      %v2036 = vmul.f32 %v1999, %v1999
      %v2037 = vmul.f32 %v2000, %v2000
      %v2038 = vmul.f32 %v2001, %v2001
      %v2039 = vmul.f32 %v2002, %v2002
      %v2040 = vmul.f32 %v2003, %v2003
      %v2041 = vmul.f32 %v2004, %v2004
      %v2042 = vmul.f32 %v2005, %v2005
      %v2043 = vmul.f32 %v2006, %v2006
      %v2044 = vadd.f32 %v2036, %v2037
      %v2045 = vadd.f32 %v2044, %v2038
      %v2046 = vadd.f32 %v2045, %v2039
      %v2047 = vadd.f32 %v2046, %v2040
      %v2048 = vadd.f32 %v2047, %v2041
      %v2049 = vadd.f32 %v2048, %v2042
      %v2050 = vadd.f32 %v2049, %v2043
      %v2051 = vrot.slane %v2050, 4
      %v2052 = vadd.f32 %v2050, %v2051
      %v2053 = vrot.slane %v2052, 2
      %v2054 = vadd.f32 %v2052, %v2053
      %v2055 = vrot.slane %v2054, 1
      %v2056 = vadd.f32 %v2054, %v2055
      %vm2057 = vcmask 1040384
      %v2058 = vsel %vm2057, %v2035, %v2056
      %vm2059 = vcmask 1041408
      %v2060 = vsel %vm2059, %v2058, 0.0
      %2061 = vst [vmem:[%s331] sm:$0xff] %v2060
      %v2062 = vld [vmem:[%s2] sm:$0xf]
      %v2063 = vld [vmem:[%s2 + $0x4] sm:$0xf]
      %v2064 = vld [vmem:[%s2 + $0x8] sm:$0xf]
      %v2065 = vld [vmem:[%s2 + $0xc] sm:$0xf]
      %v2066 = vld [vmem:[%s2 + $0x10] sm:$0xf]
      %v2067 = vld [vmem:[%s2 + $0x14] sm:$0xf]
      %v2068 = vld [vmem:[%s2 + $0x18] sm:$0xf]
      %v2069 = vld [vmem:[%s2 + $0x1c] sm:$0xf]
      %v2070 = vld [vmem:[%s2 + $0x20] sm:$0xf]
      %v2071 = vld [vmem:[%s2 + $0x24] sm:$0xf]
      %v2072 = vld [vmem:[%s2 + $0x28] sm:$0xf]
      %v2073 = vld [vmem:[%s2 + $0x2c] sm:$0xf]
      %v2074 = vld [vmem:[%s2 + $0x30] sm:$0xf]
      %v2075 = vld [vmem:[%s2 + $0x34] sm:$0xf]
      %v2076 = vld [vmem:[%s2 + $0x38] sm:$0xf]
      %v2077 = vld [vmem:[%s2 + $0x3c] sm:$0xf]
      %v2094 = vunpack.c.l.b16 %v2062
      %v2095 = vunpack.c.l.b16 %v2063
      %v2096 = vunpack.c.l.b16 %v2064
      %v2097 = vunpack.c.l.b16 %v2065
      %v2098 = vunpack.c.l.b16 %v2066
      %v2099 = vunpack.c.l.b16 %v2067
      %v2100 = vunpack.c.l.b16 %v2068
      %v2101 = vunpack.c.l.b16 %v2069
      %v2102 = vunpack.c.l.b16 %v2070
      %v2103 = vunpack.c.l.b16 %v2071
      %v2104 = vunpack.c.l.b16 %v2072
      %v2105 = vunpack.c.l.b16 %v2073
      %v2106 = vunpack.c.l.b16 %v2074
      %v2107 = vunpack.c.l.b16 %v2075
      %v2108 = vunpack.c.l.b16 %v2076
      %v2109 = vunpack.c.l.b16 %v2077
      %v2110 = vpack.c.b16 %v2095, %v2094
      %v2111 = vpack.c.b16 %v2097, %v2096
      %v2112 = vpack.c.b16 %v2099, %v2098
      %v2113 = vpack.c.b16 %v2101, %v2100
      %v2114 = vpack.c.b16 %v2103, %v2102
      %v2115 = vpack.c.b16 %v2105, %v2104
      %v2116 = vpack.c.b16 %v2107, %v2106
      %v2117 = vpack.c.b16 %v2109, %v2108
      %2126 = vmatprep.subr.bf16.mxu0 0
      %2127 = vmatpush1.bf16.msra.mxu0 %v2117
      %2128 = vmatprep.subr.bf16.mxu0 0
      %2129 = vmatpush1.bf16.msra.mxu0 %v2116
      %2130 = vmatprep.subr.bf16.mxu0 0
      %2131 = vmatpush1.bf16.msra.mxu0 %v2115
      %2132 = vmatprep.subr.bf16.mxu0 0
      %2133 = vmatpush1.bf16.msra.mxu0 %v2114
      %2134 = vmatprep.subr.bf16.mxu0 0
      %2135 = vmatpush1.bf16.msra.mxu0 %v2113
      %2136 = vmatprep.subr.bf16.mxu0 0
      %2137 = vmatpush1.bf16.msra.mxu0 %v2112
      %2138 = vmatprep.subr.bf16.mxu0 0
      %2139 = vmatpush1.bf16.msra.mxu0 %v2111
      %2140 = vmatprep.subr.bf16.mxu0 0
      %2141 = vmatpush1.bf16.msra.mxu0 %v2110
      %2142 = vmatprep.subr.bf16.mxu0 0
      %2143 = vmatpush2.bf16.msra.mxu0 0
      %2144 = vmatprep.subr.bf16.mxu0 0
      %2145 = vmatpush2.bf16.msra.mxu0 0
      %2146 = vmatprep.subr.bf16.mxu0 0
      %2147 = vmatpush2.bf16.msra.mxu0 0
      %2148 = vmatprep.subr.bf16.mxu0 0
      %2149 = vmatpush2.bf16.msra.mxu0 0
      %2150 = vmatprep.subr.bf16.mxu0 0
      %2151 = vmatpush2.bf16.msra.mxu0 0
      %2152 = vmatprep.subr.bf16.mxu0 0
      %2153 = vmatpush2.bf16.msra.mxu0 0
      %2154 = vmatprep.subr.bf16.mxu0 0
      %2155 = vmatpush2.bf16.msra.mxu0 0
      %2156 = vmatprep.subr.bf16.mxu0 0
      %2157 = vmatpush2.bf16.msra.mxu0 0
      %2158 = vmatprep.mubr.bf16.mxu0 0
      %2159 = vmatmul.mubr.bf16.gmra.mxu0 %v886
      %v2160 = vpop.f32.mrf.mxu0
      %v2161 = vadd.f32 0.0, %v2160
      %v2162 = vpop.f32.mrf.mxu0
      %v2163 = vpop.f32.mrf.mxu0
      %v2164 = vadd.f32 0.0, %v2163
      %v2165 = vpop.f32.mrf.mxu0
      %2166 = vmatprep.mubr.bf16.mxu0 0
      %2167 = vmatmul.mubr.bf16.gmra.mxu0 %v887
      %v2168 = vpop.f32.mrf.mxu0
      %v2169 = vadd.f32 0.0, %v2168
      %v2170 = vpop.f32.mrf.mxu0
      %v2171 = vpop.f32.mrf.mxu0
      %v2172 = vadd.f32 0.0, %v2171
      %v2173 = vpop.f32.mrf.mxu0
      %2174 = vmatprep.mubr.bf16.mxu0 0
      %2175 = vmatmul.mubr.bf16.gmra.mxu0 %v888
      %v2176 = vpop.f32.mrf.mxu0
      %v2177 = vadd.f32 0.0, %v2176
      %v2178 = vpop.f32.mrf.mxu0
      %v2179 = vpop.f32.mrf.mxu0
      %v2180 = vadd.f32 0.0, %v2179
      %v2181 = vpop.f32.mrf.mxu0
      %2182 = vmatprep.mubr.bf16.mxu0 0
      %2183 = vmatmul.mubr.bf16.gmra.mxu0 %v889
      %v2184 = vpop.f32.mrf.mxu0
      %v2185 = vadd.f32 0.0, %v2184
      %v2186 = vpop.f32.mrf.mxu0
      %v2187 = vpop.f32.mrf.mxu0
      %v2188 = vadd.f32 0.0, %v2187
      %v2189 = vpop.f32.mrf.mxu0
      %2190 = vdwg.mxu0
      %v2191 = vpack.c.bf16 %v2161, %v2161
      %v2192 = vpack.c.bf16 %v2164, %v2164
      %v2193 = vpack.c.bf16 %v2169, %v2169
      %v2194 = vpack.c.bf16 %v2172, %v2172
      %v2195 = vpack.c.bf16 %v2177, %v2177
      %v2196 = vpack.c.bf16 %v2180, %v2180
      %v2197 = vpack.c.bf16 %v2185, %v2185
      %v2198 = vpack.c.bf16 %v2188, %v2188
      %2199 = vst [vmem:[%s340] sm:$0xf] %v2191
      %2200 = vst [vmem:[%s340 + $0x4] sm:$0xf] %v2192
      %2201 = vst [vmem:[%s340 + $0x8] sm:$0xf] %v2193
      %2202 = vst [vmem:[%s340 + $0xc] sm:$0xf] %v2194
      %2203 = vst [vmem:[%s340 + $0x10] sm:$0xf] %v2195
      %2204 = vst [vmem:[%s340 + $0x14] sm:$0xf] %v2196
      %2205 = vst [vmem:[%s340 + $0x18] sm:$0xf] %v2197
      %2206 = vst [vmem:[%s340 + $0x1c] sm:$0xf] %v2198
      %v2207 = vadd.f32 %v2161, %v2164
      %v2208 = vadd.f32 %v2207, %v2169
      %v2209 = vadd.f32 %v2208, %v2172
      %v2210 = vadd.f32 %v2209, %v2177
      %v2211 = vadd.f32 %v2210, %v2180
      %v2212 = vadd.f32 %v2211, %v2185
      %v2213 = vadd.f32 %v2212, %v2188
      %v2214 = vrot.slane %v2213, 4
      %v2215 = vadd.f32 %v2213, %v2214
      %v2216 = vrot.slane %v2215, 2
      %v2217 = vadd.f32 %v2215, %v2216
      %v2218 = vrot.slane %v2217, 1
      %v2219 = vadd.f32 %v2217, %v2218
      %v2220 = vmul.f32 %v2161, %v2161
      %v2221 = vmul.f32 %v2164, %v2164
      %v2222 = vmul.f32 %v2169, %v2169
      %v2223 = vmul.f32 %v2172, %v2172
      %v2224 = vmul.f32 %v2177, %v2177
      %v2225 = vmul.f32 %v2180, %v2180
      %v2226 = vmul.f32 %v2185, %v2185
      %v2227 = vmul.f32 %v2188, %v2188
      %v2228 = vadd.f32 %v2220, %v2221
      %v2229 = vadd.f32 %v2228, %v2222
      %v2230 = vadd.f32 %v2229, %v2223
      %v2231 = vadd.f32 %v2230, %v2224
      %v2232 = vadd.f32 %v2231, %v2225
      %v2233 = vadd.f32 %v2232, %v2226
      %v2234 = vadd.f32 %v2233, %v2227
      %v2235 = vrot.slane %v2234, 4
      %v2236 = vadd.f32 %v2234, %v2235
      %v2237 = vrot.slane %v2236, 2
      %v2238 = vadd.f32 %v2236, %v2237
      %v2239 = vrot.slane %v2238, 1
      %v2240 = vadd.f32 %v2238, %v2239
      %v2241 = vsel %vm2057, %v2219, %v2240
      %v2242 = vsel %vm2059, %v2241, 0.0
      %2243 = vst [vmem:[%s348] sm:$0xff] %v2242
      %s2244 = smul.u32 8, %s23
      %p2245 = scmp.lt.s32.totalorder %s22, 1
      %s2246 = scalar_select %p2245, %s22, 1
      %p2247 = scmp.lt.s32.totalorder %s2244, 7
      %s2248 = scalar_select %p2247, %s2244, 7
      %s2249 = smul.addr %s2246, 8
      %s2250 = sadd.s32 %s2248, %s2249
      %s2251 = smul.addr %s2250, 4
      %s2252 = scalar_lea.vmem %s3, %s2251
      %p2253 = scmp.lt.s32.totalorder %s22, 1
      %s2254 = scalar_select %p2253, %s22, 1
      %p2255 = scmp.lt.s32.totalorder %s23, 0
      %s2256 = scalar_select %p2255, %s23, 0
      %s2257 = sadd.s32 %s2256, %s2254
      %s2258 = smul.addr %s2257, 8
      %s2259 = scalar_lea.vmem %s4, %s2258
      %s2260 = smul.u32 8, %s23
      %p2261 = scmp.lt.s32.totalorder %s22, 1
      %s2262 = scalar_select %p2261, %s22, 1
      %p2263 = scmp.lt.s32.totalorder %s2260, 7
      %s2264 = scalar_select %p2263, %s2260, 7
      %s2265 = smul.addr %s2262, 8
      %s2266 = sadd.s32 %s2264, %s2265
      %s2267 = smul.addr %s2266, 4
      %s2268 = scalar_lea.vmem %s5, %s2267
      %p2269 = scmp.lt.s32.totalorder %s22, 1
      %s2270 = scalar_select %p2269, %s22, 1
      %p2271 = scmp.lt.s32.totalorder %s23, 0
      %s2272 = scalar_select %p2271, %s23, 0
      %s2273 = sadd.s32 %s2272, %s2270
      %s2274 = smul.addr %s2273, 8
      %s2275 = scalar_lea.vmem %s6, %s2274
      // Predicated region
      $region33: #{basic_block_forward.3} parent=31 // pred_check
        %p2276 = pneg %p120
      $region34: #{basic_block_forward.3} parent=31 // pred_check_branch
        %2278 = sbr.rel (%p2276) target = $region36
      $region35: #{basic_block_forward.3} parent=31 // pred_region
        %s2279 = smul.u32 8, %s23
      $region36: #{basic_block_forward.3} parent=31 // pred_fallthru
        _
      // Predicated region
      $region37: #{basic_block_forward.3} parent=31 // pred_check
        %p2280 = pneg %p148
      $region38: #{basic_block_forward.3} parent=31 // pred_check_branch
        %2282 = sbr.rel (%p2280) target = $region40
      $region39: #{basic_block_forward.3} parent=31 // pred_region
        _
      $region40: #{basic_block_forward.3} parent=31 // pred_fallthru
        _
      // Predicated region
      $region41: #{basic_block_forward.3} parent=31 // pred_check
        %p2283 = pneg %p176
      $region42: #{basic_block_forward.3} parent=31 // pred_check_branch
        %2285 = sbr.rel (%p2283) target = $region44
      $region43: #{basic_block_forward.3} parent=31 // pred_region
        %s2286 = smul.u32 8, %s23
      $region44: #{basic_block_forward.3} parent=31 // pred_fallthru
        _
      // Predicated region
      $region45: #{basic_block_forward.3} parent=31 // pred_check
        %p2287 = pneg %p204
      $region46: #{basic_block_forward.3} parent=31 // pred_check_branch
        %2289 = sbr.rel (%p2287) target = $region48
      $region47: #{basic_block_forward.3} parent=31 // pred_region
        _
      $region48: #{basic_block_forward.3} parent=31 // pred_fallthru
        _
    $region32: #{basic_block_forward.3} parent=5 // pred_fallthru
      _
    %p2290 = scmp.le.s32.totalorder 2, %s13
    // Predicated region
    $region49: #{basic_block_forward.3} parent=5 // pred_check
      %p2291 = pneg %p2290
    $region50: #{basic_block_forward.3} parent=5 // pred_check_branch
      %2293 = sbr.rel (%p2291) target = $region52
    $region51: #{basic_block_forward.3} parent=5 // pred_region
      %s2294 = ssub.s32 %s13, 2
      // Predicated region
      $region53: #{basic_block_forward.3} parent=51 // pred_check
        %p2295 = pneg %p126
      $region54: #{basic_block_forward.3} parent=51 // pred_check_branch
        %2297 = sbr.rel (%p2295) target = $region56
      $region55: #{basic_block_forward.3} parent=51 // pred_region
        %s2298 = smul.u32 8, %s25
        %p2299 = scmp.lt.s32.totalorder %s24, 1
        %s2300 = scalar_select %p2299, %s24, 1
        %p2301 = scmp.lt.s32.totalorder %s2298, 7
        %s2302 = scalar_select %p2301, %s2298, 7
        %s2303 = smul.addr %s2300, 8
        %s2304 = sadd.s32 %s2302, %s2303
        %s2305 = smul.addr %s2304, 4
        %s2306 = scalar_lea.vmem %s3, %s2305
      $region56: #{basic_block_forward.3} parent=51 // pred_fallthru
        _
      // Predicated region
      $region57: #{basic_block_forward.3} parent=51 // pred_check
        %p2307 = pneg %p154
      $region58: #{basic_block_forward.3} parent=51 // pred_check_branch
        %2309 = sbr.rel (%p2307) target = $region60
      $region59: #{basic_block_forward.3} parent=51 // pred_region
        %p2310 = scmp.lt.s32.totalorder %s24, 1
        %s2311 = scalar_select %p2310, %s24, 1
        %p2312 = scmp.lt.s32.totalorder %s25, 0
        %s2313 = scalar_select %p2312, %s25, 0
        %s2314 = sadd.s32 %s2313, %s2311
        %s2315 = smul.addr %s2314, 8
        %s2316 = scalar_lea.vmem %s4, %s2315
      $region60: #{basic_block_forward.3} parent=51 // pred_fallthru
        _
      // Predicated region
      $region61: #{basic_block_forward.3} parent=51 // pred_check
        %p2317 = pneg %p182
      $region62: #{basic_block_forward.3} parent=51 // pred_check_branch
        %2319 = sbr.rel (%p2317) target = $region64
      $region63: #{basic_block_forward.3} parent=51 // pred_region
        %s2320 = smul.u32 8, %s25
        %p2321 = scmp.lt.s32.totalorder %s24, 1
        %s2322 = scalar_select %p2321, %s24, 1
        %p2323 = scmp.lt.s32.totalorder %s2320, 7
        %s2324 = scalar_select %p2323, %s2320, 7
        %s2325 = smul.addr %s2322, 8
        %s2326 = sadd.s32 %s2324, %s2325
        %s2327 = smul.addr %s2326, 4
        %s2328 = scalar_lea.vmem %s5, %s2327
      $region64: #{basic_block_forward.3} parent=51 // pred_fallthru
        _
      // Predicated region
      $region65: #{basic_block_forward.3} parent=51 // pred_check
        %p2329 = pneg %p210
      $region66: #{basic_block_forward.3} parent=51 // pred_check_branch
        %2331 = sbr.rel (%p2329) target = $region68
      $region67: #{basic_block_forward.3} parent=51 // pred_region
        %p2332 = scmp.lt.s32.totalorder %s24, 1
        %s2333 = scalar_select %p2332, %s24, 1
        %p2334 = scmp.lt.s32.totalorder %s25, 0
        %s2335 = scalar_select %p2334, %s25, 0
        %s2336 = sadd.s32 %s2335, %s2333
        %s2337 = smul.addr %s2336, 8
        %s2338 = scalar_lea.vmem %s6, %s2337
      $region68: #{basic_block_forward.3} parent=51 // pred_fallthru
        _
    $region52: #{basic_block_forward.3} parent=5 // pred_fallthru
      _
  $region6: #{basic_block_forward.3} parent=0 // loop_footer
    %s17 = sadd.s32 1, %s13
  $region7: #{basic_block_forward.3} parent=0 // loop_footer_branch
    %12 = sbr.rel target = $region3
  $region8: #{basic_block_forward.3} parent=0 // loop_exit
    _

// kernel: basic_block_forward.4
$region0: #{basic_block_forward.4}
  #allocation0 [shape = 'u32[]', space=smem, size = 0x4, offset = 0x4, fixed_abs, tag = 'smem constant byte address 0x4 - core index']
  #allocation1 [shape = 'u32[144,128]{1,0:T(1,128)}', space=vmem, size = 0x12000, scoped, tag = 'internal scratch']
  %s0 = inlined_call_operand.vmem [shape: bf16[2,1,10,10,128], index: 0, kind: input, shape index: {}]
  %s1 = inlined_call_operand.vmem [shape: f32[1,128], index: 1, kind: input, shape index: {}]
  %s2 = inlined_call_operand.vmem [shape: f32[1,128], index: 2, kind: input, shape index: {}]
  %s3 = inlined_call_operand.vmem [shape: bf16[9,128,128], index: 3, kind: input, shape index: {}]
  %s4 = inlined_call_operand.vmem [shape: bf16[2,8,8,128], index: 4, kind: output, shape index: {0}]
  %s5 = inlined_call_operand.vmem [shape: f32[2,1,8,128], index: 5, kind: output, shape index: {1}]
  %6 = xla_tuple %s4, %s5
  %s7 = sld [smem:[#allocation0]]
  $region57: #{basic_block_forward.4} parent=0
    _
  %s9 = ssub.s32 1, %s7
  %s10 = scalar_select 0, %s9, %s7
  loop: start=0, step=1, limit=4
  $region2: #{basic_block_forward.4} parent=0 // loop_pre_header
    _
  $region3: #{basic_block_forward.4} parent=0 // loop_header
    %s12 = sphi 0, %s16
    %p13 = scmp.ge.s32.totalorder %s12, 4
    %s19 = sphi 0, %s31
    %s20 = sphi 0, %s27
    %s21 = sphi 0, %s19
    %s22 = sphi 0, %s20
    %s23 = sphi 0, %s21
    %s24 = sphi 0, %s22
    %s36 = sphi 0, %s38
    %s39 = sphi 0, %s36
    %s40 = sphi 0, %s39
    %s56 = sphi 0, %s40
    %s60 = sphi 0, %s60
    %s62 = sphi 0, %s60
    %s63 = sphi 0, %s62
    %s77 = sphi 0, %s63
    %s81 = sphi 0, %s81
    %s83 = sphi 0, %s81
    %s84 = sphi 0, %s83
    %s98 = sphi 0, %s84
    %s102 = sphi 0, %s102
    %s104 = sphi 0, %s102
    %s105 = sphi 0, %s104
    %s119 = sphi 0, %s105
    %s127 = sphi 0, %s129
    %s130 = sphi 0, %s127
    %s131 = sphi 0, %s130
    %s147 = sphi 0, %s131
    %s155 = sphi 0, %s157
    %s158 = sphi 0, %s155
    %s159 = sphi 0, %s158
    %s175 = sphi 0, %s159
  $region4: #{basic_block_forward.4} parent=0 // loop_header_branch
    %15 = sbr.rel (%p13) target = $region8
  $region5: #{basic_block_forward.4} parent=0 // loop_body
    %s17 = ssub.s32 %s12, 1
    %s18 = ssub.s32 %s12, 2
    %s25 = sadd.s32 1, %s20
    %p26 = scmp.ge.s32.totalorder %s25, 1
    %s27 = scalar_select %p26, 0, %s25
    %s28 = sadd.s32 1, %s19
    %s29 = scalar_select %p26, %s28, %s19
    %p30 = scmp.ge.s32.totalorder %s29, 2
    %s31 = scalar_select %p30, 0, %s29
    %s32 = ssub.s32 %s19, %s31
    %s33 = ssub.s32 %s20, %s27
    %s34 = sor.u32 %s32, %s33
    %p35 = scmp.eq.s32.totalorder %s34, 0
    %s37 = sadd.s32 %s36, 1
    %s38 = scalar_select %p35, %s36, %s37
    %p41 = pneg %p35
    %p42 = scmp.eq.s32.totalorder %s12, 1
    %p43 = por %p41, %p42
    %p44 = scmp.ne.s32.totalorder %s36, %s39
    %p45 = scmp.eq.s32.totalorder %s12, 0
    %p46 = por %p44, %p45
    %p47 = scmp.ne.s32.totalorder %s36, %s39
    %p48 = scmp.eq.s32.totalorder %s17, 1
    %p49 = por %p47, %p48
    %p50 = scmp.ne.s32.totalorder %s39, %s40
    %p51 = scmp.eq.s32.totalorder %s17, 0
    %p52 = por %p50, %p51
    %p53 = scmp.ne.s32.totalorder %s39, %s40
    %p54 = scmp.eq.s32.totalorder %s18, 1
    %p55 = por %p53, %p54
    %p57 = scmp.ne.s32.totalorder %s40, %s56
    %p58 = scmp.eq.s32.totalorder %s18, 0
    %p59 = por %p57, %p58
    %s61 = sadd.s32 %s60, 1
    %p64 = scmp.eq.s32.totalorder %s12, 1
    %p65 = scmp.ne.s32.totalorder %s60, %s62
    %p66 = scmp.eq.s32.totalorder %s12, 0
    %p67 = por %p65, %p66
    %p68 = scmp.ne.s32.totalorder %s60, %s62
    %p69 = scmp.eq.s32.totalorder %s17, 1
    %p70 = por %p68, %p69
    %p71 = scmp.ne.s32.totalorder %s62, %s63
    %p72 = scmp.eq.s32.totalorder %s17, 0
    %p73 = por %p71, %p72
    %p74 = scmp.ne.s32.totalorder %s62, %s63
    %p75 = scmp.eq.s32.totalorder %s18, 1
    %p76 = por %p74, %p75
    %p78 = scmp.ne.s32.totalorder %s63, %s77
    %p79 = scmp.eq.s32.totalorder %s18, 0
    %p80 = por %p78, %p79
    %s82 = sadd.s32 %s81, 1
    %p85 = scmp.eq.s32.totalorder %s12, 1
    %p86 = scmp.ne.s32.totalorder %s81, %s83
    %p87 = scmp.eq.s32.totalorder %s12, 0
    %p88 = por %p86, %p87
    %p89 = scmp.ne.s32.totalorder %s81, %s83
    %p90 = scmp.eq.s32.totalorder %s17, 1
    %p91 = por %p89, %p90
    %p92 = scmp.ne.s32.totalorder %s83, %s84
    %p93 = scmp.eq.s32.totalorder %s17, 0
    %p94 = por %p92, %p93
    %p95 = scmp.ne.s32.totalorder %s83, %s84
    %p96 = scmp.eq.s32.totalorder %s18, 1
    %p97 = por %p95, %p96
    %p99 = scmp.ne.s32.totalorder %s84, %s98
    %p100 = scmp.eq.s32.totalorder %s18, 0
    %p101 = por %p99, %p100
    %s103 = sadd.s32 %s102, 1
    %p106 = scmp.eq.s32.totalorder %s12, 1
    %p107 = scmp.ne.s32.totalorder %s102, %s104
    %p108 = scmp.eq.s32.totalorder %s12, 0
    %p109 = por %p107, %p108
    %p110 = scmp.ne.s32.totalorder %s102, %s104
    %p111 = scmp.eq.s32.totalorder %s17, 1
    %p112 = por %p110, %p111
    %p113 = scmp.ne.s32.totalorder %s104, %s105
    %p114 = scmp.eq.s32.totalorder %s17, 0
    %p115 = por %p113, %p114
    %p116 = scmp.ne.s32.totalorder %s104, %s105
    %p117 = scmp.eq.s32.totalorder %s18, 1
    %p118 = por %p116, %p117
    %p120 = scmp.ne.s32.totalorder %s105, %s119
    %p121 = scmp.eq.s32.totalorder %s18, 0
    %p122 = por %p120, %p121
    %s123 = ssub.s32 %s19, %s31
    %s124 = ssub.s32 %s20, %s27
    %s125 = sor.u32 %s123, %s124
    %p126 = scmp.eq.s32.totalorder %s125, 0
    %s128 = sadd.s32 %s127, 1
    %s129 = scalar_select %p126, %s127, %s128
    %p132 = pneg %p126
    %p133 = scmp.eq.s32.totalorder %s12, 1
    %p134 = por %p132, %p133
    %p135 = scmp.ne.s32.totalorder %s127, %s130
    %p136 = scmp.eq.s32.totalorder %s12, 0
    %p137 = por %p135, %p136
    %p138 = scmp.ne.s32.totalorder %s127, %s130
    %p139 = scmp.eq.s32.totalorder %s17, 1
    %p140 = por %p138, %p139
    %p141 = scmp.ne.s32.totalorder %s130, %s131
    %p142 = scmp.eq.s32.totalorder %s17, 0
    %p143 = por %p141, %p142
    %p144 = scmp.ne.s32.totalorder %s130, %s131
    %p145 = scmp.eq.s32.totalorder %s18, 1
    %p146 = por %p144, %p145
    %p148 = scmp.ne.s32.totalorder %s131, %s147
    %p149 = scmp.eq.s32.totalorder %s18, 0
    %p150 = por %p148, %p149
    %s151 = ssub.s32 %s19, %s31
    %s152 = ssub.s32 %s20, %s27
    %s153 = sor.u32 %s151, %s152
    %p154 = scmp.eq.s32.totalorder %s153, 0
    %s156 = sadd.s32 %s155, 1
    %s157 = scalar_select %p154, %s155, %s156
    %p160 = pneg %p154
    %p161 = scmp.eq.s32.totalorder %s12, 1
    %p162 = por %p160, %p161
    %p163 = scmp.ne.s32.totalorder %s155, %s158
    %p164 = scmp.eq.s32.totalorder %s12, 0
    %p165 = por %p163, %p164
    %p166 = scmp.ne.s32.totalorder %s155, %s158
    %p167 = scmp.eq.s32.totalorder %s17, 1
    %p168 = por %p166, %p167
    %p169 = scmp.ne.s32.totalorder %s158, %s159
    %p170 = scmp.eq.s32.totalorder %s17, 0
    %p171 = por %p169, %p170
    %p172 = scmp.ne.s32.totalorder %s158, %s159
    %p173 = scmp.eq.s32.totalorder %s18, 1
    %p174 = por %p172, %p173
    %p176 = scmp.ne.s32.totalorder %s159, %s175
    %p177 = scmp.eq.s32.totalorder %s18, 0
    %p178 = por %p176, %p177
    %p179 = scmp.le.s32.totalorder 1, %s12
    %p180 = scmp.lt.s32.totalorder %s12, 3
    %p181 = pnand %p179, %p180
    %p182 = pneg %p181
    // Predicated region
    $region9: #{basic_block_forward.4} parent=5 // pred_check
      _
    $region10: #{basic_block_forward.4} parent=5 // pred_check_branch
      %184 = sbr.rel (%p181) target = $region12
    $region11: #{basic_block_forward.4} parent=5 // pred_region
      %s185 = ssub.s32 %s12, 1
      // Predicated region
      $region13: #{basic_block_forward.4} parent=11 // pred_check
        %p186 = pneg %p73
      $region14: #{basic_block_forward.4} parent=11 // pred_check_branch
        %188 = sbr.rel (%p186) target = $region16
      $region15: #{basic_block_forward.4} parent=11 // pred_region
        _
      $region16: #{basic_block_forward.4} parent=11 // pred_fallthru
        _
      // Predicated region
      $region17: #{basic_block_forward.4} parent=11 // pred_check
        %p189 = pneg %p94
      $region18: #{basic_block_forward.4} parent=11 // pred_check_branch
        %191 = sbr.rel (%p189) target = $region20
      $region19: #{basic_block_forward.4} parent=11 // pred_region
        _
      $region20: #{basic_block_forward.4} parent=11 // pred_fallthru
        _
      // Predicated region
      $region21: #{basic_block_forward.4} parent=11 // pred_check
        %p192 = pneg %p115
      $region22: #{basic_block_forward.4} parent=11 // pred_check_branch
        %194 = sbr.rel (%p192) target = $region24
      $region23: #{basic_block_forward.4} parent=11 // pred_region
        _
      $region24: #{basic_block_forward.4} parent=11 // pred_fallthru
        _
    $region12: #{basic_block_forward.4} parent=5 // pred_fallthru
      _
    %p195 = scmp.lt.s32.totalorder %s12, 2
    // Predicated region
    $region25: #{basic_block_forward.4} parent=5 // pred_check
      %p196 = pneg %p195
    $region26: #{basic_block_forward.4} parent=5 // pred_check_branch
      %198 = sbr.rel (%p196) target = $region28
    $region27: #{basic_block_forward.4} parent=5 // pred_region
      // Predicated region
      $region29: #{basic_block_forward.4} parent=27 // pred_check
        %p199 = pneg %p46
      $region30: #{basic_block_forward.4} parent=27 // pred_check_branch
        %201 = sbr.rel (%p199) target = $region32
      $region31: #{basic_block_forward.4} parent=27 // pred_region
        %p202 = scmp.lt.s32.totalorder %s19, 1
        %s203 = scalar_select %p202, %s19, 1
        %p204 = scmp.lt.s32.totalorder %s20, 0
        %s205 = scalar_select %p204, %s20, 0
        %s206 = smul.addr %s205, 20
        %s207 = smul.addr %s203, 20
        %s208 = sadd.s32 %s206, %s207
        %s209 = smul.addr %s208, 4
        %s210 = scalar_lea.vmem %s0, %s209
      $region32: #{basic_block_forward.4} parent=27 // pred_fallthru
        _
    $region28: #{basic_block_forward.4} parent=5 // pred_fallthru
      _
    %p211 = scmp.le.s32.totalorder 1, %s12
    %p212 = scmp.lt.s32.totalorder %s12, 3
    %p213 = pnand %p211, %p212
    %p214 = pneg %p213
    // Predicated region
    $region33: #{basic_block_forward.4} parent=5 // pred_check
      _
    $region34: #{basic_block_forward.4} parent=5 // pred_check_branch
      %216 = sbr.rel (%p213) target = $region36
    $region35: #{basic_block_forward.4} parent=5 // pred_region
      %s217 = ssub.s32 %s12, 1
      %p218 = scmp.lt.s32.totalorder %s21, 1
      %s219 = scalar_select %p218, %s21, 1
      %p220 = scmp.lt.s32.totalorder %s22, 0
      %s221 = scalar_select %p220, %s22, 0
      %s222 = smul.addr %s221, 20
      %s223 = smul.addr %s219, 20
      %s224 = sadd.s32 %s222, %s223
      %s225 = smul.addr %s224, 4
      %s226 = scalar_lea.vmem %s0, %s225
      %p227 = pneg %p52
      %p228 = pneg %p49
      %p229 = pneg %p73
      %p230 = pneg %p70
      %p231 = pneg %p94
      %p232 = pneg %p91
      %p233 = pneg %p115
      %p234 = pneg %p112
      %p235 = pneg %p143
      %p236 = pneg %p140
      %s237 = smul.u32 8, %s22
      %p238 = scmp.lt.s32.totalorder %s21, 1
      %s239 = scalar_select %p238, %s21, 1
      %p240 = scmp.lt.s32.totalorder %s237, 7
      %s241 = scalar_select %p240, %s237, 7
      %s242 = smul.addr %s239, 8
      %s243 = sadd.s32 %s241, %s242
      %s244 = smul.addr %s243, 4
      %s245 = scalar_lea.vmem %s4, %s244
      %p246 = pneg %p171
      %p247 = pneg %p168
      %p248 = scmp.lt.s32.totalorder %s21, 1
      %s249 = scalar_select %p248, %s21, 1
      %p250 = scmp.lt.s32.totalorder %s22, 0
      %s251 = scalar_select %p250, %s22, 0
      %s252 = sadd.s32 %s251, %s249
      %s253 = smul.addr %s252, 8
      %s254 = scalar_lea.vmem %s5, %s253
      %p255 = scmp.lt.s32.totalorder %s21, 1
      %s256 = scalar_select %p255, %s21, 1
      %p257 = scmp.lt.s32.totalorder %s22, 0
      %s258 = scalar_select %p257, %s22, 0
      %s259 = smul.addr %s258, 20
      %s260 = smul.addr %s256, 20
      %s261 = sadd.s32 %s259, %s260
      %s262 = smul.addr %s261, 4
      %s263 = scalar_lea.vmem %s0, %s262
      %s264 = smul.u32 8, %s22
      %p265 = scmp.lt.s32.totalorder %s21, 1
      %s266 = scalar_select %p265, %s21, 1
      %p267 = scmp.lt.s32.totalorder %s264, 7
      %s268 = scalar_select %p267, %s264, 7
      %s269 = smul.addr %s266, 8
      %s270 = sadd.s32 %s268, %s269
      %s271 = smul.addr %s270, 4
      %s272 = scalar_lea.vmem %s4, %s271
      %s273 = smul.u32 8, %s22
      %p274 = scmp.lt.s32.totalorder %s21, 1
      %s275 = scalar_select %p274, %s21, 1
      %p276 = scmp.lt.s32.totalorder %s22, 0
      %s277 = scalar_select %p276, %s22, 0
      %s278 = sadd.s32 %s277, %s275
      %s279 = smul.addr %s278, 8
      %s280 = scalar_lea.vmem %s5, %s279
      %v282 = vld [vmem:[%s263] sm:$0xf]
      %v283 = vld [vmem:[%s263 + $0x4] sm:$0x1]
      %v284 = vld [vmem:[%s263 + $0x8] sm:$0xf]
      %v285 = vld [vmem:[%s263 + $0xc] sm:$0x1]
      %v286 = vld [vmem:[%s263 + $0x10] sm:$0xf]
      %v287 = vld [vmem:[%s263 + $0x14] sm:$0x1]
      %v288 = vld [vmem:[%s263 + $0x18] sm:$0xf]
      %v289 = vld [vmem:[%s263 + $0x1c] sm:$0x1]
      %v290 = vld [vmem:[%s263 + $0x20] sm:$0xf]
      %v291 = vld [vmem:[%s263 + $0x24] sm:$0x1]
      %v292 = vld [vmem:[%s263 + $0x28] sm:$0xf]
      %v293 = vld [vmem:[%s263 + $0x2c] sm:$0x1]
      %v294 = vld [vmem:[%s263 + $0x30] sm:$0xf]
      %v295 = vld [vmem:[%s263 + $0x34] sm:$0x1]
      %v296 = vld [vmem:[%s263 + $0x38] sm:$0xf]
      %v297 = vld [vmem:[%s263 + $0x3c] sm:$0x1]
      %v298 = vld [vmem:[%s263 + $0x40] sm:$0xf]
      %v299 = vld [vmem:[%s263 + $0x44] sm:$0x1]
      %v300 = vld [vmem:[%s263 + $0x48] sm:$0xf]
      %v301 = vld [vmem:[%s263 + $0x4c] sm:$0x1]
      %v302 = vunpack.c.l.bf16 %v282
      %v303 = vunpack.c.l.bf16 %v283
      %v304 = vunpack.c.l.bf16 %v284
      %v305 = vunpack.c.l.bf16 %v285
      %v306 = vunpack.c.l.bf16 %v286
      %v307 = vunpack.c.l.bf16 %v287
      %v308 = vunpack.c.l.bf16 %v288
      %v309 = vunpack.c.l.bf16 %v289
      %v310 = vunpack.c.l.bf16 %v290
      %v311 = vunpack.c.l.bf16 %v291
      %v312 = vunpack.c.l.bf16 %v292
      %v313 = vunpack.c.l.bf16 %v293
      %v314 = vunpack.c.l.bf16 %v294
      %v315 = vunpack.c.l.bf16 %v295
      %v316 = vunpack.c.l.bf16 %v296
      %v317 = vunpack.c.l.bf16 %v297
      %v318 = vunpack.c.l.bf16 %v298
      %v319 = vunpack.c.l.bf16 %v299
      %v320 = vunpack.c.l.bf16 %v300
      %v321 = vunpack.c.l.bf16 %v301
      %v322 = vld [vmem:[%s1] sm:$0x1]
      %v324 = vlaneseq
      %v325 = vshrl.u32 %v324, 7
      %v326 = vsub.s32 0, %v325
      %v327 = vrot.slane %v322, %v326
      %v329 = vmul.f32 %v302, %v327
      %v330 = vmul.f32 %v303, %v327
      %v331 = vmul.f32 %v304, %v327
      %v332 = vmul.f32 %v305, %v327
      %v333 = vmul.f32 %v306, %v327
      %v334 = vmul.f32 %v307, %v327
      %v335 = vmul.f32 %v308, %v327
      %v336 = vmul.f32 %v309, %v327
      %v337 = vmul.f32 %v310, %v327
      %v338 = vmul.f32 %v311, %v327
      %v339 = vmul.f32 %v312, %v327
      %v340 = vmul.f32 %v313, %v327
      %v341 = vmul.f32 %v314, %v327
      %v342 = vmul.f32 %v315, %v327
      %v343 = vmul.f32 %v316, %v327
      %v344 = vmul.f32 %v317, %v327
      %v345 = vmul.f32 %v318, %v327
      %v346 = vmul.f32 %v319, %v327
      %v347 = vmul.f32 %v320, %v327
      %v348 = vmul.f32 %v321, %v327
      %v349 = vld [vmem:[%s2] sm:$0x1]
      %v351 = vlaneseq
      %v352 = vshrl.u32 %v351, 7
      %v353 = vsub.s32 0, %v352
      %v354 = vrot.slane %v349, %v353
      %v356 = vadd.f32 %v329, %v354
      %v357 = vadd.f32 %v330, %v354
      %v358 = vadd.f32 %v331, %v354
      %v359 = vadd.f32 %v332, %v354
      %v360 = vadd.f32 %v333, %v354
      %v361 = vadd.f32 %v334, %v354
      %v362 = vadd.f32 %v335, %v354
      %v363 = vadd.f32 %v336, %v354
      %v364 = vadd.f32 %v337, %v354
      %v365 = vadd.f32 %v338, %v354
      %v366 = vadd.f32 %v339, %v354
      %v367 = vadd.f32 %v340, %v354
      %v368 = vadd.f32 %v341, %v354
      %v369 = vadd.f32 %v342, %v354
      %v370 = vadd.f32 %v343, %v354
      %v371 = vadd.f32 %v344, %v354
      %v372 = vadd.f32 %v345, %v354
      %v373 = vadd.f32 %v346, %v354
      %v374 = vadd.f32 %v347, %v354
      %v375 = vadd.f32 %v348, %v354
      %v376 = vmax.f32 %v356, 0.0
      %v377 = vmax.f32 %v357, 0.0
      %v378 = vmax.f32 %v358, 0.0
      %v379 = vmax.f32 %v359, 0.0
      %v380 = vmax.f32 %v360, 0.0
      %v381 = vmax.f32 %v361, 0.0
      %v382 = vmax.f32 %v362, 0.0
      %v383 = vmax.f32 %v363, 0.0
      %v384 = vmax.f32 %v364, 0.0
      %v385 = vmax.f32 %v365, 0.0
      %v386 = vmax.f32 %v366, 0.0
      %v387 = vmax.f32 %v367, 0.0
      %v388 = vmax.f32 %v368, 0.0
      %v389 = vmax.f32 %v369, 0.0
      %v390 = vmax.f32 %v370, 0.0
      %v391 = vmax.f32 %v371, 0.0
      %v392 = vmax.f32 %v372, 0.0
      %v393 = vmax.f32 %v373, 0.0
      %v394 = vmax.f32 %v374, 0.0
      %v395 = vmax.f32 %v375, 0.0
      %s396 = smul.u32 %s22, 8
      %v397 = vstv %s396
      %v398 = vadd.s32 %v397, 1
      %v399 = vadd.s32 %v397, 2
      %v400 = vadd.s32 %v397, 3
      %v401 = vadd.s32 %v397, 4
      %v402 = vadd.s32 %v397, 5
      %v403 = vadd.s32 %v397, 6
      %v404 = vadd.s32 %v397, 7
      %v405 = vadd.s32 %v397, 8
      %v406 = vadd.s32 %v397, 9
      %v407 = vlaneseq
      %v408 = vshrl.u32 %v407, 7
      %v409 = vadd.s32 %v408, 8
      %vm410 = vcmp.ge.s32.totalorder %v397, 1
      %vm411 = vcmp.ge.s32.totalorder %v398, 1
      %vm412 = vcmp.ge.s32.totalorder %v399, 1
      %vm413 = vcmp.ge.s32.totalorder %v400, 1
      %vm414 = vcmp.ge.s32.totalorder %v401, 1
      %vm415 = vcmp.ge.s32.totalorder %v402, 1
      %vm416 = vcmp.ge.s32.totalorder %v403, 1
      %vm417 = vcmp.ge.s32.totalorder %v404, 1
      %vm418 = vcmp.ge.s32.totalorder %v405, 1
      %vm419 = vcmp.ge.s32.totalorder %v406, 1
      %vm420 = vcmp.le.s32.totalorder %v397, 8
      %vm421 = vcmp.le.s32.totalorder %v398, 8
      %vm422 = vcmp.le.s32.totalorder %v399, 8
      %vm423 = vcmp.le.s32.totalorder %v400, 8
      %vm424 = vcmp.le.s32.totalorder %v401, 8
      %vm425 = vcmp.le.s32.totalorder %v402, 8
      %vm426 = vcmp.le.s32.totalorder %v403, 8
      %vm427 = vcmp.le.s32.totalorder %v404, 8
      %vm428 = vcmp.le.s32.totalorder %v405, 8
      %vm429 = vcmp.le.s32.totalorder %v406, 8
      %vm430 = vmand %vm410, %vm420
      %vm431 = vmand %vm411, %vm421
      %vm432 = vmand %vm412, %vm422
      %vm433 = vmand %vm413, %vm423
      %vm434 = vmand %vm414, %vm424
      %vm435 = vmand %vm415, %vm425
      %vm436 = vmand %vm416, %vm426
      %vm437 = vmand %vm417, %vm427
      %vm438 = vmand %vm418, %vm428
      %vm439 = vmand %vm419, %vm429
      %vm440 = vcmp.ge.s32.totalorder %v408, 1
      %vm441 = vcmp.ge.s32.totalorder %v409, 1
      %vm442 = vmand %vm430, %vm440
      %vm443 = vmand %vm430, %vm441
      %vm444 = vmand %vm431, %vm440
      %vm445 = vmand %vm431, %vm441
      %vm446 = vmand %vm432, %vm440
      %vm447 = vmand %vm432, %vm441
      %vm448 = vmand %vm433, %vm440
      %vm449 = vmand %vm433, %vm441
      %vm450 = vmand %vm434, %vm440
      %vm451 = vmand %vm434, %vm441
      %vm452 = vmand %vm435, %vm440
      %vm453 = vmand %vm435, %vm441
      %vm454 = vmand %vm436, %vm440
      %vm455 = vmand %vm436, %vm441
      %vm456 = vmand %vm437, %vm440
      %vm457 = vmand %vm437, %vm441
      %vm458 = vmand %vm438, %vm440
      %vm459 = vmand %vm438, %vm441
      %vm460 = vmand %vm439, %vm440
      %vm461 = vmand %vm439, %vm441
      %vm462 = vcmp.le.s32.totalorder %v408, 8
      %vm463 = vcmp.le.s32.totalorder %v409, 8
      %vm464 = vmand %vm442, %vm462
      %vm465 = vmand %vm443, %vm463
      %vm466 = vmand %vm444, %vm462
      %vm467 = vmand %vm445, %vm463
      %vm468 = vmand %vm446, %vm462
      %vm469 = vmand %vm447, %vm463
      %vm470 = vmand %vm448, %vm462
      %vm471 = vmand %vm449, %vm463
      %vm472 = vmand %vm450, %vm462
      %vm473 = vmand %vm451, %vm463
      %vm474 = vmand %vm452, %vm462
      %vm475 = vmand %vm453, %vm463
      %vm476 = vmand %vm454, %vm462
      %vm477 = vmand %vm455, %vm463
      %vm478 = vmand %vm456, %vm462
      %vm479 = vmand %vm457, %vm463
      %vm480 = vmand %vm458, %vm462
      %vm481 = vmand %vm459, %vm463
      %vm482 = vmand %vm460, %vm462
      %vm483 = vmand %vm461, %vm463
      %v484 = vsel %vm464, 1, 0
      %v485 = vsel %vm465, 1, 0
      %v486 = vsel %vm466, 1, 0
      %v487 = vsel %vm467, 1, 0
      %v488 = vsel %vm468, 1, 0
      %v489 = vsel %vm469, 1, 0
      %v490 = vsel %vm470, 1, 0
      %v491 = vsel %vm471, 1, 0
      %v492 = vsel %vm472, 1, 0
      %v493 = vsel %vm473, 1, 0
      %v494 = vsel %vm474, 1, 0
      %v495 = vsel %vm475, 1, 0
      %v496 = vsel %vm476, 1, 0
      %v497 = vsel %vm477, 1, 0
      %v498 = vsel %vm478, 1, 0
      %v499 = vsel %vm479, 1, 0
      %v500 = vsel %vm480, 1, 0
      %v501 = vsel %vm481, 1, 0
      %v502 = vsel %vm482, 1, 0
      %v503 = vsel %vm483, 1, 0
      %vm504 = vcmp.eq.s32.totalorder %v484, 1
      %vm505 = vcmp.eq.s32.totalorder %v485, 1
      %vm506 = vcmp.eq.s32.totalorder %v486, 1
      %vm507 = vcmp.eq.s32.totalorder %v487, 1
      %vm508 = vcmp.eq.s32.totalorder %v488, 1
      %vm509 = vcmp.eq.s32.totalorder %v489, 1
      %vm510 = vcmp.eq.s32.totalorder %v490, 1
      %vm511 = vcmp.eq.s32.totalorder %v491, 1
      %vm512 = vcmp.eq.s32.totalorder %v492, 1
      %vm513 = vcmp.eq.s32.totalorder %v493, 1
      %vm514 = vcmp.eq.s32.totalorder %v494, 1
      %vm515 = vcmp.eq.s32.totalorder %v495, 1
      %vm516 = vcmp.eq.s32.totalorder %v496, 1
      %vm517 = vcmp.eq.s32.totalorder %v497, 1
      %vm518 = vcmp.eq.s32.totalorder %v498, 1
      %vm519 = vcmp.eq.s32.totalorder %v499, 1
      %vm520 = vcmp.eq.s32.totalorder %v500, 1
      %vm521 = vcmp.eq.s32.totalorder %v501, 1
      %vm522 = vcmp.eq.s32.totalorder %v502, 1
      %vm523 = vcmp.eq.s32.totalorder %v503, 1
      %v524 = vsel %vm504, %v376, 0.0
      %v525 = vsel %vm505, %v377, 0.0
      %v526 = vsel %vm506, %v378, 0.0
      %v527 = vsel %vm507, %v379, 0.0
      %v528 = vsel %vm508, %v380, 0.0
      %v529 = vsel %vm509, %v381, 0.0
      %v530 = vsel %vm510, %v382, 0.0
      %v531 = vsel %vm511, %v383, 0.0
      %v532 = vsel %vm512, %v384, 0.0
      %v533 = vsel %vm513, %v385, 0.0
      %v534 = vsel %vm514, %v386, 0.0
      %v535 = vsel %vm515, %v387, 0.0
      %v536 = vsel %vm516, %v388, 0.0
      %v537 = vsel %vm517, %v389, 0.0
      %v538 = vsel %vm518, %v390, 0.0
      %v539 = vsel %vm519, %v391, 0.0
      %v540 = vsel %vm520, %v392, 0.0
      %v541 = vsel %vm521, %v393, 0.0
      %v542 = vsel %vm522, %v394, 0.0
      %v543 = vsel %vm523, %v395, 0.0
      %v544 = vpack.c.bf16 %v525, %v524
      %v545 = vpack.c.bf16 %v527, %v526
      %v546 = vpack.c.bf16 %v529, %v528
      %v547 = vpack.c.bf16 %v531, %v530
      %v548 = vpack.c.bf16 %v533, %v532
      %v549 = vpack.c.bf16 %v535, %v534
      %v550 = vpack.c.bf16 %v537, %v536
      %v551 = vpack.c.bf16 %v539, %v538
      %v552 = vpack.c.bf16 %v541, %v540
      %v553 = vpack.c.bf16 %v543, %v542
      %v554 = vld [vmem:[%s3] sm:$0xf]
      %v555 = vld [vmem:[%s3 + $0x4] sm:$0xf]
      %v556 = vld [vmem:[%s3 + $0x8] sm:$0xf]
      %v557 = vld [vmem:[%s3 + $0xc] sm:$0xf]
      %v558 = vld [vmem:[%s3 + $0x10] sm:$0xf]
      %v559 = vld [vmem:[%s3 + $0x14] sm:$0xf]
      %v560 = vld [vmem:[%s3 + $0x18] sm:$0xf]
      %v561 = vld [vmem:[%s3 + $0x1c] sm:$0xf]
      %v562 = vld [vmem:[%s3 + $0x20] sm:$0xf]
      %v563 = vld [vmem:[%s3 + $0x24] sm:$0xf]
      %v564 = vld [vmem:[%s3 + $0x28] sm:$0xf]
      %v565 = vld [vmem:[%s3 + $0x2c] sm:$0xf]
      %v566 = vld [vmem:[%s3 + $0x30] sm:$0xf]
      %v567 = vld [vmem:[%s3 + $0x34] sm:$0xf]
      %v568 = vld [vmem:[%s3 + $0x38] sm:$0xf]
      %v569 = vld [vmem:[%s3 + $0x3c] sm:$0xf]
      %s570 = scalar_lea.vmem %s3, 192
      %v571 = vld [vmem:[%s570] sm:$0xf]
      %v572 = vld [vmem:[%s570 + $0x4] sm:$0xf]
      %v573 = vld [vmem:[%s570 + $0x8] sm:$0xf]
      %v574 = vld [vmem:[%s570 + $0xc] sm:$0xf]
      %v575 = vld [vmem:[%s570 + $0x10] sm:$0xf]
      %v576 = vld [vmem:[%s570 + $0x14] sm:$0xf]
      %v577 = vld [vmem:[%s570 + $0x18] sm:$0xf]
      %v578 = vld [vmem:[%s570 + $0x1c] sm:$0xf]
      %v579 = vld [vmem:[%s570 + $0x20] sm:$0xf]
      %v580 = vld [vmem:[%s570 + $0x24] sm:$0xf]
      %v581 = vld [vmem:[%s570 + $0x28] sm:$0xf]
      %v582 = vld [vmem:[%s570 + $0x2c] sm:$0xf]
      %v583 = vld [vmem:[%s570 + $0x30] sm:$0xf]
      %v584 = vld [vmem:[%s570 + $0x34] sm:$0xf]
      %v585 = vld [vmem:[%s570 + $0x38] sm:$0xf]
      %v586 = vld [vmem:[%s570 + $0x3c] sm:$0xf]
      %v595 = vunpack.c.l.b16 %v545
      %v596 = vunpack.c.l.b16 %v546
      %v597 = vunpack.c.l.b16 %v547
      %v598 = vunpack.c.l.b16 %v548
      %v599 = vunpack.c.l.b16 %v549
      %v600 = vunpack.c.l.b16 %v550
      %v601 = vunpack.c.l.b16 %v551
      %v602 = vunpack.c.l.b16 %v552
      %v603 = vpack.c.b16 %v596, %v595
      %v604 = vpack.c.b16 %v598, %v597
      %v605 = vpack.c.b16 %v600, %v599
      %v606 = vpack.c.b16 %v602, %v601
      %v627 = vunpack.c.l.b16 %v571
      %v628 = vunpack.c.l.b16 %v572
      %v629 = vunpack.c.l.b16 %v573
      %v630 = vunpack.c.l.b16 %v574
      %v631 = vunpack.c.l.b16 %v575
      %v632 = vunpack.c.l.b16 %v576
      %v633 = vunpack.c.l.b16 %v577
      %v634 = vunpack.c.l.b16 %v578
      %v635 = vunpack.c.l.b16 %v579
      %v636 = vunpack.c.l.b16 %v580
      %v637 = vunpack.c.l.b16 %v581
      %v638 = vunpack.c.l.b16 %v582
      %v639 = vunpack.c.l.b16 %v583
      %v640 = vunpack.c.l.b16 %v584
      %v641 = vunpack.c.l.b16 %v585
      %v642 = vunpack.c.l.b16 %v586
      %v643 = vpack.c.b16 %v628, %v627
      %v644 = vpack.c.b16 %v630, %v629
      %v645 = vpack.c.b16 %v632, %v631
      %v646 = vpack.c.b16 %v634, %v633
      %v647 = vpack.c.b16 %v636, %v635
      %v648 = vpack.c.b16 %v638, %v637
      %v649 = vpack.c.b16 %v640, %v639
      %v650 = vpack.c.b16 %v642, %v641
      %659 = vmatprep.subr.bf16.mxu0 0
      %660 = vmatpush1.bf16.msra.mxu0 %v650
      %661 = vmatprep.subr.bf16.mxu0 0
      %662 = vmatpush1.bf16.msra.mxu0 %v649
      %663 = vmatprep.subr.bf16.mxu0 0
      %664 = vmatpush1.bf16.msra.mxu0 %v648
      %665 = vmatprep.subr.bf16.mxu0 0
      %666 = vmatpush1.bf16.msra.mxu0 %v647
      %667 = vmatprep.subr.bf16.mxu0 0
      %668 = vmatpush1.bf16.msra.mxu0 %v646
      %669 = vmatprep.subr.bf16.mxu0 0
      %670 = vmatpush1.bf16.msra.mxu0 %v645
      %671 = vmatprep.subr.bf16.mxu0 0
      %672 = vmatpush1.bf16.msra.mxu0 %v644
      %673 = vmatprep.subr.bf16.mxu0 0
      %674 = vmatpush1.bf16.msra.mxu0 %v643
      %675 = vmatprep.subr.bf16.mxu0 0
      %676 = vmatpush2.bf16.msra.mxu0 0
      %677 = vmatprep.subr.bf16.mxu0 0
      %678 = vmatpush2.bf16.msra.mxu0 0
      %679 = vmatprep.subr.bf16.mxu0 0
      %680 = vmatpush2.bf16.msra.mxu0 0
      %681 = vmatprep.subr.bf16.mxu0 0
      %682 = vmatpush2.bf16.msra.mxu0 0
      %683 = vmatprep.subr.bf16.mxu0 0
      %684 = vmatpush2.bf16.msra.mxu0 0
      %685 = vmatprep.subr.bf16.mxu0 0
      %686 = vmatpush2.bf16.msra.mxu0 0
      %687 = vmatprep.subr.bf16.mxu0 0
      %688 = vmatpush2.bf16.msra.mxu0 0
      %689 = vmatprep.subr.bf16.mxu0 0
      %690 = vmatpush2.bf16.msra.mxu0 0
      %691 = vmatprep.mubr.bf16.mxu0 0
      %692 = vmatmul.mubr.bf16.gmra.mxu0 %v603
      %v693 = vpop.f32.mrf.mxu0
      %v694 = vadd.f32 0.0, %v693
      %v695 = vpop.f32.mrf.mxu0
      %v696 = vpop.f32.mrf.mxu0
      %v697 = vadd.f32 0.0, %v696
      %v698 = vpop.f32.mrf.mxu0
      %699 = vmatprep.mubr.bf16.mxu0 0
      %700 = vmatmul.mubr.bf16.gmra.mxu0 %v604
      %v701 = vpop.f32.mrf.mxu0
      %v702 = vadd.f32 0.0, %v701
      %v703 = vpop.f32.mrf.mxu0
      %v704 = vpop.f32.mrf.mxu0
      %v705 = vadd.f32 0.0, %v704
      %v706 = vpop.f32.mrf.mxu0
      %707 = vmatprep.mubr.bf16.mxu0 0
      %708 = vmatmul.mubr.bf16.gmra.mxu0 %v605
      %v709 = vpop.f32.mrf.mxu0
      %v710 = vadd.f32 0.0, %v709
      %v711 = vpop.f32.mrf.mxu0
      %v712 = vpop.f32.mrf.mxu0
      %v713 = vadd.f32 0.0, %v712
      %v714 = vpop.f32.mrf.mxu0
      %715 = vmatprep.mubr.bf16.mxu0 0
      %716 = vmatmul.mubr.bf16.gmra.mxu0 %v606
      %v717 = vpop.f32.mrf.mxu0
      %v718 = vadd.f32 0.0, %v717
      %v719 = vpop.f32.mrf.mxu0
      %v720 = vpop.f32.mrf.mxu0
      %v721 = vadd.f32 0.0, %v720
      %v722 = vpop.f32.mrf.mxu0
      %723 = vdwg.mxu0
      %v725 = vunpack.c.l.b16 %v544
      %v726 = vpack.c.b16 %v595, %v725
      %v727 = vpack.c.b16 %v597, %v596
      %v728 = vpack.c.b16 %v599, %v598
      %v729 = vpack.c.b16 %v601, %v600
      %v750 = vunpack.c.l.b16 %v554
      %v751 = vunpack.c.l.b16 %v555
      %v752 = vunpack.c.l.b16 %v556
      %v753 = vunpack.c.l.b16 %v557
      %v754 = vunpack.c.l.b16 %v558
      %v755 = vunpack.c.l.b16 %v559
      %v756 = vunpack.c.l.b16 %v560
      %v757 = vunpack.c.l.b16 %v561
      %v758 = vunpack.c.l.b16 %v562
      %v759 = vunpack.c.l.b16 %v563
      %v760 = vunpack.c.l.b16 %v564
      %v761 = vunpack.c.l.b16 %v565
      %v762 = vunpack.c.l.b16 %v566
      %v763 = vunpack.c.l.b16 %v567
      %v764 = vunpack.c.l.b16 %v568
      %v765 = vunpack.c.l.b16 %v569
      %v766 = vpack.c.b16 %v751, %v750
      %v767 = vpack.c.b16 %v753, %v752
      %v768 = vpack.c.b16 %v755, %v754
      %v769 = vpack.c.b16 %v757, %v756
      %v770 = vpack.c.b16 %v759, %v758
      %v771 = vpack.c.b16 %v761, %v760
      %v772 = vpack.c.b16 %v763, %v762
      %v773 = vpack.c.b16 %v765, %v764
      %782 = vmatprep.subr.bf16.mxu0 0
      %783 = vmatpush1.bf16.msra.mxu0 %v773
      %784 = vmatprep.subr.bf16.mxu0 0
      %785 = vmatpush1.bf16.msra.mxu0 %v772
      %786 = vmatprep.subr.bf16.mxu0 0
      %787 = vmatpush1.bf16.msra.mxu0 %v771
      %788 = vmatprep.subr.bf16.mxu0 0
      %789 = vmatpush1.bf16.msra.mxu0 %v770
      %790 = vmatprep.subr.bf16.mxu0 0
      %791 = vmatpush1.bf16.msra.mxu0 %v769
      %792 = vmatprep.subr.bf16.mxu0 0
      %793 = vmatpush1.bf16.msra.mxu0 %v768
      %794 = vmatprep.subr.bf16.mxu0 0
      %795 = vmatpush1.bf16.msra.mxu0 %v767
      %796 = vmatprep.subr.bf16.mxu0 0
      %797 = vmatpush1.bf16.msra.mxu0 %v766
      %798 = vmatprep.subr.bf16.mxu0 0
      %799 = vmatpush2.bf16.msra.mxu0 0
      %800 = vmatprep.subr.bf16.mxu0 0
      %801 = vmatpush2.bf16.msra.mxu0 0
      %802 = vmatprep.subr.bf16.mxu0 0
      %803 = vmatpush2.bf16.msra.mxu0 0
      %804 = vmatprep.subr.bf16.mxu0 0
      %805 = vmatpush2.bf16.msra.mxu0 0
      %806 = vmatprep.subr.bf16.mxu0 0
      %807 = vmatpush2.bf16.msra.mxu0 0
      %808 = vmatprep.subr.bf16.mxu0 0
      %809 = vmatpush2.bf16.msra.mxu0 0
      %810 = vmatprep.subr.bf16.mxu0 0
      %811 = vmatpush2.bf16.msra.mxu0 0
      %812 = vmatprep.subr.bf16.mxu0 0
      %813 = vmatpush2.bf16.msra.mxu0 0
      %814 = vmatprep.mubr.bf16.mxu0 0
      %815 = vmatmul.mubr.bf16.gmra.mxu0 %v726
      %v816 = vpop.f32.mrf.mxu0
      %v817 = vadd.f32 %v694, %v816
      %v818 = vpop.f32.mrf.mxu0
      %v819 = vpop.f32.mrf.mxu0
      %v820 = vadd.f32 %v697, %v819
      %v821 = vpop.f32.mrf.mxu0
      %822 = vmatprep.mubr.bf16.mxu0 0
      %823 = vmatmul.mubr.bf16.gmra.mxu0 %v727
      %v824 = vpop.f32.mrf.mxu0
      %v825 = vadd.f32 %v702, %v824
      %v826 = vpop.f32.mrf.mxu0
      %v827 = vpop.f32.mrf.mxu0
      %v828 = vadd.f32 %v705, %v827
      %v829 = vpop.f32.mrf.mxu0
      %830 = vmatprep.mubr.bf16.mxu0 0
      %831 = vmatmul.mubr.bf16.gmra.mxu0 %v728
      %v832 = vpop.f32.mrf.mxu0
      %v833 = vadd.f32 %v710, %v832
      %v834 = vpop.f32.mrf.mxu0
      %v835 = vpop.f32.mrf.mxu0
      %v836 = vadd.f32 %v713, %v835
      %v837 = vpop.f32.mrf.mxu0
      %838 = vmatprep.mubr.bf16.mxu0 0
      %839 = vmatmul.mubr.bf16.gmra.mxu0 %v729
      %v840 = vpop.f32.mrf.mxu0
      %v841 = vadd.f32 %v718, %v840
      %v842 = vpop.f32.mrf.mxu0
      %v843 = vpop.f32.mrf.mxu0
      %v844 = vadd.f32 %v721, %v843
      %v845 = vpop.f32.mrf.mxu0
      %846 = vdwg.mxu0
      %s847 = scalar_lea.vmem %s3, 384
      %v848 = vld [vmem:[%s847] sm:$0xf]
      %v849 = vld [vmem:[%s847 + $0x4] sm:$0xf]
      %v850 = vld [vmem:[%s847 + $0x8] sm:$0xf]
      %v851 = vld [vmem:[%s847 + $0xc] sm:$0xf]
      %v852 = vld [vmem:[%s847 + $0x10] sm:$0xf]
      %v853 = vld [vmem:[%s847 + $0x14] sm:$0xf]
      %v854 = vld [vmem:[%s847 + $0x18] sm:$0xf]
      %v855 = vld [vmem:[%s847 + $0x1c] sm:$0xf]
      %v856 = vld [vmem:[%s847 + $0x20] sm:$0xf]
      %v857 = vld [vmem:[%s847 + $0x24] sm:$0xf]
      %v858 = vld [vmem:[%s847 + $0x28] sm:$0xf]
      %v859 = vld [vmem:[%s847 + $0x2c] sm:$0xf]
      %v860 = vld [vmem:[%s847 + $0x30] sm:$0xf]
      %v861 = vld [vmem:[%s847 + $0x34] sm:$0xf]
      %v862 = vld [vmem:[%s847 + $0x38] sm:$0xf]
      %v863 = vld [vmem:[%s847 + $0x3c] sm:$0xf]
      %v865 = vunpack.c.l.b16 %v553
      %v866 = vpack.c.b16 %v865, %v602
      %v884 = vunpack.c.l.b16 %v848
      %v885 = vunpack.c.l.b16 %v849
      %v886 = vunpack.c.l.b16 %v850
      %v887 = vunpack.c.l.b16 %v851
      %v888 = vunpack.c.l.b16 %v852
      %v889 = vunpack.c.l.b16 %v853
      %v890 = vunpack.c.l.b16 %v854
      %v891 = vunpack.c.l.b16 %v855
      %v892 = vunpack.c.l.b16 %v856
      %v893 = vunpack.c.l.b16 %v857
      %v894 = vunpack.c.l.b16 %v858
      %v895 = vunpack.c.l.b16 %v859
      %v896 = vunpack.c.l.b16 %v860
      %v897 = vunpack.c.l.b16 %v861
      %v898 = vunpack.c.l.b16 %v862
      %v899 = vunpack.c.l.b16 %v863
      %v900 = vpack.c.b16 %v885, %v884
      %v901 = vpack.c.b16 %v887, %v886
      %v902 = vpack.c.b16 %v889, %v888
      %v903 = vpack.c.b16 %v891, %v890
      %v904 = vpack.c.b16 %v893, %v892
      %v905 = vpack.c.b16 %v895, %v894
      %v906 = vpack.c.b16 %v897, %v896
      %v907 = vpack.c.b16 %v899, %v898
      %916 = vmatprep.subr.bf16.mxu0 0
      %917 = vmatpush1.bf16.msra.mxu0 %v907
      %918 = vmatprep.subr.bf16.mxu0 0
      %919 = vmatpush1.bf16.msra.mxu0 %v906
      %920 = vmatprep.subr.bf16.mxu0 0
      %921 = vmatpush1.bf16.msra.mxu0 %v905
      %922 = vmatprep.subr.bf16.mxu0 0
      %923 = vmatpush1.bf16.msra.mxu0 %v904
      %924 = vmatprep.subr.bf16.mxu0 0
      %925 = vmatpush1.bf16.msra.mxu0 %v903
      %926 = vmatprep.subr.bf16.mxu0 0
      %927 = vmatpush1.bf16.msra.mxu0 %v902
      %928 = vmatprep.subr.bf16.mxu0 0
      %929 = vmatpush1.bf16.msra.mxu0 %v901
      %930 = vmatprep.subr.bf16.mxu0 0
      %931 = vmatpush1.bf16.msra.mxu0 %v900
      %932 = vmatprep.subr.bf16.mxu0 0
      %933 = vmatpush2.bf16.msra.mxu0 0
      %934 = vmatprep.subr.bf16.mxu0 0
      %935 = vmatpush2.bf16.msra.mxu0 0
      %936 = vmatprep.subr.bf16.mxu0 0
      %937 = vmatpush2.bf16.msra.mxu0 0
      %938 = vmatprep.subr.bf16.mxu0 0
      %939 = vmatpush2.bf16.msra.mxu0 0
      %940 = vmatprep.subr.bf16.mxu0 0
      %941 = vmatpush2.bf16.msra.mxu0 0
      %942 = vmatprep.subr.bf16.mxu0 0
      %943 = vmatpush2.bf16.msra.mxu0 0
      %944 = vmatprep.subr.bf16.mxu0 0
      %945 = vmatpush2.bf16.msra.mxu0 0
      %946 = vmatprep.subr.bf16.mxu0 0
      %947 = vmatpush2.bf16.msra.mxu0 0
      %948 = vmatprep.mubr.bf16.mxu0 0
      %949 = vmatmul.mubr.bf16.gmra.mxu0 %v727
      %v950 = vpop.f32.mrf.mxu0
      %v951 = vadd.f32 0.0, %v950
      %v952 = vpop.f32.mrf.mxu0
      %v953 = vpop.f32.mrf.mxu0
      %v954 = vadd.f32 0.0, %v953
      %v955 = vpop.f32.mrf.mxu0
      %956 = vmatprep.mubr.bf16.mxu0 0
      %957 = vmatmul.mubr.bf16.gmra.mxu0 %v728
      %v958 = vpop.f32.mrf.mxu0
      %v959 = vadd.f32 0.0, %v958
      %v960 = vpop.f32.mrf.mxu0
      %v961 = vpop.f32.mrf.mxu0
      %v962 = vadd.f32 0.0, %v961
      %v963 = vpop.f32.mrf.mxu0
      %964 = vmatprep.mubr.bf16.mxu0 0
      %965 = vmatmul.mubr.bf16.gmra.mxu0 %v729
      %v966 = vpop.f32.mrf.mxu0
      %v967 = vadd.f32 0.0, %v966
      %v968 = vpop.f32.mrf.mxu0
      %v969 = vpop.f32.mrf.mxu0
      %v970 = vadd.f32 0.0, %v969
      %v971 = vpop.f32.mrf.mxu0
      %972 = vmatprep.mubr.bf16.mxu0 0
      %973 = vmatmul.mubr.bf16.gmra.mxu0 %v866
      %v974 = vpop.f32.mrf.mxu0
      %v975 = vadd.f32 0.0, %v974
      %v976 = vpop.f32.mrf.mxu0
      %v977 = vpop.f32.mrf.mxu0
      %v978 = vadd.f32 0.0, %v977
      %v979 = vpop.f32.mrf.mxu0
      %980 = vdwg.mxu0
      %v981 = vadd.f32 %v817, %v951
      %v982 = vadd.f32 %v820, %v954
      %v983 = vadd.f32 %v825, %v959
      %v984 = vadd.f32 %v828, %v962
      %v985 = vadd.f32 %v833, %v967
      %v986 = vadd.f32 %v836, %v970
      %v987 = vadd.f32 %v841, %v975
      %v988 = vadd.f32 %v844, %v978
      %v989 = vunpack.c.h.b16 %v544
      %v990 = vunpack.c.h.b16 %v545
      %v991 = vunpack.c.h.b16 %v546
      %v992 = vunpack.c.h.b16 %v547
      %v993 = vunpack.c.h.b16 %v548
      %v994 = vunpack.c.h.b16 %v549
      %v995 = vunpack.c.h.b16 %v550
      %v996 = vunpack.c.h.b16 %v551
      %v997 = vpack.c.b16 %v725, %v725
      %v998 = vpack.c.b16 %v989, %v989
      %v999 = vpack.c.b16 %v595, %v595
      %v1000 = vpack.c.b16 %v990, %v990
      %v1001 = vpack.c.b16 %v596, %v596
      %v1002 = vpack.c.b16 %v991, %v991
      %v1003 = vpack.c.b16 %v597, %v597
      %v1004 = vpack.c.b16 %v992, %v992
      %v1005 = vpack.c.b16 %v598, %v598
      %v1006 = vpack.c.b16 %v993, %v993
      %v1007 = vpack.c.b16 %v599, %v599
      %v1008 = vpack.c.b16 %v994, %v994
      %v1009 = vpack.c.b16 %v600, %v600
      %v1010 = vpack.c.b16 %v995, %v995
      %v1011 = vpack.c.b16 %v601, %v601
      %v1012 = vpack.c.b16 %v996, %v996
      %vm1013 = vsmask.f32 3328
      %vm1014 = vsmask.f32 7440
      %vm1015 = vmor %vm1013, %vm1014
      %v1017 = vshrl.u32 %v997, 16
      %v1019 = vrot.slane %v1017, 4
      %v1020 = vshll.u32 %v997, 16
      %v1022 = vrot.slane %v1020, 5
      %v1023 = vor.u32 %v1019, %v1022
      %v1024 = vrot.slane %v1023, 4
      %v1026 = vshll.u32 %v998, 16
      %v1028 = vrot.slane %v1026, 5
      %v1029 = vsel %vm1015, %v1024, %v1028
      %v1031 = vshrl.u32 %v999, 16
      %v1033 = vrot.slane %v1031, 4
      %v1034 = vshll.u32 %v999, 16
      %v1036 = vrot.slane %v1034, 5
      %v1037 = vor.u32 %v1033, %v1036
      %v1038 = vrot.slane %v1037, 4
      %v1040 = vshll.u32 %v1000, 16
      %v1042 = vrot.slane %v1040, 5
      %v1043 = vsel %vm1015, %v1038, %v1042
      %v1045 = vshrl.u32 %v1001, 16
      %v1047 = vrot.slane %v1045, 4
      %v1048 = vshll.u32 %v1001, 16
      %v1050 = vrot.slane %v1048, 5
      %v1051 = vor.u32 %v1047, %v1050
      %v1052 = vrot.slane %v1051, 4
      %v1054 = vshll.u32 %v1002, 16
      %v1056 = vrot.slane %v1054, 5
      %v1057 = vsel %vm1015, %v1052, %v1056
      %v1059 = vshrl.u32 %v1003, 16
      %v1061 = vrot.slane %v1059, 4
      %v1062 = vshll.u32 %v1003, 16
      %v1064 = vrot.slane %v1062, 5
      %v1065 = vor.u32 %v1061, %v1064
      %v1066 = vrot.slane %v1065, 4
      %v1068 = vshll.u32 %v1004, 16
      %v1070 = vrot.slane %v1068, 5
      %v1071 = vsel %vm1015, %v1066, %v1070
      %v1073 = vshrl.u32 %v1005, 16
      %v1075 = vrot.slane %v1073, 4
      %v1076 = vshll.u32 %v1005, 16
      %v1078 = vrot.slane %v1076, 5
      %v1079 = vor.u32 %v1075, %v1078
      %v1080 = vrot.slane %v1079, 4
      %v1082 = vshll.u32 %v1006, 16
      %v1084 = vrot.slane %v1082, 5
      %v1085 = vsel %vm1015, %v1080, %v1084
      %v1087 = vshrl.u32 %v1007, 16
      %v1089 = vrot.slane %v1087, 4
      %v1090 = vshll.u32 %v1007, 16
      %v1092 = vrot.slane %v1090, 5
      %v1093 = vor.u32 %v1089, %v1092
      %v1094 = vrot.slane %v1093, 4
      %v1096 = vshll.u32 %v1008, 16
      %v1098 = vrot.slane %v1096, 5
      %v1099 = vsel %vm1015, %v1094, %v1098
      %v1101 = vshrl.u32 %v1009, 16
      %v1103 = vrot.slane %v1101, 4
      %v1104 = vshll.u32 %v1009, 16
      %v1106 = vrot.slane %v1104, 5
      %v1107 = vor.u32 %v1103, %v1106
      %v1108 = vrot.slane %v1107, 4
      %v1110 = vshll.u32 %v1010, 16
      %v1112 = vrot.slane %v1110, 5
      %v1113 = vsel %vm1015, %v1108, %v1112
      %v1115 = vshrl.u32 %v1011, 16
      %v1117 = vrot.slane %v1115, 4
      %v1118 = vshll.u32 %v1011, 16
      %v1120 = vrot.slane %v1118, 5
      %v1121 = vor.u32 %v1117, %v1120
      %v1122 = vrot.slane %v1121, 4
      %v1124 = vshll.u32 %v1012, 16
      %v1126 = vrot.slane %v1124, 5
      %v1127 = vsel %vm1015, %v1122, %v1126
      %s1128 = scalar_lea.vmem %s3, 64
      %v1129 = vld [vmem:[%s1128] sm:$0xf]
      %v1130 = vld [vmem:[%s1128 + $0x4] sm:$0xf]
      %v1131 = vld [vmem:[%s1128 + $0x8] sm:$0xf]
      %v1132 = vld [vmem:[%s1128 + $0xc] sm:$0xf]
      %v1133 = vld [vmem:[%s1128 + $0x10] sm:$0xf]
      %v1134 = vld [vmem:[%s1128 + $0x14] sm:$0xf]
      %v1135 = vld [vmem:[%s1128 + $0x18] sm:$0xf]
      %v1136 = vld [vmem:[%s1128 + $0x1c] sm:$0xf]
      %v1137 = vld [vmem:[%s1128 + $0x20] sm:$0xf]
      %v1138 = vld [vmem:[%s1128 + $0x24] sm:$0xf]
      %v1139 = vld [vmem:[%s1128 + $0x28] sm:$0xf]
      %v1140 = vld [vmem:[%s1128 + $0x2c] sm:$0xf]
      %v1141 = vld [vmem:[%s1128 + $0x30] sm:$0xf]
      %v1142 = vld [vmem:[%s1128 + $0x34] sm:$0xf]
      %v1143 = vld [vmem:[%s1128 + $0x38] sm:$0xf]
      %v1144 = vld [vmem:[%s1128 + $0x3c] sm:$0xf]
      %v1145 = vunpack.c.l.b16 %v1029
      %v1146 = vunpack.c.l.b16 %v1043
      %v1147 = vunpack.c.l.b16 %v1057
      %v1148 = vunpack.c.l.b16 %v1071
      %v1149 = vunpack.c.l.b16 %v1085
      %v1150 = vunpack.c.l.b16 %v1099
      %v1151 = vunpack.c.l.b16 %v1113
      %v1152 = vunpack.c.l.b16 %v1127
      %v1153 = vpack.c.b16 %v1146, %v1145
      %v1154 = vpack.c.b16 %v1148, %v1147
      %v1155 = vpack.c.b16 %v1150, %v1149
      %v1156 = vpack.c.b16 %v1152, %v1151
      %v1177 = vunpack.c.l.b16 %v1129
      %v1178 = vunpack.c.l.b16 %v1130
      %v1179 = vunpack.c.l.b16 %v1131
      %v1180 = vunpack.c.l.b16 %v1132
      %v1181 = vunpack.c.l.b16 %v1133
      %v1182 = vunpack.c.l.b16 %v1134
      %v1183 = vunpack.c.l.b16 %v1135
      %v1184 = vunpack.c.l.b16 %v1136
      %v1185 = vunpack.c.l.b16 %v1137
      %v1186 = vunpack.c.l.b16 %v1138
      %v1187 = vunpack.c.l.b16 %v1139
      %v1188 = vunpack.c.l.b16 %v1140
      %v1189 = vunpack.c.l.b16 %v1141
      %v1190 = vunpack.c.l.b16 %v1142
      %v1191 = vunpack.c.l.b16 %v1143
      %v1192 = vunpack.c.l.b16 %v1144
      %v1193 = vpack.c.b16 %v1178, %v1177
      %v1194 = vpack.c.b16 %v1180, %v1179
      %v1195 = vpack.c.b16 %v1182, %v1181
      %v1196 = vpack.c.b16 %v1184, %v1183
      %v1197 = vpack.c.b16 %v1186, %v1185
      %v1198 = vpack.c.b16 %v1188, %v1187
      %v1199 = vpack.c.b16 %v1190, %v1189
      %v1200 = vpack.c.b16 %v1192, %v1191
      %1209 = vmatprep.subr.bf16.mxu0 0
      %1210 = vmatpush1.bf16.msra.mxu0 %v1200
      %1211 = vmatprep.subr.bf16.mxu0 0
      %1212 = vmatpush1.bf16.msra.mxu0 %v1199
      %1213 = vmatprep.subr.bf16.mxu0 0
      %1214 = vmatpush1.bf16.msra.mxu0 %v1198
      %1215 = vmatprep.subr.bf16.mxu0 0
      %1216 = vmatpush1.bf16.msra.mxu0 %v1197
      %1217 = vmatprep.subr.bf16.mxu0 0
      %1218 = vmatpush1.bf16.msra.mxu0 %v1196
      %1219 = vmatprep.subr.bf16.mxu0 0
      %1220 = vmatpush1.bf16.msra.mxu0 %v1195
      %1221 = vmatprep.subr.bf16.mxu0 0
      %1222 = vmatpush1.bf16.msra.mxu0 %v1194
      %1223 = vmatprep.subr.bf16.mxu0 0
      %1224 = vmatpush1.bf16.msra.mxu0 %v1193
      %1225 = vmatprep.subr.bf16.mxu0 0
      %1226 = vmatpush2.bf16.msra.mxu0 0
      %1227 = vmatprep.subr.bf16.mxu0 0
      %1228 = vmatpush2.bf16.msra.mxu0 0
      %1229 = vmatprep.subr.bf16.mxu0 0
      %1230 = vmatpush2.bf16.msra.mxu0 0
      %1231 = vmatprep.subr.bf16.mxu0 0
      %1232 = vmatpush2.bf16.msra.mxu0 0
      %1233 = vmatprep.subr.bf16.mxu0 0
      %1234 = vmatpush2.bf16.msra.mxu0 0
      %1235 = vmatprep.subr.bf16.mxu0 0
      %1236 = vmatpush2.bf16.msra.mxu0 0
      %1237 = vmatprep.subr.bf16.mxu0 0
      %1238 = vmatpush2.bf16.msra.mxu0 0
      %1239 = vmatprep.subr.bf16.mxu0 0
      %1240 = vmatpush2.bf16.msra.mxu0 0
      %1241 = vmatprep.mubr.bf16.mxu0 0
      %1242 = vmatmul.mubr.bf16.gmra.mxu0 %v1153
      %v1243 = vpop.f32.mrf.mxu0
      %v1244 = vadd.f32 0.0, %v1243
      %v1245 = vpop.f32.mrf.mxu0
      %v1246 = vpop.f32.mrf.mxu0
      %v1247 = vadd.f32 0.0, %v1246
      %v1248 = vpop.f32.mrf.mxu0
      %1249 = vmatprep.mubr.bf16.mxu0 0
      %1250 = vmatmul.mubr.bf16.gmra.mxu0 %v1154
      %v1251 = vpop.f32.mrf.mxu0
      %v1252 = vadd.f32 0.0, %v1251
      %v1253 = vpop.f32.mrf.mxu0
      %v1254 = vpop.f32.mrf.mxu0
      %v1255 = vadd.f32 0.0, %v1254
      %v1256 = vpop.f32.mrf.mxu0
      %1257 = vmatprep.mubr.bf16.mxu0 0
      %1258 = vmatmul.mubr.bf16.gmra.mxu0 %v1155
      %v1259 = vpop.f32.mrf.mxu0
      %v1260 = vadd.f32 0.0, %v1259
      %v1261 = vpop.f32.mrf.mxu0
      %v1262 = vpop.f32.mrf.mxu0
      %v1263 = vadd.f32 0.0, %v1262
      %v1264 = vpop.f32.mrf.mxu0
      %1265 = vmatprep.mubr.bf16.mxu0 0
      %1266 = vmatmul.mubr.bf16.gmra.mxu0 %v1156
      %v1267 = vpop.f32.mrf.mxu0
      %v1268 = vadd.f32 0.0, %v1267
      %v1269 = vpop.f32.mrf.mxu0
      %v1270 = vpop.f32.mrf.mxu0
      %v1271 = vadd.f32 0.0, %v1270
      %v1272 = vpop.f32.mrf.mxu0
      %1273 = vdwg.mxu0
      %v1274 = vadd.f32 %v981, %v1244
      %v1275 = vadd.f32 %v982, %v1247
      %v1276 = vadd.f32 %v983, %v1252
      %v1277 = vadd.f32 %v984, %v1255
      %v1278 = vadd.f32 %v985, %v1260
      %v1279 = vadd.f32 %v986, %v1263
      %v1280 = vadd.f32 %v987, %v1268
      %v1281 = vadd.f32 %v988, %v1271
      %v1282 = vunpack.c.h.b16 %v552
      %v1283 = vpack.c.b16 %v602, %v602
      %v1284 = vpack.c.b16 %v1282, %v1282
      %v1286 = vshrl.u32 %v1283, 16
      %v1288 = vrot.slane %v1286, 4
      %v1289 = vshll.u32 %v1283, 16
      %v1291 = vrot.slane %v1289, 5
      %v1292 = vor.u32 %v1288, %v1291
      %v1293 = vrot.slane %v1292, 4
      %v1295 = vshll.u32 %v1284, 16
      %v1297 = vrot.slane %v1295, 5
      %v1298 = vsel %vm1015, %v1293, %v1297
      %s1299 = scalar_lea.vmem %s3, 256
      %v1300 = vld [vmem:[%s1299] sm:$0xf]
      %v1301 = vld [vmem:[%s1299 + $0x4] sm:$0xf]
      %v1302 = vld [vmem:[%s1299 + $0x8] sm:$0xf]
      %v1303 = vld [vmem:[%s1299 + $0xc] sm:$0xf]
      %v1304 = vld [vmem:[%s1299 + $0x10] sm:$0xf]
      %v1305 = vld [vmem:[%s1299 + $0x14] sm:$0xf]
      %v1306 = vld [vmem:[%s1299 + $0x18] sm:$0xf]
      %v1307 = vld [vmem:[%s1299 + $0x1c] sm:$0xf]
      %v1308 = vld [vmem:[%s1299 + $0x20] sm:$0xf]
      %v1309 = vld [vmem:[%s1299 + $0x24] sm:$0xf]
      %v1310 = vld [vmem:[%s1299 + $0x28] sm:$0xf]
      %v1311 = vld [vmem:[%s1299 + $0x2c] sm:$0xf]
      %v1312 = vld [vmem:[%s1299 + $0x30] sm:$0xf]
      %v1313 = vld [vmem:[%s1299 + $0x34] sm:$0xf]
      %v1314 = vld [vmem:[%s1299 + $0x38] sm:$0xf]
      %v1315 = vld [vmem:[%s1299 + $0x3c] sm:$0xf]
      %v1316 = vunpack.c.l.b16 %v1298
      %v1317 = vpack.c.b16 %v1147, %v1146
      %v1318 = vpack.c.b16 %v1149, %v1148
      %v1319 = vpack.c.b16 %v1151, %v1150
      %v1320 = vpack.c.b16 %v1316, %v1152
      %v1341 = vunpack.c.l.b16 %v1300
      %v1342 = vunpack.c.l.b16 %v1301
      %v1343 = vunpack.c.l.b16 %v1302
      %v1344 = vunpack.c.l.b16 %v1303
      %v1345 = vunpack.c.l.b16 %v1304
      %v1346 = vunpack.c.l.b16 %v1305
      %v1347 = vunpack.c.l.b16 %v1306
      %v1348 = vunpack.c.l.b16 %v1307
      %v1349 = vunpack.c.l.b16 %v1308
      %v1350 = vunpack.c.l.b16 %v1309
      %v1351 = vunpack.c.l.b16 %v1310
      %v1352 = vunpack.c.l.b16 %v1311
      %v1353 = vunpack.c.l.b16 %v1312
      %v1354 = vunpack.c.l.b16 %v1313
      %v1355 = vunpack.c.l.b16 %v1314
      %v1356 = vunpack.c.l.b16 %v1315
      %v1357 = vpack.c.b16 %v1342, %v1341
      %v1358 = vpack.c.b16 %v1344, %v1343
      %v1359 = vpack.c.b16 %v1346, %v1345
      %v1360 = vpack.c.b16 %v1348, %v1347
      %v1361 = vpack.c.b16 %v1350, %v1349
      %v1362 = vpack.c.b16 %v1352, %v1351
      %v1363 = vpack.c.b16 %v1354, %v1353
      %v1364 = vpack.c.b16 %v1356, %v1355
      %1373 = vmatprep.subr.bf16.mxu0 0
      %1374 = vmatpush1.bf16.msra.mxu0 %v1364
      %1375 = vmatprep.subr.bf16.mxu0 0
      %1376 = vmatpush1.bf16.msra.mxu0 %v1363
      %1377 = vmatprep.subr.bf16.mxu0 0
      %1378 = vmatpush1.bf16.msra.mxu0 %v1362
      %1379 = vmatprep.subr.bf16.mxu0 0
      %1380 = vmatpush1.bf16.msra.mxu0 %v1361
      %1381 = vmatprep.subr.bf16.mxu0 0
      %1382 = vmatpush1.bf16.msra.mxu0 %v1360
      %1383 = vmatprep.subr.bf16.mxu0 0
      %1384 = vmatpush1.bf16.msra.mxu0 %v1359
      %1385 = vmatprep.subr.bf16.mxu0 0
      %1386 = vmatpush1.bf16.msra.mxu0 %v1358
      %1387 = vmatprep.subr.bf16.mxu0 0
      %1388 = vmatpush1.bf16.msra.mxu0 %v1357
      %1389 = vmatprep.subr.bf16.mxu0 0
      %1390 = vmatpush2.bf16.msra.mxu0 0
      %1391 = vmatprep.subr.bf16.mxu0 0
      %1392 = vmatpush2.bf16.msra.mxu0 0
      %1393 = vmatprep.subr.bf16.mxu0 0
      %1394 = vmatpush2.bf16.msra.mxu0 0
      %1395 = vmatprep.subr.bf16.mxu0 0
      %1396 = vmatpush2.bf16.msra.mxu0 0
      %1397 = vmatprep.subr.bf16.mxu0 0
      %1398 = vmatpush2.bf16.msra.mxu0 0
      %1399 = vmatprep.subr.bf16.mxu0 0
      %1400 = vmatpush2.bf16.msra.mxu0 0
      %1401 = vmatprep.subr.bf16.mxu0 0
      %1402 = vmatpush2.bf16.msra.mxu0 0
      %1403 = vmatprep.subr.bf16.mxu0 0
      %1404 = vmatpush2.bf16.msra.mxu0 0
      %1405 = vmatprep.mubr.bf16.mxu0 0
      %1406 = vmatmul.mubr.bf16.gmra.mxu0 %v1317
      %v1407 = vpop.f32.mrf.mxu0
      %v1408 = vadd.f32 0.0, %v1407
      %v1409 = vpop.f32.mrf.mxu0
      %v1410 = vpop.f32.mrf.mxu0
      %v1411 = vadd.f32 0.0, %v1410
      %v1412 = vpop.f32.mrf.mxu0
      %1413 = vmatprep.mubr.bf16.mxu0 0
      %1414 = vmatmul.mubr.bf16.gmra.mxu0 %v1318
      %v1415 = vpop.f32.mrf.mxu0
      %v1416 = vadd.f32 0.0, %v1415
      %v1417 = vpop.f32.mrf.mxu0
      %v1418 = vpop.f32.mrf.mxu0
      %v1419 = vadd.f32 0.0, %v1418
      %v1420 = vpop.f32.mrf.mxu0
      %1421 = vmatprep.mubr.bf16.mxu0 0
      %1422 = vmatmul.mubr.bf16.gmra.mxu0 %v1319
      %v1423 = vpop.f32.mrf.mxu0
      %v1424 = vadd.f32 0.0, %v1423
      %v1425 = vpop.f32.mrf.mxu0
      %v1426 = vpop.f32.mrf.mxu0
      %v1427 = vadd.f32 0.0, %v1426
      %v1428 = vpop.f32.mrf.mxu0
      %1429 = vmatprep.mubr.bf16.mxu0 0
      %1430 = vmatmul.mubr.bf16.gmra.mxu0 %v1320
      %v1431 = vpop.f32.mrf.mxu0
      %v1432 = vadd.f32 0.0, %v1431
      %v1433 = vpop.f32.mrf.mxu0
      %v1434 = vpop.f32.mrf.mxu0
      %v1435 = vadd.f32 0.0, %v1434
      %v1436 = vpop.f32.mrf.mxu0
      %1437 = vdwg.mxu0
      %v1438 = vadd.f32 %v1274, %v1408
      %v1439 = vadd.f32 %v1275, %v1411
      %v1440 = vadd.f32 %v1276, %v1416
      %v1441 = vadd.f32 %v1277, %v1419
      %v1442 = vadd.f32 %v1278, %v1424
      %v1443 = vadd.f32 %v1279, %v1427
      %v1444 = vadd.f32 %v1280, %v1432
      %v1445 = vadd.f32 %v1281, %v1435
      %v1446 = vunpack.c.h.b16 %v553
      %v1447 = vpack.c.b16 %v865, %v865
      %v1448 = vpack.c.b16 %v1446, %v1446
      %v1450 = vshrl.u32 %v1447, 16
      %v1452 = vrot.slane %v1450, 4
      %v1453 = vshll.u32 %v1447, 16
      %v1455 = vrot.slane %v1453, 5
      %v1456 = vor.u32 %v1452, %v1455
      %v1457 = vrot.slane %v1456, 4
      %v1459 = vshll.u32 %v1448, 16
      %v1461 = vrot.slane %v1459, 5
      %v1462 = vsel %vm1015, %v1457, %v1461
      %s1463 = scalar_lea.vmem %s3, 448
      %v1464 = vld [vmem:[%s1463] sm:$0xf]
      %v1465 = vld [vmem:[%s1463 + $0x4] sm:$0xf]
      %v1466 = vld [vmem:[%s1463 + $0x8] sm:$0xf]
      %v1467 = vld [vmem:[%s1463 + $0xc] sm:$0xf]
      %v1468 = vld [vmem:[%s1463 + $0x10] sm:$0xf]
      %v1469 = vld [vmem:[%s1463 + $0x14] sm:$0xf]
      %v1470 = vld [vmem:[%s1463 + $0x18] sm:$0xf]
      %v1471 = vld [vmem:[%s1463 + $0x1c] sm:$0xf]
      %v1472 = vld [vmem:[%s1463 + $0x20] sm:$0xf]
      %v1473 = vld [vmem:[%s1463 + $0x24] sm:$0xf]
      %v1474 = vld [vmem:[%s1463 + $0x28] sm:$0xf]
      %v1475 = vld [vmem:[%s1463 + $0x2c] sm:$0xf]
      %v1476 = vld [vmem:[%s1463 + $0x30] sm:$0xf]
      %v1477 = vld [vmem:[%s1463 + $0x34] sm:$0xf]
      %v1478 = vld [vmem:[%s1463 + $0x38] sm:$0xf]
      %v1479 = vld [vmem:[%s1463 + $0x3c] sm:$0xf]
      %v1480 = vunpack.c.l.b16 %v1462
      %v1481 = vpack.c.b16 %v1480, %v1316
      %v1499 = vunpack.c.l.b16 %v1464
      %v1500 = vunpack.c.l.b16 %v1465
      %v1501 = vunpack.c.l.b16 %v1466
      %v1502 = vunpack.c.l.b16 %v1467
      %v1503 = vunpack.c.l.b16 %v1468
      %v1504 = vunpack.c.l.b16 %v1469
      %v1505 = vunpack.c.l.b16 %v1470
      %v1506 = vunpack.c.l.b16 %v1471
      %v1507 = vunpack.c.l.b16 %v1472
      %v1508 = vunpack.c.l.b16 %v1473
      %v1509 = vunpack.c.l.b16 %v1474
      %v1510 = vunpack.c.l.b16 %v1475
      %v1511 = vunpack.c.l.b16 %v1476
      %v1512 = vunpack.c.l.b16 %v1477
      %v1513 = vunpack.c.l.b16 %v1478
      %v1514 = vunpack.c.l.b16 %v1479
      %v1515 = vpack.c.b16 %v1500, %v1499
      %v1516 = vpack.c.b16 %v1502, %v1501
      %v1517 = vpack.c.b16 %v1504, %v1503
      %v1518 = vpack.c.b16 %v1506, %v1505
      %v1519 = vpack.c.b16 %v1508, %v1507
      %v1520 = vpack.c.b16 %v1510, %v1509
      %v1521 = vpack.c.b16 %v1512, %v1511
      %v1522 = vpack.c.b16 %v1514, %v1513
      %1531 = vmatprep.subr.bf16.mxu0 0
      %1532 = vmatpush1.bf16.msra.mxu0 %v1522
      %1533 = vmatprep.subr.bf16.mxu0 0
      %1534 = vmatpush1.bf16.msra.mxu0 %v1521
      %1535 = vmatprep.subr.bf16.mxu0 0
      %1536 = vmatpush1.bf16.msra.mxu0 %v1520
      %1537 = vmatprep.subr.bf16.mxu0 0
      %1538 = vmatpush1.bf16.msra.mxu0 %v1519
      %1539 = vmatprep.subr.bf16.mxu0 0
      %1540 = vmatpush1.bf16.msra.mxu0 %v1518
      %1541 = vmatprep.subr.bf16.mxu0 0
      %1542 = vmatpush1.bf16.msra.mxu0 %v1517
      %1543 = vmatprep.subr.bf16.mxu0 0
      %1544 = vmatpush1.bf16.msra.mxu0 %v1516
      %1545 = vmatprep.subr.bf16.mxu0 0
      %1546 = vmatpush1.bf16.msra.mxu0 %v1515
      %1547 = vmatprep.subr.bf16.mxu0 0
      %1548 = vmatpush2.bf16.msra.mxu0 0
      %1549 = vmatprep.subr.bf16.mxu0 0
      %1550 = vmatpush2.bf16.msra.mxu0 0
      %1551 = vmatprep.subr.bf16.mxu0 0
      %1552 = vmatpush2.bf16.msra.mxu0 0
      %1553 = vmatprep.subr.bf16.mxu0 0
      %1554 = vmatpush2.bf16.msra.mxu0 0
      %1555 = vmatprep.subr.bf16.mxu0 0
      %1556 = vmatpush2.bf16.msra.mxu0 0
      %1557 = vmatprep.subr.bf16.mxu0 0
      %1558 = vmatpush2.bf16.msra.mxu0 0
      %1559 = vmatprep.subr.bf16.mxu0 0
      %1560 = vmatpush2.bf16.msra.mxu0 0
      %1561 = vmatprep.subr.bf16.mxu0 0
      %1562 = vmatpush2.bf16.msra.mxu0 0
      %1563 = vmatprep.mubr.bf16.mxu0 0
      %1564 = vmatmul.mubr.bf16.gmra.mxu0 %v1154
      %v1565 = vpop.f32.mrf.mxu0
      %v1566 = vadd.f32 0.0, %v1565
      %v1567 = vpop.f32.mrf.mxu0
      %v1568 = vpop.f32.mrf.mxu0
      %v1569 = vadd.f32 0.0, %v1568
      %v1570 = vpop.f32.mrf.mxu0
      %1571 = vmatprep.mubr.bf16.mxu0 0
      %1572 = vmatmul.mubr.bf16.gmra.mxu0 %v1155
      %v1573 = vpop.f32.mrf.mxu0
      %v1574 = vadd.f32 0.0, %v1573
      %v1575 = vpop.f32.mrf.mxu0
      %v1576 = vpop.f32.mrf.mxu0
      %v1577 = vadd.f32 0.0, %v1576
      %v1578 = vpop.f32.mrf.mxu0
      %1579 = vmatprep.mubr.bf16.mxu0 0
      %1580 = vmatmul.mubr.bf16.gmra.mxu0 %v1156
      %v1581 = vpop.f32.mrf.mxu0
      %v1582 = vadd.f32 0.0, %v1581
      %v1583 = vpop.f32.mrf.mxu0
      %v1584 = vpop.f32.mrf.mxu0
      %v1585 = vadd.f32 0.0, %v1584
      %v1586 = vpop.f32.mrf.mxu0
      %1587 = vmatprep.mubr.bf16.mxu0 0
      %1588 = vmatmul.mubr.bf16.gmra.mxu0 %v1481
      %v1589 = vpop.f32.mrf.mxu0
      %v1590 = vadd.f32 0.0, %v1589
      %v1591 = vpop.f32.mrf.mxu0
      %v1592 = vpop.f32.mrf.mxu0
      %v1593 = vadd.f32 0.0, %v1592
      %v1594 = vpop.f32.mrf.mxu0
      %1595 = vdwg.mxu0
      %v1596 = vadd.f32 %v1438, %v1566
      %v1597 = vadd.f32 %v1439, %v1569
      %v1598 = vadd.f32 %v1440, %v1574
      %v1599 = vadd.f32 %v1441, %v1577
      %v1600 = vadd.f32 %v1442, %v1582
      %v1601 = vadd.f32 %v1443, %v1585
      %v1602 = vadd.f32 %v1444, %v1590
      %v1603 = vadd.f32 %v1445, %v1593
      %vm1604 = vcmask 1042432
      %vm1605 = vcmask 1046532
      %vm1606 = vmor %vm1604, %vm1605
      %v1607 = vrot.slane %v997, 5
      %v1608 = vrot.slane %v1607, 4
      %v1609 = vrot.slane %v998, 5
      %v1610 = vsel %vm1606, %v1608, %v1609
      %v1611 = vrot.slane %v999, 5
      %v1612 = vrot.slane %v1611, 4
      %v1613 = vrot.slane %v1000, 5
      %v1614 = vsel %vm1606, %v1612, %v1613
      %v1615 = vrot.slane %v1001, 5
      %v1616 = vrot.slane %v1615, 4
      %v1617 = vrot.slane %v1002, 5
      %v1618 = vsel %vm1606, %v1616, %v1617
      %v1619 = vrot.slane %v1003, 5
      %v1620 = vrot.slane %v1619, 4
      %v1621 = vrot.slane %v1004, 5
      %v1622 = vsel %vm1606, %v1620, %v1621
      %v1623 = vrot.slane %v1005, 5
      %v1624 = vrot.slane %v1623, 4
      %v1625 = vrot.slane %v1006, 5
      %v1626 = vsel %vm1606, %v1624, %v1625
      %v1627 = vrot.slane %v1007, 5
      %v1628 = vrot.slane %v1627, 4
      %v1629 = vrot.slane %v1008, 5
      %v1630 = vsel %vm1606, %v1628, %v1629
      %v1631 = vrot.slane %v1009, 5
      %v1632 = vrot.slane %v1631, 4
      %v1633 = vrot.slane %v1010, 5
      %v1634 = vsel %vm1606, %v1632, %v1633
      %v1635 = vrot.slane %v1011, 5
      %v1636 = vrot.slane %v1635, 4
      %v1637 = vrot.slane %v1012, 5
      %v1638 = vsel %vm1606, %v1636, %v1637
      %s1639 = scalar_lea.vmem %s3, 128
      %v1640 = vld [vmem:[%s1639] sm:$0xf]
      %v1641 = vld [vmem:[%s1639 + $0x4] sm:$0xf]
      %v1642 = vld [vmem:[%s1639 + $0x8] sm:$0xf]
      %v1643 = vld [vmem:[%s1639 + $0xc] sm:$0xf]
      %v1644 = vld [vmem:[%s1639 + $0x10] sm:$0xf]
      %v1645 = vld [vmem:[%s1639 + $0x14] sm:$0xf]
      %v1646 = vld [vmem:[%s1639 + $0x18] sm:$0xf]
      %v1647 = vld [vmem:[%s1639 + $0x1c] sm:$0xf]
      %v1648 = vld [vmem:[%s1639 + $0x20] sm:$0xf]
      %v1649 = vld [vmem:[%s1639 + $0x24] sm:$0xf]
      %v1650 = vld [vmem:[%s1639 + $0x28] sm:$0xf]
      %v1651 = vld [vmem:[%s1639 + $0x2c] sm:$0xf]
      %v1652 = vld [vmem:[%s1639 + $0x30] sm:$0xf]
      %v1653 = vld [vmem:[%s1639 + $0x34] sm:$0xf]
      %v1654 = vld [vmem:[%s1639 + $0x38] sm:$0xf]
      %v1655 = vld [vmem:[%s1639 + $0x3c] sm:$0xf]
      %v1656 = vunpack.c.l.b16 %v1610
      %v1657 = vunpack.c.l.b16 %v1614
      %v1658 = vunpack.c.l.b16 %v1618
      %v1659 = vunpack.c.l.b16 %v1622
      %v1660 = vunpack.c.l.b16 %v1626
      %v1661 = vunpack.c.l.b16 %v1630
      %v1662 = vunpack.c.l.b16 %v1634
      %v1663 = vunpack.c.l.b16 %v1638
      %v1664 = vpack.c.b16 %v1657, %v1656
      %v1665 = vpack.c.b16 %v1659, %v1658
      %v1666 = vpack.c.b16 %v1661, %v1660
      %v1667 = vpack.c.b16 %v1663, %v1662
      %v1688 = vunpack.c.l.b16 %v1640
      %v1689 = vunpack.c.l.b16 %v1641
      %v1690 = vunpack.c.l.b16 %v1642
      %v1691 = vunpack.c.l.b16 %v1643
      %v1692 = vunpack.c.l.b16 %v1644
      %v1693 = vunpack.c.l.b16 %v1645
      %v1694 = vunpack.c.l.b16 %v1646
      %v1695 = vunpack.c.l.b16 %v1647
      %v1696 = vunpack.c.l.b16 %v1648
      %v1697 = vunpack.c.l.b16 %v1649
      %v1698 = vunpack.c.l.b16 %v1650
      %v1699 = vunpack.c.l.b16 %v1651
      %v1700 = vunpack.c.l.b16 %v1652
      %v1701 = vunpack.c.l.b16 %v1653
      %v1702 = vunpack.c.l.b16 %v1654
      %v1703 = vunpack.c.l.b16 %v1655
      %v1704 = vpack.c.b16 %v1689, %v1688
      %v1705 = vpack.c.b16 %v1691, %v1690
      %v1706 = vpack.c.b16 %v1693, %v1692
      %v1707 = vpack.c.b16 %v1695, %v1694
      %v1708 = vpack.c.b16 %v1697, %v1696
      %v1709 = vpack.c.b16 %v1699, %v1698
      %v1710 = vpack.c.b16 %v1701, %v1700
      %v1711 = vpack.c.b16 %v1703, %v1702
      %1720 = vmatprep.subr.bf16.mxu0 0
      %1721 = vmatpush1.bf16.msra.mxu0 %v1711
      %1722 = vmatprep.subr.bf16.mxu0 0
      %1723 = vmatpush1.bf16.msra.mxu0 %v1710
      %1724 = vmatprep.subr.bf16.mxu0 0
      %1725 = vmatpush1.bf16.msra.mxu0 %v1709
      %1726 = vmatprep.subr.bf16.mxu0 0
      %1727 = vmatpush1.bf16.msra.mxu0 %v1708
      %1728 = vmatprep.subr.bf16.mxu0 0
      %1729 = vmatpush1.bf16.msra.mxu0 %v1707
      %1730 = vmatprep.subr.bf16.mxu0 0
      %1731 = vmatpush1.bf16.msra.mxu0 %v1706
      %1732 = vmatprep.subr.bf16.mxu0 0
      %1733 = vmatpush1.bf16.msra.mxu0 %v1705
      %1734 = vmatprep.subr.bf16.mxu0 0
      %1735 = vmatpush1.bf16.msra.mxu0 %v1704
      %1736 = vmatprep.subr.bf16.mxu0 0
      %1737 = vmatpush2.bf16.msra.mxu0 0
      %1738 = vmatprep.subr.bf16.mxu0 0
      %1739 = vmatpush2.bf16.msra.mxu0 0
      %1740 = vmatprep.subr.bf16.mxu0 0
      %1741 = vmatpush2.bf16.msra.mxu0 0
      %1742 = vmatprep.subr.bf16.mxu0 0
      %1743 = vmatpush2.bf16.msra.mxu0 0
      %1744 = vmatprep.subr.bf16.mxu0 0
      %1745 = vmatpush2.bf16.msra.mxu0 0
      %1746 = vmatprep.subr.bf16.mxu0 0
      %1747 = vmatpush2.bf16.msra.mxu0 0
      %1748 = vmatprep.subr.bf16.mxu0 0
      %1749 = vmatpush2.bf16.msra.mxu0 0
      %1750 = vmatprep.subr.bf16.mxu0 0
      %1751 = vmatpush2.bf16.msra.mxu0 0
      %1752 = vmatprep.mubr.bf16.mxu0 0
      %1753 = vmatmul.mubr.bf16.gmra.mxu0 %v1664
      %v1754 = vpop.f32.mrf.mxu0
      %v1755 = vadd.f32 0.0, %v1754
      %v1756 = vpop.f32.mrf.mxu0
      %v1757 = vpop.f32.mrf.mxu0
      %v1758 = vadd.f32 0.0, %v1757
      %v1759 = vpop.f32.mrf.mxu0
      %1760 = vmatprep.mubr.bf16.mxu0 0
      %1761 = vmatmul.mubr.bf16.gmra.mxu0 %v1665
      %v1762 = vpop.f32.mrf.mxu0
      %v1763 = vadd.f32 0.0, %v1762
      %v1764 = vpop.f32.mrf.mxu0
      %v1765 = vpop.f32.mrf.mxu0
      %v1766 = vadd.f32 0.0, %v1765
      %v1767 = vpop.f32.mrf.mxu0
      %1768 = vmatprep.mubr.bf16.mxu0 0
      %1769 = vmatmul.mubr.bf16.gmra.mxu0 %v1666
      %v1770 = vpop.f32.mrf.mxu0
      %v1771 = vadd.f32 0.0, %v1770
      %v1772 = vpop.f32.mrf.mxu0
      %v1773 = vpop.f32.mrf.mxu0
      %v1774 = vadd.f32 0.0, %v1773
      %v1775 = vpop.f32.mrf.mxu0
      %1776 = vmatprep.mubr.bf16.mxu0 0
      %1777 = vmatmul.mubr.bf16.gmra.mxu0 %v1667
      %v1778 = vpop.f32.mrf.mxu0
      %v1779 = vadd.f32 0.0, %v1778
      %v1780 = vpop.f32.mrf.mxu0
      %v1781 = vpop.f32.mrf.mxu0
      %v1782 = vadd.f32 0.0, %v1781
      %v1783 = vpop.f32.mrf.mxu0
      %1784 = vdwg.mxu0
      %v1785 = vadd.f32 %v1596, %v1755
      %v1786 = vadd.f32 %v1597, %v1758
      %v1787 = vadd.f32 %v1598, %v1763
      %v1788 = vadd.f32 %v1599, %v1766
      %v1789 = vadd.f32 %v1600, %v1771
      %v1790 = vadd.f32 %v1601, %v1774
      %v1791 = vadd.f32 %v1602, %v1779
      %v1792 = vadd.f32 %v1603, %v1782
      %v1793 = vrot.slane %v1283, 5
      %v1794 = vrot.slane %v1793, 4
      %v1795 = vrot.slane %v1284, 5
      %v1796 = vsel %vm1606, %v1794, %v1795
      %s1797 = scalar_lea.vmem %s3, 320
      %v1798 = vld [vmem:[%s1797] sm:$0xf]
      %v1799 = vld [vmem:[%s1797 + $0x4] sm:$0xf]
      %v1800 = vld [vmem:[%s1797 + $0x8] sm:$0xf]
      %v1801 = vld [vmem:[%s1797 + $0xc] sm:$0xf]
      %v1802 = vld [vmem:[%s1797 + $0x10] sm:$0xf]
      %v1803 = vld [vmem:[%s1797 + $0x14] sm:$0xf]
      %v1804 = vld [vmem:[%s1797 + $0x18] sm:$0xf]
      %v1805 = vld [vmem:[%s1797 + $0x1c] sm:$0xf]
      %v1806 = vld [vmem:[%s1797 + $0x20] sm:$0xf]
      %v1807 = vld [vmem:[%s1797 + $0x24] sm:$0xf]
      %v1808 = vld [vmem:[%s1797 + $0x28] sm:$0xf]
      %v1809 = vld [vmem:[%s1797 + $0x2c] sm:$0xf]
      %v1810 = vld [vmem:[%s1797 + $0x30] sm:$0xf]
      %v1811 = vld [vmem:[%s1797 + $0x34] sm:$0xf]
      %v1812 = vld [vmem:[%s1797 + $0x38] sm:$0xf]
      %v1813 = vld [vmem:[%s1797 + $0x3c] sm:$0xf]
      %v1814 = vunpack.c.l.b16 %v1796
      %v1815 = vpack.c.b16 %v1658, %v1657
      %v1816 = vpack.c.b16 %v1660, %v1659
      %v1817 = vpack.c.b16 %v1662, %v1661
      %v1818 = vpack.c.b16 %v1814, %v1663
      %v1839 = vunpack.c.l.b16 %v1798
      %v1840 = vunpack.c.l.b16 %v1799
      %v1841 = vunpack.c.l.b16 %v1800
      %v1842 = vunpack.c.l.b16 %v1801
      %v1843 = vunpack.c.l.b16 %v1802
      %v1844 = vunpack.c.l.b16 %v1803
      %v1845 = vunpack.c.l.b16 %v1804
      %v1846 = vunpack.c.l.b16 %v1805
      %v1847 = vunpack.c.l.b16 %v1806
      %v1848 = vunpack.c.l.b16 %v1807
      %v1849 = vunpack.c.l.b16 %v1808
      %v1850 = vunpack.c.l.b16 %v1809
      %v1851 = vunpack.c.l.b16 %v1810
      %v1852 = vunpack.c.l.b16 %v1811
      %v1853 = vunpack.c.l.b16 %v1812
      %v1854 = vunpack.c.l.b16 %v1813
      %v1855 = vpack.c.b16 %v1840, %v1839
      %v1856 = vpack.c.b16 %v1842, %v1841
      %v1857 = vpack.c.b16 %v1844, %v1843
      %v1858 = vpack.c.b16 %v1846, %v1845
      %v1859 = vpack.c.b16 %v1848, %v1847
      %v1860 = vpack.c.b16 %v1850, %v1849
      %v1861 = vpack.c.b16 %v1852, %v1851
      %v1862 = vpack.c.b16 %v1854, %v1853
      %1871 = vmatprep.subr.bf16.mxu0 0
      %1872 = vmatpush1.bf16.msra.mxu0 %v1862
      %1873 = vmatprep.subr.bf16.mxu0 0
      %1874 = vmatpush1.bf16.msra.mxu0 %v1861
      %1875 = vmatprep.subr.bf16.mxu0 0
      %1876 = vmatpush1.bf16.msra.mxu0 %v1860
      %1877 = vmatprep.subr.bf16.mxu0 0
      %1878 = vmatpush1.bf16.msra.mxu0 %v1859
      %1879 = vmatprep.subr.bf16.mxu0 0
      %1880 = vmatpush1.bf16.msra.mxu0 %v1858
      %1881 = vmatprep.subr.bf16.mxu0 0
      %1882 = vmatpush1.bf16.msra.mxu0 %v1857
      %1883 = vmatprep.subr.bf16.mxu0 0
      %1884 = vmatpush1.bf16.msra.mxu0 %v1856
      %1885 = vmatprep.subr.bf16.mxu0 0
      %1886 = vmatpush1.bf16.msra.mxu0 %v1855
      %1887 = vmatprep.subr.bf16.mxu0 0
      %1888 = vmatpush2.bf16.msra.mxu0 0
      %1889 = vmatprep.subr.bf16.mxu0 0
      %1890 = vmatpush2.bf16.msra.mxu0 0
      %1891 = vmatprep.subr.bf16.mxu0 0
      %1892 = vmatpush2.bf16.msra.mxu0 0
      %1893 = vmatprep.subr.bf16.mxu0 0
      %1894 = vmatpush2.bf16.msra.mxu0 0
      %1895 = vmatprep.subr.bf16.mxu0 0
      %1896 = vmatpush2.bf16.msra.mxu0 0
      %1897 = vmatprep.subr.bf16.mxu0 0
      %1898 = vmatpush2.bf16.msra.mxu0 0
      %1899 = vmatprep.subr.bf16.mxu0 0
      %1900 = vmatpush2.bf16.msra.mxu0 0
      %1901 = vmatprep.subr.bf16.mxu0 0
      %1902 = vmatpush2.bf16.msra.mxu0 0
      %1903 = vmatprep.mubr.bf16.mxu0 0
      %1904 = vmatmul.mubr.bf16.gmra.mxu0 %v1815
      %v1905 = vpop.f32.mrf.mxu0
      %v1906 = vadd.f32 0.0, %v1905
      %v1907 = vpop.f32.mrf.mxu0
      %v1908 = vpop.f32.mrf.mxu0
      %v1909 = vadd.f32 0.0, %v1908
      %v1910 = vpop.f32.mrf.mxu0
      %1911 = vmatprep.mubr.bf16.mxu0 0
      %1912 = vmatmul.mubr.bf16.gmra.mxu0 %v1816
      %v1913 = vpop.f32.mrf.mxu0
      %v1914 = vadd.f32 0.0, %v1913
      %v1915 = vpop.f32.mrf.mxu0
      %v1916 = vpop.f32.mrf.mxu0
      %v1917 = vadd.f32 0.0, %v1916
      %v1918 = vpop.f32.mrf.mxu0
      %1919 = vmatprep.mubr.bf16.mxu0 0
      %1920 = vmatmul.mubr.bf16.gmra.mxu0 %v1817
      %v1921 = vpop.f32.mrf.mxu0
      %v1922 = vadd.f32 0.0, %v1921
      %v1923 = vpop.f32.mrf.mxu0
      %v1924 = vpop.f32.mrf.mxu0
      %v1925 = vadd.f32 0.0, %v1924
      %v1926 = vpop.f32.mrf.mxu0
      %1927 = vmatprep.mubr.bf16.mxu0 0
      %1928 = vmatmul.mubr.bf16.gmra.mxu0 %v1818
      %v1929 = vpop.f32.mrf.mxu0
      %v1930 = vadd.f32 0.0, %v1929
      %v1931 = vpop.f32.mrf.mxu0
      %v1932 = vpop.f32.mrf.mxu0
      %v1933 = vadd.f32 0.0, %v1932
      %v1934 = vpop.f32.mrf.mxu0
      %1935 = vdwg.mxu0
      %v1936 = vadd.f32 %v1785, %v1906
      %v1937 = vadd.f32 %v1786, %v1909
      %v1938 = vadd.f32 %v1787, %v1914
      %v1939 = vadd.f32 %v1788, %v1917
      %v1940 = vadd.f32 %v1789, %v1922
      %v1941 = vadd.f32 %v1790, %v1925
      %v1942 = vadd.f32 %v1791, %v1930
      %v1943 = vadd.f32 %v1792, %v1933
      %v1944 = vrot.slane %v1447, 5
      %v1945 = vrot.slane %v1944, 4
      %v1946 = vrot.slane %v1448, 5
      %v1947 = vsel %vm1606, %v1945, %v1946
      %s1948 = scalar_lea.vmem %s3, 512
      %v1949 = vld [vmem:[%s1948] sm:$0xf]
      %v1950 = vld [vmem:[%s1948 + $0x4] sm:$0xf]
      %v1951 = vld [vmem:[%s1948 + $0x8] sm:$0xf]
      %v1952 = vld [vmem:[%s1948 + $0xc] sm:$0xf]
      %v1953 = vld [vmem:[%s1948 + $0x10] sm:$0xf]
      %v1954 = vld [vmem:[%s1948 + $0x14] sm:$0xf]
      %v1955 = vld [vmem:[%s1948 + $0x18] sm:$0xf]
      %v1956 = vld [vmem:[%s1948 + $0x1c] sm:$0xf]
      %v1957 = vld [vmem:[%s1948 + $0x20] sm:$0xf]
      %v1958 = vld [vmem:[%s1948 + $0x24] sm:$0xf]
      %v1959 = vld [vmem:[%s1948 + $0x28] sm:$0xf]
      %v1960 = vld [vmem:[%s1948 + $0x2c] sm:$0xf]
      %v1961 = vld [vmem:[%s1948 + $0x30] sm:$0xf]
      %v1962 = vld [vmem:[%s1948 + $0x34] sm:$0xf]
      %v1963 = vld [vmem:[%s1948 + $0x38] sm:$0xf]
      %v1964 = vld [vmem:[%s1948 + $0x3c] sm:$0xf]
      %v1965 = vunpack.c.l.b16 %v1947
      %v1966 = vpack.c.b16 %v1965, %v1814
      %v1984 = vunpack.c.l.b16 %v1949
      %v1985 = vunpack.c.l.b16 %v1950
      %v1986 = vunpack.c.l.b16 %v1951
      %v1987 = vunpack.c.l.b16 %v1952
      %v1988 = vunpack.c.l.b16 %v1953
      %v1989 = vunpack.c.l.b16 %v1954
      %v1990 = vunpack.c.l.b16 %v1955
      %v1991 = vunpack.c.l.b16 %v1956
      %v1992 = vunpack.c.l.b16 %v1957
      %v1993 = vunpack.c.l.b16 %v1958
      %v1994 = vunpack.c.l.b16 %v1959
      %v1995 = vunpack.c.l.b16 %v1960
      %v1996 = vunpack.c.l.b16 %v1961
      %v1997 = vunpack.c.l.b16 %v1962
      %v1998 = vunpack.c.l.b16 %v1963
      %v1999 = vunpack.c.l.b16 %v1964
      %v2000 = vpack.c.b16 %v1985, %v1984
      %v2001 = vpack.c.b16 %v1987, %v1986
      %v2002 = vpack.c.b16 %v1989, %v1988
      %v2003 = vpack.c.b16 %v1991, %v1990
      %v2004 = vpack.c.b16 %v1993, %v1992
      %v2005 = vpack.c.b16 %v1995, %v1994
      %v2006 = vpack.c.b16 %v1997, %v1996
      %v2007 = vpack.c.b16 %v1999, %v1998
      %2016 = vmatprep.subr.bf16.mxu0 0
      %2017 = vmatpush1.bf16.msra.mxu0 %v2007
      %2018 = vmatprep.subr.bf16.mxu0 0
      %2019 = vmatpush1.bf16.msra.mxu0 %v2006
      %2020 = vmatprep.subr.bf16.mxu0 0
      %2021 = vmatpush1.bf16.msra.mxu0 %v2005
      %2022 = vmatprep.subr.bf16.mxu0 0
      %2023 = vmatpush1.bf16.msra.mxu0 %v2004
      %2024 = vmatprep.subr.bf16.mxu0 0
      %2025 = vmatpush1.bf16.msra.mxu0 %v2003
      %2026 = vmatprep.subr.bf16.mxu0 0
      %2027 = vmatpush1.bf16.msra.mxu0 %v2002
      %2028 = vmatprep.subr.bf16.mxu0 0
      %2029 = vmatpush1.bf16.msra.mxu0 %v2001
      %2030 = vmatprep.subr.bf16.mxu0 0
      %2031 = vmatpush1.bf16.msra.mxu0 %v2000
      %2032 = vmatprep.subr.bf16.mxu0 0
      %2033 = vmatpush2.bf16.msra.mxu0 0
      %2034 = vmatprep.subr.bf16.mxu0 0
      %2035 = vmatpush2.bf16.msra.mxu0 0
      %2036 = vmatprep.subr.bf16.mxu0 0
      %2037 = vmatpush2.bf16.msra.mxu0 0
      %2038 = vmatprep.subr.bf16.mxu0 0
      %2039 = vmatpush2.bf16.msra.mxu0 0
      %2040 = vmatprep.subr.bf16.mxu0 0
      %2041 = vmatpush2.bf16.msra.mxu0 0
      %2042 = vmatprep.subr.bf16.mxu0 0
      %2043 = vmatpush2.bf16.msra.mxu0 0
      %2044 = vmatprep.subr.bf16.mxu0 0
      %2045 = vmatpush2.bf16.msra.mxu0 0
      %2046 = vmatprep.subr.bf16.mxu0 0
      %2047 = vmatpush2.bf16.msra.mxu0 0
      %2048 = vmatprep.mubr.bf16.mxu0 0
      %2049 = vmatmul.mubr.bf16.gmra.mxu0 %v1665
      %v2050 = vpop.f32.mrf.mxu0
      %v2051 = vadd.f32 0.0, %v2050
      %v2052 = vpop.f32.mrf.mxu0
      %v2053 = vpop.f32.mrf.mxu0
      %v2054 = vadd.f32 0.0, %v2053
      %v2055 = vpop.f32.mrf.mxu0
      %2056 = vmatprep.mubr.bf16.mxu0 0
      %2057 = vmatmul.mubr.bf16.gmra.mxu0 %v1666
      %v2058 = vpop.f32.mrf.mxu0
      %v2059 = vadd.f32 0.0, %v2058
      %v2060 = vpop.f32.mrf.mxu0
      %v2061 = vpop.f32.mrf.mxu0
      %v2062 = vadd.f32 0.0, %v2061
      %v2063 = vpop.f32.mrf.mxu0
      %2064 = vmatprep.mubr.bf16.mxu0 0
      %2065 = vmatmul.mubr.bf16.gmra.mxu0 %v1667
      %v2066 = vpop.f32.mrf.mxu0
      %v2067 = vadd.f32 0.0, %v2066
      %v2068 = vpop.f32.mrf.mxu0
      %v2069 = vpop.f32.mrf.mxu0
      %v2070 = vadd.f32 0.0, %v2069
      %v2071 = vpop.f32.mrf.mxu0
      %2072 = vmatprep.mubr.bf16.mxu0 0
      %2073 = vmatmul.mubr.bf16.gmra.mxu0 %v1966
      %v2074 = vpop.f32.mrf.mxu0
      %v2075 = vadd.f32 0.0, %v2074
      %v2076 = vpop.f32.mrf.mxu0
      %v2077 = vpop.f32.mrf.mxu0
      %v2078 = vadd.f32 0.0, %v2077
      %v2079 = vpop.f32.mrf.mxu0
      %2080 = vdwg.mxu0
      %v2081 = vadd.f32 %v1936, %v2051
      %v2082 = vadd.f32 %v1937, %v2054
      %v2083 = vadd.f32 %v1938, %v2059
      %v2084 = vadd.f32 %v1939, %v2062
      %v2085 = vadd.f32 %v1940, %v2067
      %v2086 = vadd.f32 %v1941, %v2070
      %v2087 = vadd.f32 %v1942, %v2075
      %v2088 = vadd.f32 %v1943, %v2078
      %v2089 = vpack.c.bf16 %v2081, %v2081
      %v2090 = vpack.c.bf16 %v2082, %v2082
      %v2091 = vpack.c.bf16 %v2083, %v2083
      %v2092 = vpack.c.bf16 %v2084, %v2084
      %v2093 = vpack.c.bf16 %v2085, %v2085
      %v2094 = vpack.c.bf16 %v2086, %v2086
      %v2095 = vpack.c.bf16 %v2087, %v2087
      %v2096 = vpack.c.bf16 %v2088, %v2088
      %2097 = vst [vmem:[%s272] sm:$0xf] %v2089
      %2098 = vst [vmem:[%s272 + $0x4] sm:$0xf] %v2090
      %2099 = vst [vmem:[%s272 + $0x8] sm:$0xf] %v2091
      %2100 = vst [vmem:[%s272 + $0xc] sm:$0xf] %v2092
      %2101 = vst [vmem:[%s272 + $0x10] sm:$0xf] %v2093
      %2102 = vst [vmem:[%s272 + $0x14] sm:$0xf] %v2094
      %2103 = vst [vmem:[%s272 + $0x18] sm:$0xf] %v2095
      %2104 = vst [vmem:[%s272 + $0x1c] sm:$0xf] %v2096
      %v2105 = vadd.f32 %v2081, %v2082
      %v2106 = vadd.f32 %v2105, %v2083
      %v2107 = vadd.f32 %v2106, %v2084
      %v2108 = vadd.f32 %v2107, %v2085
      %v2109 = vadd.f32 %v2108, %v2086
      %v2110 = vadd.f32 %v2109, %v2087
      %v2111 = vadd.f32 %v2110, %v2088
      %v2112 = vrot.slane %v2111, 4
      %v2113 = vadd.f32 %v2111, %v2112
      %v2114 = vrot.slane %v2113, 2
      %v2115 = vadd.f32 %v2113, %v2114
      %v2116 = vrot.slane %v2115, 1
      %v2117 = vadd.f32 %v2115, %v2116
      %v2118 = vmul.f32 %v2081, %v2081
      %v2119 = vmul.f32 %v2082, %v2082
      %v2120 = vmul.f32 %v2083, %v2083
      %v2121 = vmul.f32 %v2084, %v2084
      %v2122 = vmul.f32 %v2085, %v2085
      %v2123 = vmul.f32 %v2086, %v2086
      %v2124 = vmul.f32 %v2087, %v2087
      %v2125 = vmul.f32 %v2088, %v2088
      %v2126 = vadd.f32 %v2118, %v2119
      %v2127 = vadd.f32 %v2126, %v2120
      %v2128 = vadd.f32 %v2127, %v2121
      %v2129 = vadd.f32 %v2128, %v2122
      %v2130 = vadd.f32 %v2129, %v2123
      %v2131 = vadd.f32 %v2130, %v2124
      %v2132 = vadd.f32 %v2131, %v2125
      %v2133 = vrot.slane %v2132, 4
      %v2134 = vadd.f32 %v2132, %v2133
      %v2135 = vrot.slane %v2134, 2
      %v2136 = vadd.f32 %v2134, %v2135
      %v2137 = vrot.slane %v2136, 1
      %v2138 = vadd.f32 %v2136, %v2137
      %vm2139 = vcmask 1040384
      %v2140 = vsel %vm2139, %v2117, %v2138
      %vm2141 = vcmask 1041408
      %v2142 = vsel %vm2141, %v2140, 0.0
      %2143 = vst [vmem:[%s280] sm:$0xff] %v2142
      %s2144 = smul.u32 8, %s22
      %p2145 = scmp.lt.s32.totalorder %s21, 1
      %s2146 = scalar_select %p2145, %s21, 1
      %p2147 = scmp.lt.s32.totalorder %s2144, 7
      %s2148 = scalar_select %p2147, %s2144, 7
      %s2149 = smul.addr %s2146, 8
      %s2150 = sadd.s32 %s2148, %s2149
      %s2151 = smul.addr %s2150, 4
      %s2152 = scalar_lea.vmem %s4, %s2151
      %p2153 = scmp.lt.s32.totalorder %s21, 1
      %s2154 = scalar_select %p2153, %s21, 1
      %p2155 = scmp.lt.s32.totalorder %s22, 0
      %s2156 = scalar_select %p2155, %s22, 0
      %s2157 = sadd.s32 %s2156, %s2154
      %s2158 = smul.addr %s2157, 8
      %s2159 = scalar_lea.vmem %s5, %s2158
      // Predicated region
      $region37: #{basic_block_forward.4} parent=35 // pred_check
        %p2160 = pneg %p140
      $region38: #{basic_block_forward.4} parent=35 // pred_check_branch
        %2162 = sbr.rel (%p2160) target = $region40
      $region39: #{basic_block_forward.4} parent=35 // pred_region
        %s2163 = smul.u32 8, %s22
      $region40: #{basic_block_forward.4} parent=35 // pred_fallthru
        _
      // Predicated region
      $region41: #{basic_block_forward.4} parent=35 // pred_check
        %p2164 = pneg %p168
      $region42: #{basic_block_forward.4} parent=35 // pred_check_branch
        %2166 = sbr.rel (%p2164) target = $region44
      $region43: #{basic_block_forward.4} parent=35 // pred_region
        _
      $region44: #{basic_block_forward.4} parent=35 // pred_fallthru
        _
    $region36: #{basic_block_forward.4} parent=5 // pred_fallthru
      _
    %p2167 = scmp.le.s32.totalorder 2, %s12
    // Predicated region
    $region45: #{basic_block_forward.4} parent=5 // pred_check
      %p2168 = pneg %p2167
    $region46: #{basic_block_forward.4} parent=5 // pred_check_branch
      %2170 = sbr.rel (%p2168) target = $region48
    $region47: #{basic_block_forward.4} parent=5 // pred_region
      %s2171 = ssub.s32 %s12, 2
      // Predicated region
      $region49: #{basic_block_forward.4} parent=47 // pred_check
        %p2172 = pneg %p146
      $region50: #{basic_block_forward.4} parent=47 // pred_check_branch
        %2174 = sbr.rel (%p2172) target = $region52
      $region51: #{basic_block_forward.4} parent=47 // pred_region
        %s2175 = smul.u32 8, %s24
        %p2176 = scmp.lt.s32.totalorder %s23, 1
        %s2177 = scalar_select %p2176, %s23, 1
        %p2178 = scmp.lt.s32.totalorder %s2175, 7
        %s2179 = scalar_select %p2178, %s2175, 7
        %s2180 = smul.addr %s2177, 8
        %s2181 = sadd.s32 %s2179, %s2180
        %s2182 = smul.addr %s2181, 4
        %s2183 = scalar_lea.vmem %s4, %s2182
      $region52: #{basic_block_forward.4} parent=47 // pred_fallthru
        _
      // Predicated region
      $region53: #{basic_block_forward.4} parent=47 // pred_check
        %p2184 = pneg %p174
      $region54: #{basic_block_forward.4} parent=47 // pred_check_branch
        %2186 = sbr.rel (%p2184) target = $region56
      $region55: #{basic_block_forward.4} parent=47 // pred_region
        %p2187 = scmp.lt.s32.totalorder %s23, 1
        %s2188 = scalar_select %p2187, %s23, 1
        %p2189 = scmp.lt.s32.totalorder %s24, 0
        %s2190 = scalar_select %p2189, %s24, 0
        %s2191 = sadd.s32 %s2190, %s2188
        %s2192 = smul.addr %s2191, 8
        %s2193 = scalar_lea.vmem %s5, %s2192
      $region56: #{basic_block_forward.4} parent=47 // pred_fallthru
        _
    $region48: #{basic_block_forward.4} parent=5 // pred_fallthru
      _
  $region6: #{basic_block_forward.4} parent=0 // loop_footer
    %s16 = sadd.s32 1, %s12
  $region7: #{basic_block_forward.4} parent=0 // loop_footer_branch
    %11 = sbr.rel target = $region3
  $region8: #{basic_block_forward.4} parent=0 // loop_exit
    _

</llo_original>
